<compile_context>
chip_gen: v7x
topology: tpu7x:2x2x1
jax: 0.10.0
libtpu: 0.0.40
codegen_flags: <defaults>
</compile_context>

<pallas_src>
import functools

import jax
import jax.numpy as jnp
from jax import lax
from jax.experimental import pallas as pl
from jax.experimental.pallas import tpu as pltpu

D_PAD = 128  # padded feature width (lane-dense)


# --------------------------------------------------------------------------
# Fused forward kernel: one graph per grid step.
# --------------------------------------------------------------------------
def _fused_kernel(x_ref, a_ref, emb_w_ref, w_ref, bias_ref,
                  wa_ref, w1_ref, w2_ref, w3_ref,
                  logits_ref, s_ref,
                  *, n_layers, bisage_idx, residual):
    f32 = jnp.float32
    bf16 = jnp.bfloat16
    L = n_layers

    # Packed bias-row layout (must match pack_params below).
    R_EMB = 0
    R_B = 1
    R_G = 1 + L
    R_BETA = 1 + 2 * L
    R_BA = 1 + 3 * L
    R_B1 = R_BA + 1
    R_B2 = R_BA + 2
    R_B3 = R_BA + 3

    a = a_ref[...]                                           # bf16 [N, N]

    # ---- embedding_h (in_feat_dropout: identity in eval) ----
    h = (jnp.dot(x_ref[...], emb_w_ref[...], preferred_element_type=f32)
         + bias_ref[R_EMB:R_EMB + 1, :])

    for l in range(L):
        h_in = h
        hb = h.astype(bf16)
        # mean aggregation: c = A_norm @ h  (MXU)
        c = jnp.dot(a, hb, preferred_element_type=f32)
        cb = c.astype(bf16)
        # two K=128 MXU pushes instead of concat + K=256 push
        z = (jnp.dot(hb, w_ref[l, :D_PAD, :], preferred_element_type=f32)
             + jnp.dot(cb, w_ref[l, D_PAD:, :], preferred_element_type=f32)
             + bias_ref[R_B + l:R_B + l + 1, :])
        # NodeApply: F.normalize(p=2, dim=1) -> ReLU   (f32 epilogue)
        z = z * lax.rsqrt(jnp.maximum(jnp.sum(z * z, axis=1, keepdims=True),
                                      1e-24))
        z = jnp.maximum(z, 0.0)
        # BatchNorm1d eval: gamma already pre-scaled by 1/sqrt(1+eps)
        z = (z * bias_ref[R_G + l:R_G + l + 1, :]
             + bias_ref[R_BETA + l:R_BETA + l + 1, :])
        if residual:
            z = z + h_in
        h = z

        if l == bisage_idx:
            # biGraphSageLayer soft-assignment branch.
            # Wa / ba were pre-scaled by 1/sigma; ba's padded lanes hold
            # -1e30 so no explicit masking is needed.
            logits = (jnp.dot(hb, wa_ref[:D_PAD, :],
                              preferred_element_type=f32)
                      + jnp.dot(cb, wa_ref[D_PAD:, :],
                                preferred_element_type=f32)
                      + bias_ref[R_BA:R_BA + 1, :])
            logits = logits - jnp.max(logits, axis=1, keepdims=True)
            e = jnp.exp(logits)
            s_ref[...] = e / jnp.sum(e, axis=1, keepdims=True)

    # ---- mean readout over nodes + MLPReadout (L=2) ----
    hg = jnp.mean(h, axis=0, keepdims=True)                  # [1, D_PAD]
    y = jnp.maximum(
        jnp.dot(hg.astype(bf16), w1_ref[...], preferred_element_type=f32)
        + bias_ref[R_B1:R_B1 + 1, :], 0.0)
    y = jnp.maximum(
        jnp.dot(y.astype(bf16), w2_ref[...], preferred_element_type=f32)
        + bias_ref[R_B2:R_B2 + 1, :], 0.0)
    out = (jnp.dot(y.astype(bf16), w3_ref[...], preferred_element_type=f32)
           + bias_ref[R_B3:R_B3 + 1, :])
    logits_ref[...] = jnp.broadcast_to(out, logits_ref.shape)


# --------------------------------------------------------------------------
# Wrapper: grid over B graphs, "parallel" semantics (v7x 2-TC sharding).
# --------------------------------------------------------------------------
def bi_graphsage_forward(x, a_norm, packed, *, residual,
                         n_classes, assign_dim, n_layers, bisage_idx=1):
    bsz, n = x.shape[0], x.shape[1]
    kern = functools.partial(
        _fused_kernel, n_layers=n_layers, bisage_idx=bisage_idx,
        residual=residual)

    x_p = _pad(x, (bsz, n, D_PAD)).astype(jnp.bfloat16)
    a_bf = a_norm.astype(jnp.bfloat16)

    inputs = (x_p, a_bf, packed["emb_w"], packed["W"], packed["biases"],
              packed["Wa"], packed["w1"], packed["w2"], packed["w3"])

    def _const_spec(t):
        shape = t.shape
        return pl.BlockSpec(shape, lambda b: (0,) * len(shape))

    in_specs = [
        pl.BlockSpec((None, n, D_PAD), lambda b: (b, 0, 0)),   # x (per graph)
        pl.BlockSpec((None, n, n), lambda b: (b, 0, 0)),       # A (per graph)
        _const_spec(packed["emb_w"]),
        _const_spec(packed["W"]),
        _const_spec(packed["biases"]),
        _const_spec(packed["Wa"]),
        _const_spec(packed["w1"]),
        _const_spec(packed["w2"]),
        _const_spec(packed["w3"]),
    ]
    out_specs = (
        pl.BlockSpec((None, 8, D_PAD), lambda b: (b, 0, 0)),   # logits
        pl.BlockSpec((None, n, D_PAD), lambda b: (b, 0, 0)),   # soft assign
    )

    logits_p, s_p = pl.pallas_call(
        kern,
        out_shape=(jax.ShapeDtypeStruct((bsz, 8, D_PAD), jnp.float32),
                   jax.ShapeDtypeStruct((bsz, n, D_PAD), jnp.float32)),
        grid=(bsz,),
        in_specs=in_specs,
        out_specs=out_specs,
        compiler_params=pltpu.CompilerParams(
            dimension_semantics=("parallel",)),
    )(*inputs)

    return logits_p[:, 0, :n_classes], s_p[:, :, :assign_dim]


# --------------------------------------------------------------------------
# Parameter construction (deterministic, PyTorch-Linear-style uniform init).
# Weights are stored as [fan_in, fan_out] (i.e. W.T of torch's [out, in]).
# --------------------------------------------------------------------------
def _linear_params(key, fan_in, fan_out):
    kw, kb = jax.random.split(key)
    bound = 1.0 / float(fan_in) ** 0.5
    w = jax.random.uniform(kw, (fan_in, fan_out), jnp.float32, -bound, bound)
    b = jax.random.uniform(kb, (1, fan_out), jnp.float32, -bound, bound)
    return w, b


def _pad(a, shape):
    return jnp.pad(a, [(0, t - s) for s, t in zip(a.shape, shape)])


def _pad_sage_weight(w, din):
    # w is NodeApply's Linear(2*din, dout) weight as [2*din, dout].
    # Self / neighbor halves land at rows [0:din] and [D_PAD:D_PAD+din] of
    # the padded [2*D_PAD, D_PAD] weight so the kernel can slice them as two
    # independent K=128 operands.
    w_self, w_neigh = w[:din], w[din:]
    return jnp.concatenate([_pad(w_self, (D_PAD, D_PAD)),
                            _pad(w_neigh, (D_PAD, D_PAD))], axis=0)


# --------------------------------------------------------------------------
# Main
# --------------------------------------------------------------------------
if __name__ == "__main__":
    # net_params (small, consistent with the module)
    B = 8             # graphs per launch (batched DGL graph)
    N = 64            # nodes per graph
    in_dim = 8
    hidden_dim = 32
    out_dim = 32
    n_classes = 10
    assign_dim = 8
    sigma = 1.0
    n_layers = 4      # L -> [Sage, biSage, Sage x (L-3), Sage(out)]
    bn_eps = 1e-5

    root = jax.random.PRNGKey(0)
    keys = jax.random.split(root, 16)

    # ---- deterministic graphs: rings with per-graph chord offsets,
    #      symmetric, row-normalized
    idx = jnp.arange(N)
    adjs = []
    for b in range(B):
        adj = jnp.zeros((N, N), jnp.float32)
        for shift in (1, -1, 3 + b, -(3 + b)):
            adj = adj.at[idx, (idx + shift) % N].set(1.0)
        deg = jnp.sum(adj, axis=1, keepdims=True)
        adjs.append(adj / jnp.maximum(deg, 1.0))
    a_norm = jnp.stack(adjs)                                 # [B, N, N]

    # ---- node features
    x = jax.random.normal(keys[0], (B, N, in_dim), jnp.float32)

    # ---- real (unpadded) parameters
    emb_w, emb_b = _linear_params(keys[1], in_dim, hidden_dim)

    layer_dims = [(hidden_dim, hidden_dim),          # GraphSage
                  (hidden_dim, hidden_dim)]          # biGraphSage
    for _ in range(n_layers - 3):
        layer_dims.append((hidden_dim, hidden_dim))  # GraphSage
    layer_dims.append((hidden_dim, out_dim))         # GraphSage (out)
    L = len(layer_dims)

    bn_scale = (1.0 + bn_eps) ** -0.5                # eval fold, var = 1
    Ws, bl_rows, gamma_rows, beta_rows = [], [], [], []
    for li, (din, dout) in enumerate(layer_dims):
        w, b = _linear_params(keys[2 + li], 2 * din, dout)
        Ws.append(_pad_sage_weight(w, din).astype(jnp.bfloat16))
        bl_rows.append(_pad(b, (1, D_PAD)))
        gamma_rows.append(_pad(jnp.full((1, dout), bn_scale, jnp.float32),
                               (1, D_PAD)))          # gamma * bn_scale folded
        beta_rows.append(_pad(jnp.zeros((1, dout), jnp.float32), (1, D_PAD)))

    aw, ab = _linear_params(keys[8], 2 * hidden_dim, assign_dim)
    inv_sigma = 1.0 / float(sigma)
    # fold 1/sigma into Wa, ba; bake -1e30 into ba's padded lanes (no mask)
    wa_packed = _pad_sage_weight(aw * inv_sigma,
                                 hidden_dim).astype(jnp.bfloat16)
    ba_row = jnp.full((1, D_PAD), -1e30, jnp.float32)
    ba_row = ba_row.at[:, :assign_dim].set(ab[0] * inv_sigma)

    w1, b1 = _linear_params(keys[9], out_dim, out_dim // 2)
    w2, b2 = _linear_params(keys[10], out_dim // 2, out_dim // 4)
    w3, b3 = _linear_params(keys[11], out_dim // 4, n_classes)

    # ---- pack all (1,128) rows into one [24,128] f32 array (one DMA).
    # Row layout must match _fused_kernel: emb_b | b[0..L-1] | gamma[0..L-1]
    # | beta[0..L-1] | ba | b1 | b2 | b3, zero-padded to 24 rows.
    bias_rows = ([_pad(emb_b, (1, D_PAD))]
                 + bl_rows + gamma_rows + beta_rows
                 + [ba_row,
                    _pad(b1, (1, D_PAD)),
                    _pad(b2, (1, D_PAD)),
                    _pad(b3, (1, D_PAD))])
    biases = _pad(jnp.concatenate(bias_rows, axis=0), (24, D_PAD))

    packed = {
        "emb_w": _pad(emb_w, (D_PAD, D_PAD)).astype(jnp.bfloat16),
        "W": jnp.stack(Ws),            # [L, 2*D_PAD, D_PAD] bf16
        "biases": biases,              # [24, D_PAD]         f32
        "Wa": wa_packed,               # [2*D_PAD, D_PAD]    bf16
        "w1": _pad(w1, (D_PAD, D_PAD)).astype(jnp.bfloat16),
        "w2": _pad(w2, (D_PAD, D_PAD)).astype(jnp.bfloat16),
        "w3": _pad(w3, (D_PAD, D_PAD)).astype(jnp.bfloat16),
    }

    logits, soft_assign = bi_graphsage_forward(
        x, a_norm, packed, residual=True,
        n_classes=n_classes, assign_dim=assign_dim,
        n_layers=L, bisage_idx=1)
    jax.block_until_ready(logits)
    jax.block_until_ready(soft_assign)

    assert logits.shape == (B, n_classes)
    assert soft_assign.shape == (B, N, assign_dim)
    assert bool(jnp.all(jnp.isfinite(logits)))
    assert bool(jnp.all(jnp.isfinite(soft_assign)))
    # softmax rows sum to ~1
    assert bool(jnp.all(jnp.abs(jnp.sum(soft_assign, axis=-1) - 1.0) < 1e-3))

    print("KERNEL_OK")
</pallas_src>

<mosaic_0001>
module attributes {stable_mosaic.version = 11 : i64} {
  func.func @_fused_kernel(%arg0: i32, %arg1: memref<1x64x128xbf16, #tpu.memory_space<vmem>>, %arg2: memref<1x64x64xbf16, #tpu.memory_space<vmem>>, %arg3: memref<128x128xbf16, #tpu.memory_space<vmem>>, %arg4: memref<4x256x128xbf16, #tpu.memory_space<vmem>>, %arg5: memref<24x128xf32, #tpu.memory_space<vmem>>, %arg6: memref<256x128xbf16, #tpu.memory_space<vmem>>, %arg7: memref<128x128xbf16, #tpu.memory_space<vmem>>, %arg8: memref<128x128xbf16, #tpu.memory_space<vmem>>, %arg9: memref<128x128xbf16, #tpu.memory_space<vmem>>, %arg10: memref<1x8x128xf32, #tpu.memory_space<vmem>>, %arg11: memref<1x64x128xf32, #tpu.memory_space<vmem>>) attributes {dimension_semantics = [#tpu.dimension_semantics<parallel>], iteration_bounds = array<i64: 8>, scalar_prefetch = 0 : i64, scratch_operands = 0 : i64, tpu.core_type = #tpu.core_type<tc>, window_params = [{transform_indices = @transform_0, window_bounds = array<i64: 1, 64, 128>}, {transform_indices = @transform_1, window_bounds = array<i64: 1, 64, 64>}, {pipeline_mode = #tpu.pipeline_mode<synchronous>, transform_indices = @transform_2, window_bounds = array<i64: 128, 128>}, {pipeline_mode = #tpu.pipeline_mode<synchronous>, transform_indices = @transform_3, window_bounds = array<i64: 4, 256, 128>}, {pipeline_mode = #tpu.pipeline_mode<synchronous>, transform_indices = @transform_4, window_bounds = array<i64: 24, 128>}, {pipeline_mode = #tpu.pipeline_mode<synchronous>, transform_indices = @transform_5, window_bounds = array<i64: 256, 128>}, {pipeline_mode = #tpu.pipeline_mode<synchronous>, transform_indices = @transform_6, window_bounds = array<i64: 128, 128>}, {pipeline_mode = #tpu.pipeline_mode<synchronous>, transform_indices = @transform_7, window_bounds = array<i64: 128, 128>}, {pipeline_mode = #tpu.pipeline_mode<synchronous>, transform_indices = @transform_8, window_bounds = array<i64: 128, 128>}, {transform_indices = @transform_9, window_bounds = array<i64: 1, 8, 128>}, {transform_indices = @transform_10, window_bounds = array<i64: 1, 64, 128>}]} {
    %c0 = arith.constant 0 : index
    %c0_0 = arith.constant 0 : index
    %c0_1 = arith.constant 0 : index
    %0 = vector.load %arg2[%c0, %c0_0, %c0_1] : memref<1x64x64xbf16, #tpu.memory_space<vmem>>, vector<1x64x64xbf16>
    %1 = vector.shape_cast %0 : vector<1x64x64xbf16> to vector<64x64xbf16>
    %c0_2 = arith.constant 0 : index
    %c0_3 = arith.constant 0 : index
    %c0_4 = arith.constant 0 : index
    %2 = vector.load %arg1[%c0_2, %c0_3, %c0_4] : memref<1x64x128xbf16, #tpu.memory_space<vmem>>, vector<1x64x128xbf16>
    %3 = vector.shape_cast %2 : vector<1x64x128xbf16> to vector<64x128xbf16>
    %c0_5 = arith.constant 0 : index
    %c0_6 = arith.constant 0 : index
    %4 = vector.load %arg3[%c0_5, %c0_6] : memref<128x128xbf16, #tpu.memory_space<vmem>>, vector<128x128xbf16>
    %cst = arith.constant dense<0.000000e+00> : vector<64x128xf32>
    %5 = tpu.matmul %3, %4, %cst {dimension_numbers = #tpu.dot_dimension_numbers<[1], [0], [0], [1], [0, 0, 1, 1], [], []>} : vector<64x128xbf16>, vector<128x128xbf16>, vector<64x128xf32> -> vector<64x128xf32>
    %c0_7 = arith.constant 0 : index
    %c0_8 = arith.constant 0 : index
    %6 = vector.load %arg5[%c0_7, %c0_8] : memref<24x128xf32, #tpu.memory_space<vmem>>, vector<1x128xf32>
    %7 = vector.broadcast %6 : vector<1x128xf32> to vector<64x128xf32>
    %8 = arith.addf %5, %7 : vector<64x128xf32>
    %9 = arith.truncf %8 : vector<64x128xf32> to vector<64x128xbf16>
    %cst_9 = arith.constant dense<0.000000e+00> : vector<64x128xf32>
    %10 = tpu.matmul %1, %9, %cst_9 {dimension_numbers = #tpu.dot_dimension_numbers<[1], [0], [0], [1], [0, 0, 1, 1], [], []>} : vector<64x64xbf16>, vector<64x128xbf16>, vector<64x128xf32> -> vector<64x128xf32>
    %11 = arith.truncf %10 : vector<64x128xf32> to vector<64x128xbf16>
    %c0_10 = arith.constant 0 : index
    %c0_11 = arith.constant 0 : index
    %c0_12 = arith.constant 0 : index
    %12 = vector.load %arg4[%c0_10, %c0_11, %c0_12] : memref<4x256x128xbf16, #tpu.memory_space<vmem>>, vector<1x128x128xbf16>
    %13 = vector.shape_cast %12 : vector<1x128x128xbf16> to vector<128x128xbf16>
    %cst_13 = arith.constant dense<0.000000e+00> : vector<64x128xf32>
    %14 = tpu.matmul %9, %13, %cst_13 {dimension_numbers = #tpu.dot_dimension_numbers<[1], [0], [0], [1], [0, 0, 1, 1], [], []>} : vector<64x128xbf16>, vector<128x128xbf16>, vector<64x128xf32> -> vector<64x128xf32>
    %c0_14 = arith.constant 0 : index
    %c128 = arith.constant 128 : index
    %c0_15 = arith.constant 0 : index
    %15 = vector.load %arg4[%c0_14, %c128, %c0_15] : memref<4x256x128xbf16, #tpu.memory_space<vmem>>, vector<1x128x128xbf16>
    %16 = vector.shape_cast %15 : vector<1x128x128xbf16> to vector<128x128xbf16>
    %cst_16 = arith.constant dense<0.000000e+00> : vector<64x128xf32>
    %17 = tpu.matmul %11, %16, %cst_16 {dimension_numbers = #tpu.dot_dimension_numbers<[1], [0], [0], [1], [0, 0, 1, 1], [], []>} : vector<64x128xbf16>, vector<128x128xbf16>, vector<64x128xf32> -> vector<64x128xf32>
    %18 = arith.addf %14, %17 : vector<64x128xf32>
    %c1 = arith.constant 1 : index
    %c0_17 = arith.constant 0 : index
    %19 = vector.load %arg5[%c1, %c0_17] : memref<24x128xf32, #tpu.memory_space<vmem>>, vector<1x128xf32>
    %20 = vector.broadcast %19 : vector<1x128xf32> to vector<64x128xf32>
    %21 = arith.addf %18, %20 : vector<64x128xf32>
    %22 = arith.mulf %21, %21 : vector<64x128xf32>
    %cst_18 = arith.constant dense<0.000000e+00> : vector<64xf32>
    %23 = vector.multi_reduction <add>, %22, %cst_18 [1] : vector<64x128xf32> to vector<64xf32>
    %24 = vector.shape_cast %23 : vector<64xf32> to vector<64x1xf32>
    %cst_19 = arith.constant 1.000000e-24 : f32
    %25 = vector.broadcast %cst_19 : f32 to vector<64x1xf32>
    %26 = arith.maximumf %24, %25 : vector<64x1xf32>
    %27 = math.rsqrt %26 : vector<64x1xf32>
    %28 = vector.broadcast %27 : vector<64x1xf32> to vector<64x128xf32>
    %29 = arith.mulf %21, %28 : vector<64x128xf32>
    %cst_20 = arith.constant 0.000000e+00 : f32
    %30 = vector.broadcast %cst_20 : f32 to vector<64x128xf32>
    %31 = arith.maximumf %29, %30 : vector<64x128xf32>
    %c5 = arith.constant 5 : index
    %c0_21 = arith.constant 0 : index
    %32 = vector.load %arg5[%c5, %c0_21] : memref<24x128xf32, #tpu.memory_space<vmem>>, vector<1x128xf32>
    %33 = vector.broadcast %32 : vector<1x128xf32> to vector<64x128xf32>
    %34 = arith.mulf %31, %33 : vector<64x128xf32>
    %c9 = arith.constant 9 : index
    %c0_22 = arith.constant 0 : index
    %35 = vector.load %arg5[%c9, %c0_22] : memref<24x128xf32, #tpu.memory_space<vmem>>, vector<1x128xf32>
    %36 = vector.broadcast %35 : vector<1x128xf32> to vector<64x128xf32>
    %37 = arith.addf %34, %36 : vector<64x128xf32>
    %38 = arith.addf %37, %8 : vector<64x128xf32>
    %39 = arith.truncf %38 : vector<64x128xf32> to vector<64x128xbf16>
    %cst_23 = arith.constant dense<0.000000e+00> : vector<64x128xf32>
    %40 = tpu.matmul %1, %39, %cst_23 {dimension_numbers = #tpu.dot_dimension_numbers<[1], [0], [0], [1], [0, 0, 1, 1], [], []>} : vector<64x64xbf16>, vector<64x128xbf16>, vector<64x128xf32> -> vector<64x128xf32>
    %41 = arith.truncf %40 : vector<64x128xf32> to vector<64x128xbf16>
    %c1_24 = arith.constant 1 : index
    %c0_25 = arith.constant 0 : index
    %c0_26 = arith.constant 0 : index
    %42 = vector.load %arg4[%c1_24, %c0_25, %c0_26] : memref<4x256x128xbf16, #tpu.memory_space<vmem>>, vector<1x128x128xbf16>
    %43 = vector.shape_cast %42 : vector<1x128x128xbf16> to vector<128x128xbf16>
    %cst_27 = arith.constant dense<0.000000e+00> : vector<64x128xf32>
    %44 = tpu.matmul %39, %43, %cst_27 {dimension_numbers = #tpu.dot_dimension_numbers<[1], [0], [0], [1], [0, 0, 1, 1], [], []>} : vector<64x128xbf16>, vector<128x128xbf16>, vector<64x128xf32> -> vector<64x128xf32>
    %c1_28 = arith.constant 1 : index
    %c128_29 = arith.constant 128 : index
    %c0_30 = arith.constant 0 : index
    %45 = vector.load %arg4[%c1_28, %c128_29, %c0_30] : memref<4x256x128xbf16, #tpu.memory_space<vmem>>, vector<1x128x128xbf16>
    %46 = vector.shape_cast %45 : vector<1x128x128xbf16> to vector<128x128xbf16>
    %cst_31 = arith.constant dense<0.000000e+00> : vector<64x128xf32>
    %47 = tpu.matmul %41, %46, %cst_31 {dimension_numbers = #tpu.dot_dimension_numbers<[1], [0], [0], [1], [0, 0, 1, 1], [], []>} : vector<64x128xbf16>, vector<128x128xbf16>, vector<64x128xf32> -> vector<64x128xf32>
    %48 = arith.addf %44, %47 : vector<64x128xf32>
    %c2 = arith.constant 2 : index
    %c0_32 = arith.constant 0 : index
    %49 = vector.load %arg5[%c2, %c0_32] : memref<24x128xf32, #tpu.memory_space<vmem>>, vector<1x128xf32>
    %50 = vector.broadcast %49 : vector<1x128xf32> to vector<64x128xf32>
    %51 = arith.addf %48, %50 : vector<64x128xf32>
    %52 = arith.mulf %51, %51 : vector<64x128xf32>
    %cst_33 = arith.constant dense<0.000000e+00> : vector<64xf32>
    %53 = vector.multi_reduction <add>, %52, %cst_33 [1] : vector<64x128xf32> to vector<64xf32>
    %54 = vector.shape_cast %53 : vector<64xf32> to vector<64x1xf32>
    %cst_34 = arith.constant 1.000000e-24 : f32
    %55 = vector.broadcast %cst_34 : f32 to vector<64x1xf32>
    %56 = arith.maximumf %54, %55 : vector<64x1xf32>
    %57 = math.rsqrt %56 : vector<64x1xf32>
    %58 = vector.broadcast %57 : vector<64x1xf32> to vector<64x128xf32>
    %59 = arith.mulf %51, %58 : vector<64x128xf32>
    %cst_35 = arith.constant 0.000000e+00 : f32
    %60 = vector.broadcast %cst_35 : f32 to vector<64x128xf32>
    %61 = arith.maximumf %59, %60 : vector<64x128xf32>
    %c6 = arith.constant 6 : index
    %c0_36 = arith.constant 0 : index
    %62 = vector.load %arg5[%c6, %c0_36] : memref<24x128xf32, #tpu.memory_space<vmem>>, vector<1x128xf32>
    %63 = vector.broadcast %62 : vector<1x128xf32> to vector<64x128xf32>
    %64 = arith.mulf %61, %63 : vector<64x128xf32>
    %c10 = arith.constant 10 : index
    %c0_37 = arith.constant 0 : index
    %65 = vector.load %arg5[%c10, %c0_37] : memref<24x128xf32, #tpu.memory_space<vmem>>, vector<1x128xf32>
    %66 = vector.broadcast %65 : vector<1x128xf32> to vector<64x128xf32>
    %67 = arith.addf %64, %66 : vector<64x128xf32>
    %68 = arith.addf %67, %38 : vector<64x128xf32>
    %c0_38 = arith.constant 0 : index
    %c0_39 = arith.constant 0 : index
    %69 = vector.load %arg6[%c0_38, %c0_39] : memref<256x128xbf16, #tpu.memory_space<vmem>>, vector<128x128xbf16>
    %cst_40 = arith.constant dense<0.000000e+00> : vector<64x128xf32>
    %70 = tpu.matmul %39, %69, %cst_40 {dimension_numbers = #tpu.dot_dimension_numbers<[1], [0], [0], [1], [0, 0, 1, 1], [], []>} : vector<64x128xbf16>, vector<128x128xbf16>, vector<64x128xf32> -> vector<64x128xf32>
    %c128_41 = arith.constant 128 : index
    %c0_42 = arith.constant 0 : index
    %71 = vector.load %arg6[%c128_41, %c0_42] : memref<256x128xbf16, #tpu.memory_space<vmem>>, vector<128x128xbf16>
    %cst_43 = arith.constant dense<0.000000e+00> : vector<64x128xf32>
    %72 = tpu.matmul %41, %71, %cst_43 {dimension_numbers = #tpu.dot_dimension_numbers<[1], [0], [0], [1], [0, 0, 1, 1], [], []>} : vector<64x128xbf16>, vector<128x128xbf16>, vector<64x128xf32> -> vector<64x128xf32>
    %73 = arith.addf %70, %72 : vector<64x128xf32>
    %c13 = arith.constant 13 : index
    %c0_44 = arith.constant 0 : index
    %74 = vector.load %arg5[%c13, %c0_44] : memref<24x128xf32, #tpu.memory_space<vmem>>, vector<1x128xf32>
    %75 = vector.broadcast %74 : vector<1x128xf32> to vector<64x128xf32>
    %76 = arith.addf %73, %75 : vector<64x128xf32>
    %cst_45 = arith.constant dense<0xFF800000> : vector<64xf32>
    %77 = vector.multi_reduction <maximumf>, %76, %cst_45 [1] : vector<64x128xf32> to vector<64xf32>
    %78 = vector.shape_cast %77 : vector<64xf32> to vector<64x1xf32>
    %79 = vector.broadcast %78 : vector<64x1xf32> to vector<64x128xf32>
    %80 = arith.subf %76, %79 : vector<64x128xf32>
    %81 = math.exp %80 : vector<64x128xf32>
    %cst_46 = arith.constant dense<0.000000e+00> : vector<64xf32>
    %82 = vector.multi_reduction <add>, %81, %cst_46 [1] : vector<64x128xf32> to vector<64xf32>
    %83 = vector.shape_cast %82 : vector<64xf32> to vector<64x1xf32>
    %84 = vector.broadcast %83 : vector<64x1xf32> to vector<64x128xf32>
    %85 = arith.divf %81, %84 : vector<64x128xf32>
    %c0_47 = arith.constant 0 : index
    %c0_48 = arith.constant 0 : index
    %c0_49 = arith.constant 0 : index
    %86 = vector.load %arg11[%c0_47, %c0_48, %c0_49] : memref<1x64x128xf32, #tpu.memory_space<vmem>>, vector<1x64x128xf32>
    %87 = vector.shape_cast %86 : vector<1x64x128xf32> to vector<64x128xf32>
    %88 = vector.shape_cast %85 : vector<64x128xf32> to vector<1x64x128xf32>
    tpu.vector_store %arg11[%c0_47, %c0_48, %c0_49], %88 {strides = array<i32>} : memref<1x64x128xf32, #tpu.memory_space<vmem>>, vector<1x64x128xf32>,
    %89 = arith.truncf %68 : vector<64x128xf32> to vector<64x128xbf16>
    %cst_50 = arith.constant dense<0.000000e+00> : vector<64x128xf32>
    %90 = tpu.matmul %1, %89, %cst_50 {dimension_numbers = #tpu.dot_dimension_numbers<[1], [0], [0], [1], [0, 0, 1, 1], [], []>} : vector<64x64xbf16>, vector<64x128xbf16>, vector<64x128xf32> -> vector<64x128xf32>
    %91 = arith.truncf %90 : vector<64x128xf32> to vector<64x128xbf16>
    %c2_51 = arith.constant 2 : index
    %c0_52 = arith.constant 0 : index
    %c0_53 = arith.constant 0 : index
    %92 = vector.load %arg4[%c2_51, %c0_52, %c0_53] : memref<4x256x128xbf16, #tpu.memory_space<vmem>>, vector<1x128x128xbf16>
    %93 = vector.shape_cast %92 : vector<1x128x128xbf16> to vector<128x128xbf16>
    %cst_54 = arith.constant dense<0.000000e+00> : vector<64x128xf32>
    %94 = tpu.matmul %89, %93, %cst_54 {dimension_numbers = #tpu.dot_dimension_numbers<[1], [0], [0], [1], [0, 0, 1, 1], [], []>} : vector<64x128xbf16>, vector<128x128xbf16>, vector<64x128xf32> -> vector<64x128xf32>
    %c2_55 = arith.constant 2 : index
    %c128_56 = arith.constant 128 : index
    %c0_57 = arith.constant 0 : index
    %95 = vector.load %arg4[%c2_55, %c128_56, %c0_57] : memref<4x256x128xbf16, #tpu.memory_space<vmem>>, vector<1x128x128xbf16>
    %96 = vector.shape_cast %95 : vector<1x128x128xbf16> to vector<128x128xbf16>
    %cst_58 = arith.constant dense<0.000000e+00> : vector<64x128xf32>
    %97 = tpu.matmul %91, %96, %cst_58 {dimension_numbers = #tpu.dot_dimension_numbers<[1], [0], [0], [1], [0, 0, 1, 1], [], []>} : vector<64x128xbf16>, vector<128x128xbf16>, vector<64x128xf32> -> vector<64x128xf32>
    %98 = arith.addf %94, %97 : vector<64x128xf32>
    %c3 = arith.constant 3 : index
    %c0_59 = arith.constant 0 : index
    %99 = vector.load %arg5[%c3, %c0_59] : memref<24x128xf32, #tpu.memory_space<vmem>>, vector<1x128xf32>
    %100 = vector.broadcast %99 : vector<1x128xf32> to vector<64x128xf32>
    %101 = arith.addf %98, %100 : vector<64x128xf32>
    %102 = arith.mulf %101, %101 : vector<64x128xf32>
    %cst_60 = arith.constant dense<0.000000e+00> : vector<64xf32>
    %103 = vector.multi_reduction <add>, %102, %cst_60 [1] : vector<64x128xf32> to vector<64xf32>
    %104 = vector.shape_cast %103 : vector<64xf32> to vector<64x1xf32>
    %cst_61 = arith.constant 1.000000e-24 : f32
    %105 = vector.broadcast %cst_61 : f32 to vector<64x1xf32>
    %106 = arith.maximumf %104, %105 : vector<64x1xf32>
    %107 = math.rsqrt %106 : vector<64x1xf32>
    %108 = vector.broadcast %107 : vector<64x1xf32> to vector<64x128xf32>
    %109 = arith.mulf %101, %108 : vector<64x128xf32>
    %cst_62 = arith.constant 0.000000e+00 : f32
    %110 = vector.broadcast %cst_62 : f32 to vector<64x128xf32>
    %111 = arith.maximumf %109, %110 : vector<64x128xf32>
    %c7 = arith.constant 7 : index
    %c0_63 = arith.constant 0 : index
    %112 = vector.load %arg5[%c7, %c0_63] : memref<24x128xf32, #tpu.memory_space<vmem>>, vector<1x128xf32>
    %113 = vector.broadcast %112 : vector<1x128xf32> to vector<64x128xf32>
    %114 = arith.mulf %111, %113 : vector<64x128xf32>
    %c11 = arith.constant 11 : index
    %c0_64 = arith.constant 0 : index
    %115 = vector.load %arg5[%c11, %c0_64] : memref<24x128xf32, #tpu.memory_space<vmem>>, vector<1x128xf32>
    %116 = vector.broadcast %115 : vector<1x128xf32> to vector<64x128xf32>
    %117 = arith.addf %114, %116 : vector<64x128xf32>
    %118 = arith.addf %117, %68 : vector<64x128xf32>
    %119 = arith.truncf %118 : vector<64x128xf32> to vector<64x128xbf16>
    %cst_65 = arith.constant dense<0.000000e+00> : vector<64x128xf32>
    %120 = tpu.matmul %1, %119, %cst_65 {dimension_numbers = #tpu.dot_dimension_numbers<[1], [0], [0], [1], [0, 0, 1, 1], [], []>} : vector<64x64xbf16>, vector<64x128xbf16>, vector<64x128xf32> -> vector<64x128xf32>
    %121 = arith.truncf %120 : vector<64x128xf32> to vector<64x128xbf16>
    %c3_66 = arith.constant 3 : index
    %c0_67 = arith.constant 0 : index
    %c0_68 = arith.constant 0 : index
    %122 = vector.load %arg4[%c3_66, %c0_67, %c0_68] : memref<4x256x128xbf16, #tpu.memory_space<vmem>>, vector<1x128x128xbf16>
    %123 = vector.shape_cast %122 : vector<1x128x128xbf16> to vector<128x128xbf16>
    %cst_69 = arith.constant dense<0.000000e+00> : vector<64x128xf32>
    %124 = tpu.matmul %119, %123, %cst_69 {dimension_numbers = #tpu.dot_dimension_numbers<[1], [0], [0], [1], [0, 0, 1, 1], [], []>} : vector<64x128xbf16>, vector<128x128xbf16>, vector<64x128xf32> -> vector<64x128xf32>
    %c3_70 = arith.constant 3 : index
    %c128_71 = arith.constant 128 : index
    %c0_72 = arith.constant 0 : index
    %125 = vector.load %arg4[%c3_70, %c128_71, %c0_72] : memref<4x256x128xbf16, #tpu.memory_space<vmem>>, vector<1x128x128xbf16>
    %126 = vector.shape_cast %125 : vector<1x128x128xbf16> to vector<128x128xbf16>
    %cst_73 = arith.constant dense<0.000000e+00> : vector<64x128xf32>
    %127 = tpu.matmul %121, %126, %cst_73 {dimension_numbers = #tpu.dot_dimension_numbers<[1], [0], [0], [1], [0, 0, 1, 1], [], []>} : vector<64x128xbf16>, vector<128x128xbf16>, vector<64x128xf32> -> vector<64x128xf32>
    %128 = arith.addf %124, %127 : vector<64x128xf32>
    %c4 = arith.constant 4 : index
    %c0_74 = arith.constant 0 : index
    %129 = vector.load %arg5[%c4, %c0_74] : memref<24x128xf32, #tpu.memory_space<vmem>>, vector<1x128xf32>
    %130 = vector.broadcast %129 : vector<1x128xf32> to vector<64x128xf32>
    %131 = arith.addf %128, %130 : vector<64x128xf32>
    %132 = arith.mulf %131, %131 : vector<64x128xf32>
    %cst_75 = arith.constant dense<0.000000e+00> : vector<64xf32>
    %133 = vector.multi_reduction <add>, %132, %cst_75 [1] : vector<64x128xf32> to vector<64xf32>
    %134 = vector.shape_cast %133 : vector<64xf32> to vector<64x1xf32>
    %cst_76 = arith.constant 1.000000e-24 : f32
    %135 = vector.broadcast %cst_76 : f32 to vector<64x1xf32>
    %136 = arith.maximumf %134, %135 : vector<64x1xf32>
    %137 = math.rsqrt %136 : vector<64x1xf32>
    %138 = vector.broadcast %137 : vector<64x1xf32> to vector<64x128xf32>
    %139 = arith.mulf %131, %138 : vector<64x128xf32>
    %cst_77 = arith.constant 0.000000e+00 : f32
    %140 = vector.broadcast %cst_77 : f32 to vector<64x128xf32>
    %141 = arith.maximumf %139, %140 : vector<64x128xf32>
    %c8 = arith.constant 8 : index
    %c0_78 = arith.constant 0 : index
    %142 = vector.load %arg5[%c8, %c0_78] : memref<24x128xf32, #tpu.memory_space<vmem>>, vector<1x128xf32>
    %143 = vector.broadcast %142 : vector<1x128xf32> to vector<64x128xf32>
    %144 = arith.mulf %141, %143 : vector<64x128xf32>
    %c12 = arith.constant 12 : index
    %c0_79 = arith.constant 0 : index
    %145 = vector.load %arg5[%c12, %c0_79] : memref<24x128xf32, #tpu.memory_space<vmem>>, vector<1x128xf32>
    %146 = vector.broadcast %145 : vector<1x128xf32> to vector<64x128xf32>
    %147 = arith.addf %144, %146 : vector<64x128xf32>
    %148 = arith.addf %147, %118 : vector<64x128xf32>
    %cst_80 = arith.constant dense<0.000000e+00> : vector<128xf32>
    %149 = vector.multi_reduction <add>, %148, %cst_80 [0] : vector<64x128xf32> to vector<128xf32>
    %150 = vector.shape_cast %149 : vector<128xf32> to vector<1x128xf32>
    %cst_81 = arith.constant 6.400000e+01 : f32
    %151 = vector.broadcast %cst_81 : f32 to vector<1x128xf32>
    %152 = arith.divf %150, %151 : vector<1x128xf32>
    %153 = arith.truncf %152 : vector<1x128xf32> to vector<1x128xbf16>
    %c0_82 = arith.constant 0 : index
    %c0_83 = arith.constant 0 : index
    %154 = vector.load %arg7[%c0_82, %c0_83] : memref<128x128xbf16, #tpu.memory_space<vmem>>, vector<128x128xbf16>
    %cst_84 = arith.constant dense<0.000000e+00> : vector<1x128xf32>
    %155 = tpu.matmul %153, %154, %cst_84 {dimension_numbers = #tpu.dot_dimension_numbers<[1], [0], [0], [1], [0, 0, 1, 1], [], []>} : vector<1x128xbf16>, vector<128x128xbf16>, vector<1x128xf32> -> vector<1x128xf32>
    %c14 = arith.constant 14 : index
    %c0_85 = arith.constant 0 : index
    %156 = vector.load %arg5[%c14, %c0_85] : memref<24x128xf32, #tpu.memory_space<vmem>>, vector<1x128xf32>
    %157 = arith.addf %155, %156 : vector<1x128xf32>
    %cst_86 = arith.constant 0.000000e+00 : f32
    %158 = vector.broadcast %cst_86 : f32 to vector<1x128xf32>
    %159 = arith.maximumf %157, %158 : vector<1x128xf32>
    %160 = arith.truncf %159 : vector<1x128xf32> to vector<1x128xbf16>
    %c0_87 = arith.constant 0 : index
    %c0_88 = arith.constant 0 : index
    %161 = vector.load %arg8[%c0_87, %c0_88] : memref<128x128xbf16, #tpu.memory_space<vmem>>, vector<128x128xbf16>
    %cst_89 = arith.constant dense<0.000000e+00> : vector<1x128xf32>
    %162 = tpu.matmul %160, %161, %cst_89 {dimension_numbers = #tpu.dot_dimension_numbers<[1], [0], [0], [1], [0, 0, 1, 1], [], []>} : vector<1x128xbf16>, vector<128x128xbf16>, vector<1x128xf32> -> vector<1x128xf32>
    %c15 = arith.constant 15 : index
    %c0_90 = arith.constant 0 : index
    %163 = vector.load %arg5[%c15, %c0_90] : memref<24x128xf32, #tpu.memory_space<vmem>>, vector<1x128xf32>
    %164 = arith.addf %162, %163 : vector<1x128xf32>
    %cst_91 = arith.constant 0.000000e+00 : f32
    %165 = vector.broadcast %cst_91 : f32 to vector<1x128xf32>
    %166 = arith.maximumf %164, %165 : vector<1x128xf32>
    %167 = arith.truncf %166 : vector<1x128xf32> to vector<1x128xbf16>
    %c0_92 = arith.constant 0 : index
    %c0_93 = arith.constant 0 : index
    %168 = vector.load %arg9[%c0_92, %c0_93] : memref<128x128xbf16, #tpu.memory_space<vmem>>, vector<128x128xbf16>
    %cst_94 = arith.constant dense<0.000000e+00> : vector<1x128xf32>
    %169 = tpu.matmul %167, %168, %cst_94 {dimension_numbers = #tpu.dot_dimension_numbers<[1], [0], [0], [1], [0, 0, 1, 1], [], []>} : vector<1x128xbf16>, vector<128x128xbf16>, vector<1x128xf32> -> vector<1x128xf32>
    %c16 = arith.constant 16 : index
    %c0_95 = arith.constant 0 : index
    %170 = vector.load %arg5[%c16, %c0_95] : memref<24x128xf32, #tpu.memory_space<vmem>>, vector<1x128xf32>
    %171 = arith.addf %169, %170 : vector<1x128xf32>
    %172 = vector.shape_cast %171 : vector<1x128xf32> to vector<1x128xf32>
    %173 = vector.broadcast %172 : vector<1x128xf32> to vector<8x128xf32>
    %c0_96 = arith.constant 0 : index
    %c0_97 = arith.constant 0 : index
    %c0_98 = arith.constant 0 : index
    %174 = vector.load %arg10[%c0_96, %c0_97, %c0_98] : memref<1x8x128xf32, #tpu.memory_space<vmem>>, vector<1x8x128xf32>
    %175 = vector.shape_cast %174 : vector<1x8x128xf32> to vector<8x128xf32>
    %176 = vector.shape_cast %173 : vector<8x128xf32> to vector<1x8x128xf32>
    tpu.vector_store %arg10[%c0_96, %c0_97, %c0_98], %176 {strides = array<i32>} : memref<1x8x128xf32, #tpu.memory_space<vmem>>, vector<1x8x128xf32>,
    return
  }
  func.func @transform_0(%arg0: i32) -> (i32, i32, i32) {
    %c0_i32 = arith.constant 0 : i32
    %c0_i32_0 = arith.constant 0 : i32
    %c0_i32_1 = arith.constant 0 : i32
    return %arg0, %c0_i32, %c0_i32_0 : i32, i32, i32
  }
  func.func @transform_1(%arg0: i32) -> (i32, i32, i32) {
    %c0_i32 = arith.constant 0 : i32
    %c0_i32_0 = arith.constant 0 : i32
    %c0_i32_1 = arith.constant 0 : i32
    return %arg0, %c0_i32, %c0_i32_0 : i32, i32, i32
  }
  func.func @transform_2(%arg0: i32) -> (i32, i32) {
    %c0_i32 = arith.constant 0 : i32
    %c0_i32_0 = arith.constant 0 : i32
    %c0_i32_1 = arith.constant 0 : i32
    return %c0_i32, %c0_i32_0 : i32, i32
  }
  func.func @transform_3(%arg0: i32) -> (i32, i32, i32) {
    %c0_i32 = arith.constant 0 : i32
    %c0_i32_0 = arith.constant 0 : i32
    %c0_i32_1 = arith.constant 0 : i32
    %c0_i32_2 = arith.constant 0 : i32
    return %c0_i32, %c0_i32_0, %c0_i32_1 : i32, i32, i32
  }
  func.func @transform_4(%arg0: i32) -> (i32, i32) {
    %c0_i32 = arith.constant 0 : i32
    %c0_i32_0 = arith.constant 0 : i32
    %c0_i32_1 = arith.constant 0 : i32
    return %c0_i32, %c0_i32_0 : i32, i32
  }
  func.func @transform_5(%arg0: i32) -> (i32, i32) {
    %c0_i32 = arith.constant 0 : i32
    %c0_i32_0 = arith.constant 0 : i32
    %c0_i32_1 = arith.constant 0 : i32
    return %c0_i32, %c0_i32_0 : i32, i32
  }
  func.func @transform_6(%arg0: i32) -> (i32, i32) {
    %c0_i32 = arith.constant 0 : i32
    %c0_i32_0 = arith.constant 0 : i32
    %c0_i32_1 = arith.constant 0 : i32
    return %c0_i32, %c0_i32_0 : i32, i32
  }
  func.func @transform_7(%arg0: i32) -> (i32, i32) {
    %c0_i32 = arith.constant 0 : i32
    %c0_i32_0 = arith.constant 0 : i32
    %c0_i32_1 = arith.constant 0 : i32
    return %c0_i32, %c0_i32_0 : i32, i32
  }
  func.func @transform_8(%arg0: i32) -> (i32, i32) {
    %c0_i32 = arith.constant 0 : i32
    %c0_i32_0 = arith.constant 0 : i32
    %c0_i32_1 = arith.constant 0 : i32
    return %c0_i32, %c0_i32_0 : i32, i32
  }
  func.func @transform_9(%arg0: i32) -> (i32, i32, i32) {
    %c0_i32 = arith.constant 0 : i32
    %c0_i32_0 = arith.constant 0 : i32
    %c0_i32_1 = arith.constant 0 : i32
    return %arg0, %c0_i32, %c0_i32_0 : i32, i32, i32
  }
  func.func @transform_10(%arg0: i32) -> (i32, i32, i32) {
    %c0_i32 = arith.constant 0 : i32
    %c0_i32_0 = arith.constant 0 : i32
    %c0_i32_1 = arith.constant 0 : i32
    return %arg0, %c0_i32, %c0_i32_0 : i32, i32, i32
  }
}

</mosaic_0001>

<llo_original>
// kernel: tpu_custom_call.1
$region0: #{tpu_custom_call.1}
  #allocation0 [shape = 'u32[]', space=smem, size = 0x4, offset = 0x4, fixed_abs, tag = 'smem constant byte address 0x4 - core index']
  #allocation1 [shape = 'u32[144,128]{1,0:T(1,128)}', space=vmem, size = 0x12000, scoped, tag = 'internal scratch']
  %s0 = inlined_call_operand.hbm [shape: bf16[8,64,128], index: 0, kind: input, shape index: {}]
  %s1 = inlined_call_operand.hbm [shape: bf16[8,64,64], index: 1, kind: input, shape index: {}]
  %s2 = inlined_call_operand.hbm [shape: bf16[128,128], index: 2, kind: input, shape index: {}]
  %s3 = inlined_call_operand.hbm [shape: bf16[4,256,128], index: 3, kind: input, shape index: {}]
  %s4 = inlined_call_operand.hbm [shape: f32[24,128], index: 4, kind: input, shape index: {}]
  %s5 = inlined_call_operand.hbm [shape: bf16[256,128], index: 5, kind: input, shape index: {}]
  %s6 = inlined_call_operand.hbm [shape: bf16[128,128], index: 6, kind: input, shape index: {}]
  %s7 = inlined_call_operand.hbm [shape: bf16[128,128], index: 7, kind: input, shape index: {}]
  %s8 = inlined_call_operand.hbm [shape: bf16[128,128], index: 8, kind: input, shape index: {}]
  %s9 = inlined_call_operand.hbm [shape: f32[8,8,128], index: 9, kind: output, shape index: {0}]
  %s10 = inlined_call_operand.hbm [shape: f32[8,64,128], index: 10, kind: output, shape index: {1}]
  %11 = xla_tuple %s9, %s10
  %s12 = sld [smem:[#allocation0]]
  $region113: #{tpu_custom_call.1} parent=0
    _
  %s14 = ssub.s32 1, %s12
  %s15 = scalar_select 0, %s14, %s12
  $region1: #{tpu_custom_call.1} parent=0
    #allocation2 [shape = 'u8[32768]{0}', space=vmem, size = 0x8000, scoped, tag = 'input window, operand 0']
    #allocation3 [shape = 's32[2]{0}', space=sflag, size = 0x8, scoped, tag = 'scoped memory for tpu_custom_call.1']
    #allocation4 [shape = 's32[2]{0}', space=sflag, size = 0x8, scoped, tag = 'scoped memory for tpu_custom_call.1']
    #allocation5 [shape = 'u8[32768]{0}', space=vmem, size = 0x8000, scoped, tag = 'input window, operand 1']
    #allocation6 [shape = 's32[2]{0}', space=sflag, size = 0x8, scoped, tag = 'scoped memory for tpu_custom_call.1']
    #allocation7 [shape = 'u8[32768]{0}', space=vmem, size = 0x8000, scoped, tag = 'input window, operand 2, single buffered']
    #allocation8 [shape = 'u8[262144]{0}', space=vmem, size = 0x40000, scoped, tag = 'input window, operand 3, single buffered']
    #allocation9 [shape = 's32[1]{0}', space=sflag, size = 0x4, scoped, tag = 'scoped memory for tpu_custom_call.1']
    #allocation10 [shape = 'u8[12288]{0}', space=vmem, size = 0x3000, scoped, tag = 'input window, operand 4, single buffered']
    #allocation11 [shape = 'u8[65536]{0}', space=vmem, size = 0x10000, scoped, tag = 'input window, operand 5, single buffered']
    #allocation12 [shape = 's32[1]{0}', space=sflag, size = 0x4, scoped, tag = 'scoped memory for tpu_custom_call.1']
    #allocation13 [shape = 'u8[32768]{0}', space=vmem, size = 0x8000, scoped, tag = 'input window, operand 6, single buffered']
    #allocation14 [shape = 'u8[32768]{0}', space=vmem, size = 0x8000, scoped, tag = 'input window, operand 7, single buffered']
    #allocation15 [shape = 's32[1]{0}', space=sflag, size = 0x4, scoped, tag = 'scoped memory for tpu_custom_call.1']
    #allocation16 [shape = 'u8[32768]{0}', space=vmem, size = 0x8000, scoped, tag = 'input window, operand 8, single buffered']
    #allocation17 [shape = 'u8[8192]{0}', space=vmem, size = 0x2000, scoped, tag = 'output window, operand 0']
    #allocation18 [shape = 'u8[65536]{0}', space=vmem, size = 0x10000, scoped, tag = 'output window, operand 1']
    #allocation19 [shape = 's32[2]{0}', space=sflag, size = 0x8, scoped, tag = 'scoped memory for tpu_custom_call.1']
    %16 = vsyncpa [#allocation3], 0
    %s17 = scalar_lea.sflag [#allocation3], 1
    %18 = vsyncpa %s17, 0
    %19 = vsyncpa [#allocation6], 0
    %s20 = scalar_lea.sflag [#allocation6], 1
    %21 = vsyncpa %s20, 0
    %22 = vsyncpa [#allocation9], 0
    %23 = vsyncpa [#allocation12], 0
    %24 = vsyncpa [#allocation15], 0
    %25 = vsyncpa [#allocation4], 0
    %s26 = scalar_lea.sflag [#allocation4], 1
    %27 = vsyncpa %s26, 0
    %28 = vsyncpa [#allocation19], 0
    %s29 = scalar_lea.sflag [#allocation19], 1
    %30 = vsyncpa %s29, 0
    loop: start=0, step=1, limit=10
    $region2: #{tpu_custom_call.1} parent=1 // loop_pre_header
      _
    $region3: #{tpu_custom_call.1} parent=1 // loop_header
      %s32 = sphi 0, %s36
      %p33 = scmp.ge.s32.totalorder %s32, 10
      %s42 = sphi 0, %s44
      %s45 = sphi 0, %s42
      %s46 = sphi 0, %s45
      %s62 = sphi 0, %s46
      %s68 = sphi 0, %s70
      %s71 = sphi 0, %s68
      %s72 = sphi 0, %s71
      %s88 = sphi 0, %s72
      %s92 = sphi 0, %s92
      %s94 = sphi 0, %s92
      %s95 = sphi 0, %s94
      %s109 = sphi 0, %s95
      %s113 = sphi 0, %s113
      %s115 = sphi 0, %s113
      %s116 = sphi 0, %s115
      %s130 = sphi 0, %s116
      %s134 = sphi 0, %s134
      %s136 = sphi 0, %s134
      %s137 = sphi 0, %s136
      %s151 = sphi 0, %s137
      %s155 = sphi 0, %s155
      %s157 = sphi 0, %s155
      %s158 = sphi 0, %s157
      %s172 = sphi 0, %s158
      %s176 = sphi 0, %s176
      %s178 = sphi 0, %s176
      %s179 = sphi 0, %s178
      %s193 = sphi 0, %s179
      %s197 = sphi 0, %s197
      %s199 = sphi 0, %s197
      %s200 = sphi 0, %s199
      %s214 = sphi 0, %s200
      %s218 = sphi 0, %s218
      %s220 = sphi 0, %s218
      %s221 = sphi 0, %s220
      %s235 = sphi 0, %s221
      %s241 = sphi 0, %s243
      %s244 = sphi 0, %s241
      %s245 = sphi 0, %s244
      %s261 = sphi 0, %s245
      %s267 = sphi 0, %s269
      %s270 = sphi 0, %s267
      %s271 = sphi 0, %s270
      %s287 = sphi 0, %s271
    $region4: #{tpu_custom_call.1} parent=1 // loop_header_branch
      %35 = sbr.rel (%p33) target = $region8
    $region5: #{tpu_custom_call.1} parent=1 // loop_body
      %s37 = ssub.s32 %s32, 1
      %s38 = ssub.s32 %s32, 2
      %s39 = sadd.s32 %s32, 1
      %s40 = ssub.s32 %s32, %s39
      %p41 = scmp.eq.s32.totalorder %s40, 0
      %s43 = sadd.s32 %s42, 1
      %s44 = scalar_select %p41, %s42, %s43
      %p47 = pneg %p41
      %p48 = scmp.eq.s32.totalorder %s32, 7
      %p49 = por %p47, %p48
      %p50 = scmp.ne.s32.totalorder %s42, %s45
      %p51 = scmp.eq.s32.totalorder %s32, 0
      %p52 = por %p50, %p51
      %p53 = scmp.ne.s32.totalorder %s42, %s45
      %p54 = scmp.eq.s32.totalorder %s37, 7
      %p55 = por %p53, %p54
      %p56 = scmp.ne.s32.totalorder %s45, %s46
      %p57 = scmp.eq.s32.totalorder %s37, 0
      %p58 = por %p56, %p57
      %p59 = scmp.ne.s32.totalorder %s45, %s46
      %p60 = scmp.eq.s32.totalorder %s38, 7
      %p61 = por %p59, %p60
      %p63 = scmp.ne.s32.totalorder %s46, %s62
      %p64 = scmp.eq.s32.totalorder %s38, 0
      %p65 = por %p63, %p64
      %s66 = ssub.s32 %s32, %s39
      %p67 = scmp.eq.s32.totalorder %s66, 0
      %s69 = sadd.s32 %s68, 1
      %s70 = scalar_select %p67, %s68, %s69
      %p73 = pneg %p67
      %p74 = scmp.eq.s32.totalorder %s32, 7
      %p75 = por %p73, %p74
      %p76 = scmp.ne.s32.totalorder %s68, %s71
      %p77 = scmp.eq.s32.totalorder %s32, 0
      %p78 = por %p76, %p77
      %p79 = scmp.ne.s32.totalorder %s68, %s71
      %p80 = scmp.eq.s32.totalorder %s37, 7
      %p81 = por %p79, %p80
      %p82 = scmp.ne.s32.totalorder %s71, %s72
      %p83 = scmp.eq.s32.totalorder %s37, 0
      %p84 = por %p82, %p83
      %p85 = scmp.ne.s32.totalorder %s71, %s72
      %p86 = scmp.eq.s32.totalorder %s38, 7
      %p87 = por %p85, %p86
      %p89 = scmp.ne.s32.totalorder %s72, %s88
      %p90 = scmp.eq.s32.totalorder %s38, 0
      %p91 = por %p89, %p90
      %s93 = sadd.s32 %s92, 1
      %p96 = scmp.eq.s32.totalorder %s32, 7
      %p97 = scmp.ne.s32.totalorder %s92, %s94
      %p98 = scmp.eq.s32.totalorder %s32, 0
      %p99 = por %p97, %p98
      %p100 = scmp.ne.s32.totalorder %s92, %s94
      %p101 = scmp.eq.s32.totalorder %s37, 7
      %p102 = por %p100, %p101
      %p103 = scmp.ne.s32.totalorder %s94, %s95
      %p104 = scmp.eq.s32.totalorder %s37, 0
      %p105 = por %p103, %p104
      %p106 = scmp.ne.s32.totalorder %s94, %s95
      %p107 = scmp.eq.s32.totalorder %s38, 7
      %p108 = por %p106, %p107
      %p110 = scmp.ne.s32.totalorder %s95, %s109
      %p111 = scmp.eq.s32.totalorder %s38, 0
      %p112 = por %p110, %p111
      %s114 = sadd.s32 %s113, 1
      %p117 = scmp.eq.s32.totalorder %s32, 7
      %p118 = scmp.ne.s32.totalorder %s113, %s115
      %p119 = scmp.eq.s32.totalorder %s32, 0
      %p120 = por %p118, %p119
      %p121 = scmp.ne.s32.totalorder %s113, %s115
      %p122 = scmp.eq.s32.totalorder %s37, 7
      %p123 = por %p121, %p122
      %p124 = scmp.ne.s32.totalorder %s115, %s116
      %p125 = scmp.eq.s32.totalorder %s37, 0
      %p126 = por %p124, %p125
      %p127 = scmp.ne.s32.totalorder %s115, %s116
      %p128 = scmp.eq.s32.totalorder %s38, 7
      %p129 = por %p127, %p128
      %p131 = scmp.ne.s32.totalorder %s116, %s130
      %p132 = scmp.eq.s32.totalorder %s38, 0
      %p133 = por %p131, %p132
      %s135 = sadd.s32 %s134, 1
      %p138 = scmp.eq.s32.totalorder %s32, 7
      %p139 = scmp.ne.s32.totalorder %s134, %s136
      %p140 = scmp.eq.s32.totalorder %s32, 0
      %p141 = por %p139, %p140
      %p142 = scmp.ne.s32.totalorder %s134, %s136
      %p143 = scmp.eq.s32.totalorder %s37, 7
      %p144 = por %p142, %p143
      %p145 = scmp.ne.s32.totalorder %s136, %s137
      %p146 = scmp.eq.s32.totalorder %s37, 0
      %p147 = por %p145, %p146
      %p148 = scmp.ne.s32.totalorder %s136, %s137
      %p149 = scmp.eq.s32.totalorder %s38, 7
      %p150 = por %p148, %p149
      %p152 = scmp.ne.s32.totalorder %s137, %s151
      %p153 = scmp.eq.s32.totalorder %s38, 0
      %p154 = por %p152, %p153
      %s156 = sadd.s32 %s155, 1
      %p159 = scmp.eq.s32.totalorder %s32, 7
      %p160 = scmp.ne.s32.totalorder %s155, %s157
      %p161 = scmp.eq.s32.totalorder %s32, 0
      %p162 = por %p160, %p161
      %p163 = scmp.ne.s32.totalorder %s155, %s157
      %p164 = scmp.eq.s32.totalorder %s37, 7
      %p165 = por %p163, %p164
      %p166 = scmp.ne.s32.totalorder %s157, %s158
      %p167 = scmp.eq.s32.totalorder %s37, 0
      %p168 = por %p166, %p167
      %p169 = scmp.ne.s32.totalorder %s157, %s158
      %p170 = scmp.eq.s32.totalorder %s38, 7
      %p171 = por %p169, %p170
      %p173 = scmp.ne.s32.totalorder %s158, %s172
      %p174 = scmp.eq.s32.totalorder %s38, 0
      %p175 = por %p173, %p174
      %s177 = sadd.s32 %s176, 1
      %p180 = scmp.eq.s32.totalorder %s32, 7
      %p181 = scmp.ne.s32.totalorder %s176, %s178
      %p182 = scmp.eq.s32.totalorder %s32, 0
      %p183 = por %p181, %p182
      %p184 = scmp.ne.s32.totalorder %s176, %s178
      %p185 = scmp.eq.s32.totalorder %s37, 7
      %p186 = por %p184, %p185
      %p187 = scmp.ne.s32.totalorder %s178, %s179
      %p188 = scmp.eq.s32.totalorder %s37, 0
      %p189 = por %p187, %p188
      %p190 = scmp.ne.s32.totalorder %s178, %s179
      %p191 = scmp.eq.s32.totalorder %s38, 7
      %p192 = por %p190, %p191
      %p194 = scmp.ne.s32.totalorder %s179, %s193
      %p195 = scmp.eq.s32.totalorder %s38, 0
      %p196 = por %p194, %p195
      %s198 = sadd.s32 %s197, 1
      %p201 = scmp.eq.s32.totalorder %s32, 7
      %p202 = scmp.ne.s32.totalorder %s197, %s199
      %p203 = scmp.eq.s32.totalorder %s32, 0
      %p204 = por %p202, %p203
      %p205 = scmp.ne.s32.totalorder %s197, %s199
      %p206 = scmp.eq.s32.totalorder %s37, 7
      %p207 = por %p205, %p206
      %p208 = scmp.ne.s32.totalorder %s199, %s200
      %p209 = scmp.eq.s32.totalorder %s37, 0
      %p210 = por %p208, %p209
      %p211 = scmp.ne.s32.totalorder %s199, %s200
      %p212 = scmp.eq.s32.totalorder %s38, 7
      %p213 = por %p211, %p212
      %p215 = scmp.ne.s32.totalorder %s200, %s214
      %p216 = scmp.eq.s32.totalorder %s38, 0
      %p217 = por %p215, %p216
      %s219 = sadd.s32 %s218, 1
      %p222 = scmp.eq.s32.totalorder %s32, 7
      %p223 = scmp.ne.s32.totalorder %s218, %s220
      %p224 = scmp.eq.s32.totalorder %s32, 0
      %p225 = por %p223, %p224
      %p226 = scmp.ne.s32.totalorder %s218, %s220
      %p227 = scmp.eq.s32.totalorder %s37, 7
      %p228 = por %p226, %p227
      %p229 = scmp.ne.s32.totalorder %s220, %s221
      %p230 = scmp.eq.s32.totalorder %s37, 0
      %p231 = por %p229, %p230
      %p232 = scmp.ne.s32.totalorder %s220, %s221
      %p233 = scmp.eq.s32.totalorder %s38, 7
      %p234 = por %p232, %p233
      %p236 = scmp.ne.s32.totalorder %s221, %s235
      %p237 = scmp.eq.s32.totalorder %s38, 0
      %p238 = por %p236, %p237
      %s239 = ssub.s32 %s32, %s39
      %p240 = scmp.eq.s32.totalorder %s239, 0
      %s242 = sadd.s32 %s241, 1
      %s243 = scalar_select %p240, %s241, %s242
      %p246 = pneg %p240
      %p247 = scmp.eq.s32.totalorder %s32, 7
      %p248 = por %p246, %p247
      %p249 = scmp.ne.s32.totalorder %s241, %s244
      %p250 = scmp.eq.s32.totalorder %s32, 0
      %p251 = por %p249, %p250
      %p252 = scmp.ne.s32.totalorder %s241, %s244
      %p253 = scmp.eq.s32.totalorder %s37, 7
      %p254 = por %p252, %p253
      %p255 = scmp.ne.s32.totalorder %s244, %s245
      %p256 = scmp.eq.s32.totalorder %s37, 0
      %p257 = por %p255, %p256
      %p258 = scmp.ne.s32.totalorder %s244, %s245
      %p259 = scmp.eq.s32.totalorder %s38, 7
      %p260 = por %p258, %p259
      %p262 = scmp.ne.s32.totalorder %s245, %s261
      %p263 = scmp.eq.s32.totalorder %s38, 0
      %p264 = por %p262, %p263
      %s265 = ssub.s32 %s32, %s39
      %p266 = scmp.eq.s32.totalorder %s265, 0
      %s268 = sadd.s32 %s267, 1
      %s269 = scalar_select %p266, %s267, %s268
      %p272 = pneg %p266
      %p273 = scmp.eq.s32.totalorder %s32, 7
      %p274 = por %p272, %p273
      %p275 = scmp.ne.s32.totalorder %s267, %s270
      %p276 = scmp.eq.s32.totalorder %s32, 0
      %p277 = por %p275, %p276
      %p278 = scmp.ne.s32.totalorder %s267, %s270
      %p279 = scmp.eq.s32.totalorder %s37, 7
      %p280 = por %p278, %p279
      %p281 = scmp.ne.s32.totalorder %s270, %s271
      %p282 = scmp.eq.s32.totalorder %s37, 0
      %p283 = por %p281, %p282
      %p284 = scmp.ne.s32.totalorder %s270, %s271
      %p285 = scmp.eq.s32.totalorder %s38, 7
      %p286 = por %p284, %p285
      %p288 = scmp.ne.s32.totalorder %s271, %s287
      %p289 = scmp.eq.s32.totalorder %s38, 0
      %p290 = por %p288, %p289
      %p291 = scmp.le.s32.totalorder 1, %s32
      %p292 = scmp.lt.s32.totalorder %s32, 9
      %p293 = pnand %p291, %p292
      %p294 = pneg %p293
      // Predicated region
      $region9: #{tpu_custom_call.1} parent=5 // pred_check
        _
      $region10: #{tpu_custom_call.1} parent=5 // pred_check_branch
        %296 = sbr.rel (%p293) target = $region12
      $region11: #{tpu_custom_call.1} parent=5 // pred_region
        %s297 = ssub.s32 %s32, 1
        // Predicated region
        $region13: #{tpu_custom_call.1} parent=11 // pred_check
          %p298 = pneg %p105
        $region14: #{tpu_custom_call.1} parent=11 // pred_check_branch
          %300 = sbr.rel (%p298) target = $region16
        $region15: #{tpu_custom_call.1} parent=11 // pred_region
          %s302 = ssub.s32 1024, 1024
          %303 = vsyncadd [#allocation6], %s302
          %s304 = sshll.u32 [#allocation7], 4
          %s305 = int_to_ptr.vmem [resolvable:$true] %s304
          %310 = dma.hbm_to_vmem [thread:$0]  %s2, 1024, %s305, [#allocation6], 64, 64, 4
        $region16: #{tpu_custom_call.1} parent=11 // pred_fallthru
          _
        // Predicated region
        $region17: #{tpu_custom_call.1} parent=11 // pred_check
          %p311 = pneg %p126
        $region18: #{tpu_custom_call.1} parent=11 // pred_check_branch
          %313 = sbr.rel (%p311) target = $region20
        $region19: #{tpu_custom_call.1} parent=11 // pred_region
          %s315 = ssub.s32 8192, 8192
          %316 = vsyncadd [#allocation9], %s315
          %s317 = sshll.u32 [#allocation8], 4
          %s318 = int_to_ptr.vmem [resolvable:$true] %s317
          %323 = dma.hbm_to_vmem [thread:$0]  %s3, 8192, %s318, [#allocation9], 64, 64, 4
        $region20: #{tpu_custom_call.1} parent=11 // pred_fallthru
          _
        // Predicated region
        $region21: #{tpu_custom_call.1} parent=11 // pred_check
          %p324 = pneg %p147
        $region22: #{tpu_custom_call.1} parent=11 // pred_check_branch
          %326 = sbr.rel (%p324) target = $region24
        $region23: #{tpu_custom_call.1} parent=11 // pred_region
          %s328 = ssub.s32 384, 384
          %329 = vsyncadd [#allocation9], %s328
          %s330 = sshll.u32 [#allocation10], 4
          %s331 = int_to_ptr.vmem [resolvable:$true] %s330
          %336 = dma.hbm_to_vmem [thread:$0]  %s4, 384, %s331, [#allocation9], 128, 128, 8
        $region24: #{tpu_custom_call.1} parent=11 // pred_fallthru
          _
        // Predicated region
        $region25: #{tpu_custom_call.1} parent=11 // pred_check
          %p337 = pneg %p168
        $region26: #{tpu_custom_call.1} parent=11 // pred_check_branch
          %339 = sbr.rel (%p337) target = $region28
        $region27: #{tpu_custom_call.1} parent=11 // pred_region
          %s341 = ssub.s32 2048, 2048
          %342 = vsyncadd [#allocation12], %s341
          %s343 = sshll.u32 [#allocation11], 4
          %s344 = int_to_ptr.vmem [resolvable:$true] %s343
          %349 = dma.hbm_to_vmem [thread:$0]  %s5, 2048, %s344, [#allocation12], 64, 64, 4
        $region28: #{tpu_custom_call.1} parent=11 // pred_fallthru
          _
        // Predicated region
        $region29: #{tpu_custom_call.1} parent=11 // pred_check
          %p350 = pneg %p189
        $region30: #{tpu_custom_call.1} parent=11 // pred_check_branch
          %352 = sbr.rel (%p350) target = $region32
        $region31: #{tpu_custom_call.1} parent=11 // pred_region
          %s354 = ssub.s32 1024, 1024
          %355 = vsyncadd [#allocation12], %s354
          %s356 = sshll.u32 [#allocation13], 4
          %s357 = int_to_ptr.vmem [resolvable:$true] %s356
          %362 = dma.hbm_to_vmem [thread:$0]  %s6, 1024, %s357, [#allocation12], 64, 64, 4
        $region32: #{tpu_custom_call.1} parent=11 // pred_fallthru
          _
        // Predicated region
        $region33: #{tpu_custom_call.1} parent=11 // pred_check
          %p363 = pneg %p210
        $region34: #{tpu_custom_call.1} parent=11 // pred_check_branch
          %365 = sbr.rel (%p363) target = $region36
        $region35: #{tpu_custom_call.1} parent=11 // pred_region
          %s367 = ssub.s32 1024, 1024
          %368 = vsyncadd [#allocation15], %s367
          %s369 = sshll.u32 [#allocation14], 4
          %s370 = int_to_ptr.vmem [resolvable:$true] %s369
          %375 = dma.hbm_to_vmem [thread:$0]  %s7, 1024, %s370, [#allocation15], 64, 64, 4
        $region36: #{tpu_custom_call.1} parent=11 // pred_fallthru
          _
        // Predicated region
        $region37: #{tpu_custom_call.1} parent=11 // pred_check
          %p376 = pneg %p231
        $region38: #{tpu_custom_call.1} parent=11 // pred_check_branch
          %378 = sbr.rel (%p376) target = $region40
        $region39: #{tpu_custom_call.1} parent=11 // pred_region
          %s380 = ssub.s32 1024, 1024
          %381 = vsyncadd [#allocation15], %s380
          %s382 = sshll.u32 [#allocation16], 4
          %s383 = int_to_ptr.vmem [resolvable:$true] %s382
          %388 = dma.hbm_to_vmem [thread:$0]  %s8, 1024, %s383, [#allocation15], 64, 64, 4
        $region40: #{tpu_custom_call.1} parent=11 // pred_fallthru
          _
      $region12: #{tpu_custom_call.1} parent=5 // pred_fallthru
        _
      %p389 = scmp.lt.s32.totalorder %s32, 8
      // Predicated region
      $region41: #{tpu_custom_call.1} parent=5 // pred_check
        %p390 = pneg %p389
      $region42: #{tpu_custom_call.1} parent=5 // pred_check_branch
        %392 = sbr.rel (%p390) target = $region44
      $region43: #{tpu_custom_call.1} parent=5 // pred_region
        // Predicated region
        $region45: #{tpu_custom_call.1} parent=43 // pred_check
          %p393 = pneg %p52
        $region46: #{tpu_custom_call.1} parent=43 // pred_check_branch
          %395 = sbr.rel (%p393) target = $region48
        $region47: #{tpu_custom_call.1} parent=43 // pred_region
          %s396 = sand.u32 %s42, 1
          %s397 = scalar_lea.sflag [#allocation3], %s396
          %s398 = sand.u32 %s42, 1
          %s399 = smul.addr %s398, 32
          %s400 = scalar_lea.vmem [#allocation2], %s399
          %s402 = ssub.s32 512, 512
          %403 = vsyncadd %s397, %s402
          %s404 = smul.addr %s32, 8
          %s405 = smul.addr %s404, 64
          %s406 = scalar_lea.hbm %s0, %s405
          %s407 = sshll.u32 %s400, 4
          %s408 = int_to_ptr.vmem [resolvable:$true] %s407
          %413 = dma.hbm_to_vmem [thread:$0]  %s406, 512, %s408, %s397, 64, 64, 4
        $region48: #{tpu_custom_call.1} parent=43 // pred_fallthru
          _
        // Predicated region
        $region49: #{tpu_custom_call.1} parent=43 // pred_check
          %p414 = pneg %p78
        $region50: #{tpu_custom_call.1} parent=43 // pred_check_branch
          %416 = sbr.rel (%p414) target = $region52
        $region51: #{tpu_custom_call.1} parent=43 // pred_region
          %s417 = sand.u32 %s32, 1
          %s418 = scalar_lea.sflag [#allocation6], %s417
          %s419 = sand.u32 %s68, 1
          %s420 = smul.addr %s419, 32
          %s421 = scalar_lea.vmem [#allocation5], %s420
          %s423 = ssub.s32 512, 512
          %424 = vsyncadd %s418, %s423
          %s425 = smul.addr %s32, 8
          %s426 = smul.addr %s425, 64
          %s427 = scalar_lea.hbm %s1, %s426
          %s428 = sshll.u32 %s421, 4
          %s429 = int_to_ptr.vmem [resolvable:$true] %s428
          %434 = dma.hbm_to_vmem [thread:$0]  %s427, 512, %s429, %s418, 64, 64, 4
        $region52: #{tpu_custom_call.1} parent=43 // pred_fallthru
          _
      $region44: #{tpu_custom_call.1} parent=5 // pred_fallthru
        _
      %p435 = scmp.le.s32.totalorder 1, %s32
      %p436 = scmp.lt.s32.totalorder %s32, 9
      %p437 = pnand %p435, %p436
      %p438 = pneg %p437
      // Predicated region
      $region53: #{tpu_custom_call.1} parent=5 // pred_check
        _
      $region54: #{tpu_custom_call.1} parent=5 // pred_check_branch
        %440 = sbr.rel (%p437) target = $region56
      $region55: #{tpu_custom_call.1} parent=5 // pred_region
        %s441 = ssub.s32 %s32, 1
        %s442 = sand.u32 %s45, 1
        %s443 = scalar_lea.sflag [#allocation3], %s442
        %s444 = sand.u32 %s45, 1
        %s445 = smul.addr %s444, 32
        %s446 = scalar_lea.vmem [#allocation2], %s445
        // Predicated region
        $region57: #{tpu_custom_call.1} parent=55 // pred_check
          %p447 = pneg %p58
        $region58: #{tpu_custom_call.1} parent=55 // pred_check_branch
          %449 = sbr.rel (%p447) target = $region60
        $region59: #{tpu_custom_call.1} parent=55 // pred_region
          %450 = dma.done %s443, 512
        $region60: #{tpu_custom_call.1} parent=55 // pred_fallthru
          _
        %s451 = sand.u32 %s37, 1
        %s452 = scalar_lea.sflag [#allocation6], %s451
        %s453 = sand.u32 %s71, 1
        %s454 = smul.addr %s453, 32
        %s455 = scalar_lea.vmem [#allocation5], %s454
        // Predicated region
        $region61: #{tpu_custom_call.1} parent=55 // pred_check
          %p456 = pneg %p84
        $region62: #{tpu_custom_call.1} parent=55 // pred_check_branch
          %458 = sbr.rel (%p456) target = $region64
        $region63: #{tpu_custom_call.1} parent=55 // pred_region
          %459 = dma.done %s452, 512
        $region64: #{tpu_custom_call.1} parent=55 // pred_fallthru
          _
        // Predicated region
        $region65: #{tpu_custom_call.1} parent=55 // pred_check
          %p460 = pneg %p105
        $region66: #{tpu_custom_call.1} parent=55 // pred_check_branch
          %462 = sbr.rel (%p460) target = $region68
        $region67: #{tpu_custom_call.1} parent=55 // pred_region
          %463 = dma.done [#allocation6], 1024
        $region68: #{tpu_custom_call.1} parent=55 // pred_fallthru
          _
        // Predicated region
        $region69: #{tpu_custom_call.1} parent=55 // pred_check
          %p464 = pneg %p126
        $region70: #{tpu_custom_call.1} parent=55 // pred_check_branch
          %466 = sbr.rel (%p464) target = $region72
        $region71: #{tpu_custom_call.1} parent=55 // pred_region
          %467 = dma.done [#allocation9], 8192
        $region72: #{tpu_custom_call.1} parent=55 // pred_fallthru
          _
        // Predicated region
        $region73: #{tpu_custom_call.1} parent=55 // pred_check
          %p468 = pneg %p147
        $region74: #{tpu_custom_call.1} parent=55 // pred_check_branch
          %470 = sbr.rel (%p468) target = $region76
        $region75: #{tpu_custom_call.1} parent=55 // pred_region
          %471 = dma.done [#allocation9], 384
        $region76: #{tpu_custom_call.1} parent=55 // pred_fallthru
          _
        // Predicated region
        $region77: #{tpu_custom_call.1} parent=55 // pred_check
          %p472 = pneg %p168
        $region78: #{tpu_custom_call.1} parent=55 // pred_check_branch
          %474 = sbr.rel (%p472) target = $region80
        $region79: #{tpu_custom_call.1} parent=55 // pred_region
          %475 = dma.done [#allocation12], 2048
        $region80: #{tpu_custom_call.1} parent=55 // pred_fallthru
          _
        // Predicated region
        $region81: #{tpu_custom_call.1} parent=55 // pred_check
          %p476 = pneg %p189
        $region82: #{tpu_custom_call.1} parent=55 // pred_check_branch
          %478 = sbr.rel (%p476) target = $region84
        $region83: #{tpu_custom_call.1} parent=55 // pred_region
          %479 = dma.done [#allocation12], 1024
        $region84: #{tpu_custom_call.1} parent=55 // pred_fallthru
          _
        // Predicated region
        $region85: #{tpu_custom_call.1} parent=55 // pred_check
          %p480 = pneg %p210
        $region86: #{tpu_custom_call.1} parent=55 // pred_check_branch
          %482 = sbr.rel (%p480) target = $region88
        $region87: #{tpu_custom_call.1} parent=55 // pred_region
          %483 = dma.done [#allocation15], 1024
        $region88: #{tpu_custom_call.1} parent=55 // pred_fallthru
          _
        // Predicated region
        $region89: #{tpu_custom_call.1} parent=55 // pred_check
          %p484 = pneg %p231
        $region90: #{tpu_custom_call.1} parent=55 // pred_check_branch
          %486 = sbr.rel (%p484) target = $region92
        $region91: #{tpu_custom_call.1} parent=55 // pred_region
          %487 = dma.done [#allocation15], 1024
        $region92: #{tpu_custom_call.1} parent=55 // pred_fallthru
          _
        %s488 = sand.u32 %s45, 1
        %s489 = scalar_lea.sflag [#allocation3], %s488
        %s490 = sand.u32 %s45, 1
        %s491 = smul.addr %s490, 32
        %s492 = scalar_lea.vmem [#allocation2], %s491
        %p493 = pneg %p58
        %p494 = pneg %p55
        %s495 = sand.u32 %s37, 1
        %s496 = scalar_lea.sflag [#allocation6], %s495
        %s497 = sand.u32 %s71, 1
        %s498 = smul.addr %s497, 32
        %s499 = scalar_lea.vmem [#allocation5], %s498
        %p500 = pneg %p84
        %p501 = pneg %p81
        %p502 = pneg %p105
        %p503 = pneg %p102
        %p504 = pneg %p126
        %p505 = pneg %p123
        %p506 = pneg %p147
        %p507 = pneg %p144
        %p508 = pneg %p168
        %p509 = pneg %p165
        %p510 = pneg %p189
        %p511 = pneg %p186
        %p512 = pneg %p210
        %p513 = pneg %p207
        %p514 = pneg %p231
        %p515 = pneg %p228
        %p516 = pneg %p257
        %p517 = pneg %p254
        %s518 = sand.u32 %s244, 1
        %s519 = scalar_lea.sflag [#allocation4], %s518
        %s520 = sand.u32 %s244, 1
        %s521 = smul.addr %s520, 8
        %s522 = scalar_lea.vmem [#allocation17], %s521
        %p523 = pneg %p283
        %p524 = pneg %p280
        %s525 = sand.u32 %s270, 1
        %s526 = scalar_lea.sflag [#allocation19], %s525
        %s527 = sand.u32 %s270, 1
        %s528 = smul.addr %s527, 64
        %s529 = scalar_lea.vmem [#allocation18], %s528
        %v531 = vld [vmem:[%s455] sm:$0xf]
        %v532 = vld [vmem:[%s455 + $0x4] sm:$0xf]
        %v533 = vld [vmem:[%s455 + $0x8] sm:$0xf]
        %v534 = vld [vmem:[%s455 + $0xc] sm:$0xf]
        %v535 = vld [vmem:[%s455 + $0x10] sm:$0xf]
        %v536 = vld [vmem:[%s455 + $0x14] sm:$0xf]
        %v537 = vld [vmem:[%s455 + $0x18] sm:$0xf]
        %v538 = vld [vmem:[%s455 + $0x1c] sm:$0xf]
        %v539 = vld [vmem:[%s446] sm:$0xf]
        %v540 = vld [vmem:[%s446 + $0x4] sm:$0xf]
        %v541 = vld [vmem:[%s446 + $0x8] sm:$0xf]
        %v542 = vld [vmem:[%s446 + $0xc] sm:$0xf]
        %v543 = vld [vmem:[%s446 + $0x10] sm:$0xf]
        %v544 = vld [vmem:[%s446 + $0x14] sm:$0xf]
        %v545 = vld [vmem:[%s446 + $0x18] sm:$0xf]
        %v546 = vld [vmem:[%s446 + $0x1c] sm:$0xf]
        %v547 = vld [vmem:[#allocation7] sm:$0xf]
        %v548 = vld [vmem:[#allocation7 + $0x4] sm:$0xf]
        %v549 = vld [vmem:[#allocation7 + $0x8] sm:$0xf]
        %v550 = vld [vmem:[#allocation7 + $0xc] sm:$0xf]
        %v551 = vld [vmem:[#allocation7 + $0x10] sm:$0xf]
        %v552 = vld [vmem:[#allocation7 + $0x14] sm:$0xf]
        %v553 = vld [vmem:[#allocation7 + $0x18] sm:$0xf]
        %v554 = vld [vmem:[#allocation7 + $0x1c] sm:$0xf]
        %v555 = vld [vmem:[#allocation7 + $0x20] sm:$0xf]
        %v556 = vld [vmem:[#allocation7 + $0x24] sm:$0xf]
        %v557 = vld [vmem:[#allocation7 + $0x28] sm:$0xf]
        %v558 = vld [vmem:[#allocation7 + $0x2c] sm:$0xf]
        %v559 = vld [vmem:[#allocation7 + $0x30] sm:$0xf]
        %v560 = vld [vmem:[#allocation7 + $0x34] sm:$0xf]
        %v561 = vld [vmem:[#allocation7 + $0x38] sm:$0xf]
        %v562 = vld [vmem:[#allocation7 + $0x3c] sm:$0xf]
        %v563 = vld [vmem:[#allocation10] sm:$0x1]
        %v564 = vlaneseq
        %v565 = vshrl.u32 %v564, 7
        %v566 = vsub.s32 0, %v565
        %v567 = vrot.slane %v563, %v566
        %v576 = vunpack.c.l.b16 %v539
        %v577 = vunpack.c.l.b16 %v540
        %v578 = vunpack.c.l.b16 %v541
        %v579 = vunpack.c.l.b16 %v542
        %v580 = vunpack.c.l.b16 %v543
        %v581 = vunpack.c.l.b16 %v544
        %v582 = vunpack.c.l.b16 %v545
        %v583 = vunpack.c.l.b16 %v546
        %v584 = vpack.c.b16 %v577, %v576
        %v585 = vpack.c.b16 %v579, %v578
        %v586 = vpack.c.b16 %v581, %v580
        %v587 = vpack.c.b16 %v583, %v582
        %v608 = vunpack.c.l.b16 %v547
        %v609 = vunpack.c.l.b16 %v548
        %v610 = vunpack.c.l.b16 %v549
        %v611 = vunpack.c.l.b16 %v550
        %v612 = vunpack.c.l.b16 %v551
        %v613 = vunpack.c.l.b16 %v552
        %v614 = vunpack.c.l.b16 %v553
        %v615 = vunpack.c.l.b16 %v554
        %v616 = vunpack.c.l.b16 %v555
        %v617 = vunpack.c.l.b16 %v556
        %v618 = vunpack.c.l.b16 %v557
        %v619 = vunpack.c.l.b16 %v558
        %v620 = vunpack.c.l.b16 %v559
        %v621 = vunpack.c.l.b16 %v560
        %v622 = vunpack.c.l.b16 %v561
        %v623 = vunpack.c.l.b16 %v562
        %v624 = vpack.c.b16 %v609, %v608
        %v625 = vpack.c.b16 %v611, %v610
        %v626 = vpack.c.b16 %v613, %v612
        %v627 = vpack.c.b16 %v615, %v614
        %v628 = vpack.c.b16 %v617, %v616
        %v629 = vpack.c.b16 %v619, %v618
        %v630 = vpack.c.b16 %v621, %v620
        %v631 = vpack.c.b16 %v623, %v622
        %640 = vmatprep.subr.bf16.mxu0 0
        %641 = vmatpush1.bf16.msra.mxu0 %v624
        %642 = vmatprep.subr.bf16.mxu0 0
        %643 = vmatpush1.bf16.msra.mxu0 %v625
        %644 = vmatprep.subr.bf16.mxu0 0
        %645 = vmatpush1.bf16.msra.mxu0 %v626
        %646 = vmatprep.subr.bf16.mxu0 0
        %647 = vmatpush1.bf16.msra.mxu0 %v627
        %648 = vmatprep.subr.bf16.mxu0 0
        %649 = vmatpush1.bf16.msra.mxu0 %v628
        %650 = vmatprep.subr.bf16.mxu0 0
        %651 = vmatpush1.bf16.msra.mxu0 %v629
        %652 = vmatprep.subr.bf16.mxu0 0
        %653 = vmatpush1.bf16.msra.mxu0 %v630
        %654 = vmatprep.subr.bf16.mxu0 0
        %655 = vmatpush1.bf16.msra.mxu0 %v631
        %656 = vmatprep.subr.bf16.mxu0 0
        %657 = vmatpush1.bf16.msra.mxu0 0
        %658 = vmatprep.subr.bf16.mxu0 0
        %659 = vmatpush1.bf16.msra.mxu0 0
        %660 = vmatprep.subr.bf16.mxu0 0
        %661 = vmatpush1.bf16.msra.mxu0 0
        %662 = vmatprep.subr.bf16.mxu0 0
        %663 = vmatpush1.bf16.msra.mxu0 0
        %664 = vmatprep.subr.bf16.mxu0 0
        %665 = vmatpush1.bf16.msra.mxu0 0
        %666 = vmatprep.subr.bf16.mxu0 0
        %667 = vmatpush1.bf16.msra.mxu0 0
        %668 = vmatprep.subr.bf16.mxu0 0
        %669 = vmatpush1.bf16.msra.mxu0 0
        %670 = vmatprep.subr.bf16.mxu0 0
        %671 = vmatpush1.bf16.msra.mxu0 0
        %672 = vmatprep.mubr.bf16.mxu0 0
        %673 = vmatmul.mubr.bf16.gmra.mrb[0].mxu0 %v584
        %v674 = vpop.f32.mrb[0].mxu0
        %v675 = vadd.f32 %v567, %v674
        %v676 = vpop.f32.mrb[0].mxu0
        %v677 = vpop.f32.mrb[0].mxu0
        %v678 = vadd.f32 %v567, %v677
        %v679 = vpop.f32.mrb[0].mxu0
        %680 = vmatprep.mubr.bf16.mxu0 0
        %681 = vmatmul.mubr.bf16.gmra.mrb[0].mxu0 %v585
        %v682 = vpop.f32.mrb[0].mxu0
        %v683 = vadd.f32 %v567, %v682
        %v684 = vpop.f32.mrb[0].mxu0
        %v685 = vpop.f32.mrb[0].mxu0
        %v686 = vadd.f32 %v567, %v685
        %v687 = vpop.f32.mrb[0].mxu0
        %688 = vmatprep.mubr.bf16.mxu0 0
        %689 = vmatmul.mubr.bf16.gmra.mrb[0].mxu0 %v586
        %v690 = vpop.f32.mrb[0].mxu0
        %v691 = vadd.f32 %v567, %v690
        %v692 = vpop.f32.mrb[0].mxu0
        %v693 = vpop.f32.mrb[0].mxu0
        %v694 = vadd.f32 %v567, %v693
        %v695 = vpop.f32.mrb[0].mxu0
        %696 = vmatprep.mubr.bf16.mxu0 0
        %697 = vmatmul.mubr.bf16.gmra.mrb[0].mxu0 %v587
        %v698 = vpop.f32.mrb[0].mxu0
        %v699 = vadd.f32 %v567, %v698
        %v700 = vpop.f32.mrb[0].mxu0
        %v701 = vpop.f32.mrb[0].mxu0
        %v702 = vadd.f32 %v567, %v701
        %v703 = vpop.f32.mrb[0].mxu0
        %704 = vdwg.mxu0
        %v705 = vpack.c.bf16 %v678, %v675
        %v706 = vpack.c.bf16 %v686, %v683
        %v707 = vpack.c.bf16 %v694, %v691
        %v708 = vpack.c.bf16 %v702, %v699
        %v717 = vunpack.c.l.b16 %v531
        %v718 = vunpack.c.l.b16 %v532
        %v719 = vunpack.c.l.b16 %v533
        %v720 = vunpack.c.l.b16 %v534
        %v721 = vunpack.c.l.b16 %v535
        %v722 = vunpack.c.l.b16 %v536
        %v723 = vunpack.c.l.b16 %v537
        %v724 = vunpack.c.l.b16 %v538
        %v725 = vpack.c.b16 %v718, %v717
        %v726 = vpack.c.b16 %v720, %v719
        %v727 = vpack.c.b16 %v722, %v721
        %v728 = vpack.c.b16 %v724, %v723
        %vm729 = vcmask 523264
        %v731 = vsel %vm729, %v725, 0
        %v734 = vsel %vm729, %v726, 0
        %v737 = vsel %vm729, %v727, 0
        %v740 = vsel %vm729, %v728, 0
        %742 = vmatprep.subr.bf16.mxu0 0
        %743 = vmatpush1.bf16.msra.mxu0 %v705
        %744 = vmatprep.subr.bf16.mxu0 0
        %745 = vmatpush1.bf16.msra.mxu0 %v706
        %746 = vmatprep.subr.bf16.mxu0 0
        %747 = vmatpush1.bf16.msra.mxu0 %v707
        %748 = vmatprep.subr.bf16.mxu0 0
        %749 = vmatpush1.bf16.msra.mxu0 %v708
        %750 = vmatprep.subr.bf16.mxu0 0
        %751 = vmatpush1.bf16.msra.mxu0 0
        %752 = vmatprep.subr.bf16.mxu0 0
        %753 = vmatpush1.bf16.msra.mxu0 0
        %754 = vmatprep.subr.bf16.mxu0 0
        %755 = vmatpush1.bf16.msra.mxu0 0
        %756 = vmatprep.subr.bf16.mxu0 0
        %757 = vmatpush1.bf16.msra.mxu0 0
        %758 = vmatprep.subr.bf16.mxu0 0
        %759 = vmatpush1.bf16.msra.mxu0 0
        %760 = vmatprep.subr.bf16.mxu0 0
        %761 = vmatpush1.bf16.msra.mxu0 0
        %762 = vmatprep.subr.bf16.mxu0 0
        %763 = vmatpush1.bf16.msra.mxu0 0
        %764 = vmatprep.subr.bf16.mxu0 0
        %765 = vmatpush1.bf16.msra.mxu0 0
        %766 = vmatprep.subr.bf16.mxu0 0
        %767 = vmatpush1.bf16.msra.mxu0 0
        %768 = vmatprep.subr.bf16.mxu0 0
        %769 = vmatpush1.bf16.msra.mxu0 0
        %770 = vmatprep.subr.bf16.mxu0 0
        %771 = vmatpush1.bf16.msra.mxu0 0
        %772 = vmatprep.subr.bf16.mxu0 0
        %773 = vmatpush1.bf16.msra.mxu0 0
        %774 = vmatprep.mubr.bf16.mxu0 0
        %775 = vmatmul.mubr.bf16.gmra.mrb[0].mxu0 %v731
        %v776 = vpop.f32.mrb[0].mxu0
        %v777 = vadd.f32 0.0, %v776
        %v778 = vpop.f32.mrb[0].mxu0
        %v779 = vpop.f32.mrb[0].mxu0
        %v780 = vadd.f32 0.0, %v779
        %v781 = vpop.f32.mrb[0].mxu0
        %782 = vmatprep.mubr.bf16.mxu0 0
        %783 = vmatmul.mubr.bf16.gmra.mrb[0].mxu0 %v734
        %v784 = vpop.f32.mrb[0].mxu0
        %v785 = vadd.f32 0.0, %v784
        %v786 = vpop.f32.mrb[0].mxu0
        %v787 = vpop.f32.mrb[0].mxu0
        %v788 = vadd.f32 0.0, %v787
        %v789 = vpop.f32.mrb[0].mxu0
        %790 = vmatprep.mubr.bf16.mxu0 0
        %791 = vmatmul.mubr.bf16.gmra.mrb[0].mxu0 %v737
        %v792 = vpop.f32.mrb[0].mxu0
        %v793 = vadd.f32 0.0, %v792
        %v794 = vpop.f32.mrb[0].mxu0
        %v795 = vpop.f32.mrb[0].mxu0
        %v796 = vadd.f32 0.0, %v795
        %v797 = vpop.f32.mrb[0].mxu0
        %798 = vmatprep.mubr.bf16.mxu0 0
        %799 = vmatmul.mubr.bf16.gmra.mrb[0].mxu0 %v740
        %v800 = vpop.f32.mrb[0].mxu0
        %v801 = vadd.f32 0.0, %v800
        %v802 = vpop.f32.mrb[0].mxu0
        %v803 = vpop.f32.mrb[0].mxu0
        %v804 = vadd.f32 0.0, %v803
        %v805 = vpop.f32.mrb[0].mxu0
        %806 = vdwg.mxu0
        %v807 = vpack.c.bf16 %v780, %v777
        %v808 = vpack.c.bf16 %v788, %v785
        %v809 = vpack.c.bf16 %v796, %v793
        %v810 = vpack.c.bf16 %v804, %v801
        %v811 = vld [vmem:[#allocation8] sm:$0xf]
        %v812 = vld [vmem:[#allocation8 + $0x4] sm:$0xf]
        %v813 = vld [vmem:[#allocation8 + $0x8] sm:$0xf]
        %v814 = vld [vmem:[#allocation8 + $0xc] sm:$0xf]
        %v815 = vld [vmem:[#allocation8 + $0x10] sm:$0xf]
        %v816 = vld [vmem:[#allocation8 + $0x14] sm:$0xf]
        %v817 = vld [vmem:[#allocation8 + $0x18] sm:$0xf]
        %v818 = vld [vmem:[#allocation8 + $0x1c] sm:$0xf]
        %v819 = vld [vmem:[#allocation8 + $0x20] sm:$0xf]
        %v820 = vld [vmem:[#allocation8 + $0x24] sm:$0xf]
        %v821 = vld [vmem:[#allocation8 + $0x28] sm:$0xf]
        %v822 = vld [vmem:[#allocation8 + $0x2c] sm:$0xf]
        %v823 = vld [vmem:[#allocation8 + $0x30] sm:$0xf]
        %v824 = vld [vmem:[#allocation8 + $0x34] sm:$0xf]
        %v825 = vld [vmem:[#allocation8 + $0x38] sm:$0xf]
        %v826 = vld [vmem:[#allocation8 + $0x3c] sm:$0xf]
        %v827 = vld [vmem:[#allocation8 + $0x40] sm:$0xf]
        %v828 = vld [vmem:[#allocation8 + $0x44] sm:$0xf]
        %v829 = vld [vmem:[#allocation8 + $0x48] sm:$0xf]
        %v830 = vld [vmem:[#allocation8 + $0x4c] sm:$0xf]
        %v831 = vld [vmem:[#allocation8 + $0x50] sm:$0xf]
        %v832 = vld [vmem:[#allocation8 + $0x54] sm:$0xf]
        %v833 = vld [vmem:[#allocation8 + $0x58] sm:$0xf]
        %v834 = vld [vmem:[#allocation8 + $0x5c] sm:$0xf]
        %v835 = vld [vmem:[#allocation8 + $0x60] sm:$0xf]
        %v836 = vld [vmem:[#allocation8 + $0x64] sm:$0xf]
        %v837 = vld [vmem:[#allocation8 + $0x68] sm:$0xf]
        %v838 = vld [vmem:[#allocation8 + $0x6c] sm:$0xf]
        %v839 = vld [vmem:[#allocation8 + $0x70] sm:$0xf]
        %v840 = vld [vmem:[#allocation8 + $0x74] sm:$0xf]
        %v841 = vld [vmem:[#allocation8 + $0x78] sm:$0xf]
        %v842 = vld [vmem:[#allocation8 + $0x7c] sm:$0xf]
        %v859 = vunpack.c.l.b16 %v827
        %v860 = vunpack.c.l.b16 %v828
        %v861 = vunpack.c.l.b16 %v829
        %v862 = vunpack.c.l.b16 %v830
        %v863 = vunpack.c.l.b16 %v831
        %v864 = vunpack.c.l.b16 %v832
        %v865 = vunpack.c.l.b16 %v833
        %v866 = vunpack.c.l.b16 %v834
        %v867 = vunpack.c.l.b16 %v835
        %v868 = vunpack.c.l.b16 %v836
        %v869 = vunpack.c.l.b16 %v837
        %v870 = vunpack.c.l.b16 %v838
        %v871 = vunpack.c.l.b16 %v839
        %v872 = vunpack.c.l.b16 %v840
        %v873 = vunpack.c.l.b16 %v841
        %v874 = vunpack.c.l.b16 %v842
        %v875 = vpack.c.b16 %v860, %v859
        %v876 = vpack.c.b16 %v862, %v861
        %v877 = vpack.c.b16 %v864, %v863
        %v878 = vpack.c.b16 %v866, %v865
        %v879 = vpack.c.b16 %v868, %v867
        %v880 = vpack.c.b16 %v870, %v869
        %v881 = vpack.c.b16 %v872, %v871
        %v882 = vpack.c.b16 %v874, %v873
        %891 = vmatprep.subr.bf16.mxu0 0
        %892 = vmatpush1.bf16.msra.mxu0 %v875
        %893 = vmatprep.subr.bf16.mxu0 0
        %894 = vmatpush1.bf16.msra.mxu0 %v876
        %895 = vmatprep.subr.bf16.mxu0 0
        %896 = vmatpush1.bf16.msra.mxu0 %v877
        %897 = vmatprep.subr.bf16.mxu0 0
        %898 = vmatpush1.bf16.msra.mxu0 %v878
        %899 = vmatprep.subr.bf16.mxu0 0
        %900 = vmatpush1.bf16.msra.mxu0 %v879
        %901 = vmatprep.subr.bf16.mxu0 0
        %902 = vmatpush1.bf16.msra.mxu0 %v880
        %903 = vmatprep.subr.bf16.mxu0 0
        %904 = vmatpush1.bf16.msra.mxu0 %v881
        %905 = vmatprep.subr.bf16.mxu0 0
        %906 = vmatpush1.bf16.msra.mxu0 %v882
        %907 = vmatprep.subr.bf16.mxu0 0
        %908 = vmatpush1.bf16.msra.mxu0 0
        %909 = vmatprep.subr.bf16.mxu0 0
        %910 = vmatpush1.bf16.msra.mxu0 0
        %911 = vmatprep.subr.bf16.mxu0 0
        %912 = vmatpush1.bf16.msra.mxu0 0
        %913 = vmatprep.subr.bf16.mxu0 0
        %914 = vmatpush1.bf16.msra.mxu0 0
        %915 = vmatprep.subr.bf16.mxu0 0
        %916 = vmatpush1.bf16.msra.mxu0 0
        %917 = vmatprep.subr.bf16.mxu0 0
        %918 = vmatpush1.bf16.msra.mxu0 0
        %919 = vmatprep.subr.bf16.mxu0 0
        %920 = vmatpush1.bf16.msra.mxu0 0
        %921 = vmatprep.subr.bf16.mxu0 0
        %922 = vmatpush1.bf16.msra.mxu0 0
        %923 = vmatprep.mubr.bf16.mxu0 0
        %924 = vmatmul.mubr.bf16.gmra.mrb[0].mxu0 %v807
        %v925 = vpop.f32.mrb[0].mxu0
        %v926 = vadd.f32 0.0, %v925
        %v927 = vpop.f32.mrb[0].mxu0
        %v928 = vpop.f32.mrb[0].mxu0
        %v929 = vadd.f32 0.0, %v928
        %v930 = vpop.f32.mrb[0].mxu0
        %931 = vmatprep.mubr.bf16.mxu0 0
        %932 = vmatmul.mubr.bf16.gmra.mrb[0].mxu0 %v808
        %v933 = vpop.f32.mrb[0].mxu0
        %v934 = vadd.f32 0.0, %v933
        %v935 = vpop.f32.mrb[0].mxu0
        %v936 = vpop.f32.mrb[0].mxu0
        %v937 = vadd.f32 0.0, %v936
        %v938 = vpop.f32.mrb[0].mxu0
        %939 = vmatprep.mubr.bf16.mxu0 0
        %940 = vmatmul.mubr.bf16.gmra.mrb[0].mxu0 %v809
        %v941 = vpop.f32.mrb[0].mxu0
        %v942 = vadd.f32 0.0, %v941
        %v943 = vpop.f32.mrb[0].mxu0
        %v944 = vpop.f32.mrb[0].mxu0
        %v945 = vadd.f32 0.0, %v944
        %v946 = vpop.f32.mrb[0].mxu0
        %947 = vmatprep.mubr.bf16.mxu0 0
        %948 = vmatmul.mubr.bf16.gmra.mrb[0].mxu0 %v810
        %v949 = vpop.f32.mrb[0].mxu0
        %v950 = vadd.f32 0.0, %v949
        %v951 = vpop.f32.mrb[0].mxu0
        %v952 = vpop.f32.mrb[0].mxu0
        %v953 = vadd.f32 0.0, %v952
        %v954 = vpop.f32.mrb[0].mxu0
        %955 = vdwg.mxu0
        %v972 = vunpack.c.l.b16 %v811
        %v973 = vunpack.c.l.b16 %v812
        %v974 = vunpack.c.l.b16 %v813
        %v975 = vunpack.c.l.b16 %v814
        %v976 = vunpack.c.l.b16 %v815
        %v977 = vunpack.c.l.b16 %v816
        %v978 = vunpack.c.l.b16 %v817
        %v979 = vunpack.c.l.b16 %v818
        %v980 = vunpack.c.l.b16 %v819
        %v981 = vunpack.c.l.b16 %v820
        %v982 = vunpack.c.l.b16 %v821
        %v983 = vunpack.c.l.b16 %v822
        %v984 = vunpack.c.l.b16 %v823
        %v985 = vunpack.c.l.b16 %v824
        %v986 = vunpack.c.l.b16 %v825
        %v987 = vunpack.c.l.b16 %v826
        %v988 = vpack.c.b16 %v973, %v972
        %v989 = vpack.c.b16 %v975, %v974
        %v990 = vpack.c.b16 %v977, %v976
        %v991 = vpack.c.b16 %v979, %v978
        %v992 = vpack.c.b16 %v981, %v980
        %v993 = vpack.c.b16 %v983, %v982
        %v994 = vpack.c.b16 %v985, %v984
        %v995 = vpack.c.b16 %v987, %v986
        %1004 = vmatprep.subr.bf16.mxu0 0
        %1005 = vmatpush1.bf16.msra.mxu0 %v988
        %1006 = vmatprep.subr.bf16.mxu0 0
        %1007 = vmatpush1.bf16.msra.mxu0 %v989
        %1008 = vmatprep.subr.bf16.mxu0 0
        %1009 = vmatpush1.bf16.msra.mxu0 %v990
        %1010 = vmatprep.subr.bf16.mxu0 0
        %1011 = vmatpush1.bf16.msra.mxu0 %v991
        %1012 = vmatprep.subr.bf16.mxu0 0
        %1013 = vmatpush1.bf16.msra.mxu0 %v992
        %1014 = vmatprep.subr.bf16.mxu0 0
        %1015 = vmatpush1.bf16.msra.mxu0 %v993
        %1016 = vmatprep.subr.bf16.mxu0 0
        %1017 = vmatpush1.bf16.msra.mxu0 %v994
        %1018 = vmatprep.subr.bf16.mxu0 0
        %1019 = vmatpush1.bf16.msra.mxu0 %v995
        %1020 = vmatprep.subr.bf16.mxu0 0
        %1021 = vmatpush1.bf16.msra.mxu0 0
        %1022 = vmatprep.subr.bf16.mxu0 0
        %1023 = vmatpush1.bf16.msra.mxu0 0
        %1024 = vmatprep.subr.bf16.mxu0 0
        %1025 = vmatpush1.bf16.msra.mxu0 0
        %1026 = vmatprep.subr.bf16.mxu0 0
        %1027 = vmatpush1.bf16.msra.mxu0 0
        %1028 = vmatprep.subr.bf16.mxu0 0
        %1029 = vmatpush1.bf16.msra.mxu0 0
        %1030 = vmatprep.subr.bf16.mxu0 0
        %1031 = vmatpush1.bf16.msra.mxu0 0
        %1032 = vmatprep.subr.bf16.mxu0 0
        %1033 = vmatpush1.bf16.msra.mxu0 0
        %1034 = vmatprep.subr.bf16.mxu0 0
        %1035 = vmatpush1.bf16.msra.mxu0 0
        %1036 = vmatprep.mubr.bf16.mxu0 0
        %1037 = vmatmul.mubr.bf16.gmra.mrb[0].mxu0 %v705
        %v1038 = vpop.f32.mrb[0].mxu0
        %v1039 = vadd.f32 %v926, %v1038
        %v1040 = vpop.f32.mrb[0].mxu0
        %v1041 = vpop.f32.mrb[0].mxu0
        %v1042 = vadd.f32 %v929, %v1041
        %v1043 = vpop.f32.mrb[0].mxu0
        %1044 = vmatprep.mubr.bf16.mxu0 0
        %1045 = vmatmul.mubr.bf16.gmra.mrb[0].mxu0 %v706
        %v1046 = vpop.f32.mrb[0].mxu0
        %v1047 = vadd.f32 %v934, %v1046
        %v1048 = vpop.f32.mrb[0].mxu0
        %v1049 = vpop.f32.mrb[0].mxu0
        %v1050 = vadd.f32 %v937, %v1049
        %v1051 = vpop.f32.mrb[0].mxu0
        %1052 = vmatprep.mubr.bf16.mxu0 0
        %1053 = vmatmul.mubr.bf16.gmra.mrb[0].mxu0 %v707
        %v1054 = vpop.f32.mrb[0].mxu0
        %v1055 = vadd.f32 %v942, %v1054
        %v1056 = vpop.f32.mrb[0].mxu0
        %v1057 = vpop.f32.mrb[0].mxu0
        %v1058 = vadd.f32 %v945, %v1057
        %v1059 = vpop.f32.mrb[0].mxu0
        %1060 = vmatprep.mubr.bf16.mxu0 0
        %1061 = vmatmul.mubr.bf16.gmra.mrb[0].mxu0 %v708
        %v1062 = vpop.f32.mrb[0].mxu0
        %v1063 = vadd.f32 %v950, %v1062
        %v1064 = vpop.f32.mrb[0].mxu0
        %v1065 = vpop.f32.mrb[0].mxu0
        %v1066 = vadd.f32 %v953, %v1065
        %v1067 = vpop.f32.mrb[0].mxu0
        %1068 = vdwg.mxu0
        %v1069 = vld [vmem:[#allocation10 + $0x1] sm:$0x1]
        %v1070 = vlaneseq
        %v1071 = vshrl.u32 %v1070, 7
        %v1072 = vsub.s32 0, %v1071
        %v1073 = vrot.slane %v1069, %v1072
        %v1074 = vadd.f32 %v1039, %v1073
        %v1075 = vadd.f32 %v1042, %v1073
        %v1076 = vadd.f32 %v1047, %v1073
        %v1077 = vadd.f32 %v1050, %v1073
        %v1078 = vadd.f32 %v1055, %v1073
        %v1079 = vadd.f32 %v1058, %v1073
        %v1080 = vadd.f32 %v1063, %v1073
        %v1081 = vadd.f32 %v1066, %v1073
        %v1082 = vmul.f32 %v1074, %v1074
        %v1083 = vmul.f32 %v1075, %v1075
        %v1084 = vmul.f32 %v1076, %v1076
        %v1085 = vmul.f32 %v1077, %v1077
        %v1086 = vmul.f32 %v1078, %v1078
        %v1087 = vmul.f32 %v1079, %v1079
        %v1088 = vmul.f32 %v1080, %v1080
        %v1089 = vmul.f32 %v1081, %v1081
        %1090 = vadd.xlane.f32.xlu0 %v1082
        %v1091 = vpop.xlane.xlu0 %1090
        %1092 = vadd.xlane.f32.xlu0 %v1083
        %v1093 = vpop.xlane.xlu0 %1092
        %1094 = vadd.xlane.f32.xlu0 %v1084
        %v1095 = vpop.xlane.xlu0 %1094
        %1096 = vadd.xlane.f32.xlu0 %v1085
        %v1097 = vpop.xlane.xlu0 %1096
        %1098 = vadd.xlane.f32.xlu0 %v1086
        %v1099 = vpop.xlane.xlu0 %1098
        %1100 = vadd.xlane.f32.xlu0 %v1087
        %v1101 = vpop.xlane.xlu0 %1100
        %1102 = vadd.xlane.f32.xlu0 %v1088
        %v1103 = vpop.xlane.xlu0 %1102
        %1104 = vadd.xlane.f32.xlu0 %v1089
        %v1105 = vpop.xlane.xlu0 %1104
        %v1106 = vmax.f32 %v1091, 1e-24
        %v1107 = vmax.f32 %v1093, 1e-24
        %v1108 = vmax.f32 %v1095, 1e-24
        %v1109 = vmax.f32 %v1097, 1e-24
        %v1110 = vmax.f32 %v1099, 1e-24
        %v1111 = vmax.f32 %v1101, 1e-24
        %v1112 = vmax.f32 %v1103, 1e-24
        %v1113 = vmax.f32 %v1105, 1e-24
        %v1114 = vrsqrt.pop %v1106
        %v1115 = vrsqrt.pop %v1107
        %v1116 = vrsqrt.pop %v1108
        %v1117 = vrsqrt.pop %v1109
        %v1118 = vrsqrt.pop %v1110
        %v1119 = vrsqrt.pop %v1111
        %v1120 = vrsqrt.pop %v1112
        %v1121 = vrsqrt.pop %v1113
        %v1122 = vmul.f32 %v1074, %v1114
        %v1123 = vmul.f32 %v1075, %v1115
        %v1124 = vmul.f32 %v1076, %v1116
        %v1125 = vmul.f32 %v1077, %v1117
        %v1126 = vmul.f32 %v1078, %v1118
        %v1127 = vmul.f32 %v1079, %v1119
        %v1128 = vmul.f32 %v1080, %v1120
        %v1129 = vmul.f32 %v1081, %v1121
        %v1130 = vmax.f32 %v1122, 0.0
        %v1131 = vmax.f32 %v1123, 0.0
        %v1132 = vmax.f32 %v1124, 0.0
        %v1133 = vmax.f32 %v1125, 0.0
        %v1134 = vmax.f32 %v1126, 0.0
        %v1135 = vmax.f32 %v1127, 0.0
        %v1136 = vmax.f32 %v1128, 0.0
        %v1137 = vmax.f32 %v1129, 0.0
        %v1138 = vld [vmem:[#allocation10 + $0x5] sm:$0x1]
        %v1139 = vlaneseq
        %v1140 = vshrl.u32 %v1139, 7
        %v1141 = vsub.s32 0, %v1140
        %v1142 = vrot.slane %v1138, %v1141
        %v1143 = vmul.f32 %v1130, %v1142
        %v1144 = vmul.f32 %v1131, %v1142
        %v1145 = vmul.f32 %v1132, %v1142
        %v1146 = vmul.f32 %v1133, %v1142
        %v1147 = vmul.f32 %v1134, %v1142
        %v1148 = vmul.f32 %v1135, %v1142
        %v1149 = vmul.f32 %v1136, %v1142
        %v1150 = vmul.f32 %v1137, %v1142
        %v1151 = vld [vmem:[#allocation10 + $0x9] sm:$0x1]
        %v1152 = vlaneseq
        %v1153 = vshrl.u32 %v1152, 7
        %v1154 = vsub.s32 0, %v1153
        %v1155 = vrot.slane %v1151, %v1154
        %v1156 = vadd.f32 %v1143, %v1155
        %v1157 = vadd.f32 %v1144, %v1155
        %v1158 = vadd.f32 %v1145, %v1155
        %v1159 = vadd.f32 %v1146, %v1155
        %v1160 = vadd.f32 %v1147, %v1155
        %v1161 = vadd.f32 %v1148, %v1155
        %v1162 = vadd.f32 %v1149, %v1155
        %v1163 = vadd.f32 %v1150, %v1155
        %v1164 = vadd.f32 %v1156, %v675
        %v1165 = vadd.f32 %v1157, %v678
        %v1166 = vadd.f32 %v1158, %v683
        %v1167 = vadd.f32 %v1159, %v686
        %v1168 = vadd.f32 %v1160, %v691
        %v1169 = vadd.f32 %v1161, %v694
        %v1170 = vadd.f32 %v1162, %v699
        %v1171 = vadd.f32 %v1163, %v702
        %v1172 = vpack.c.bf16 %v1165, %v1164
        %v1173 = vpack.c.bf16 %v1167, %v1166
        %v1174 = vpack.c.bf16 %v1169, %v1168
        %v1175 = vpack.c.bf16 %v1171, %v1170
        %1176 = vmatprep.subr.bf16.mxu0 0
        %1177 = vmatpush1.bf16.msra.mxu0 %v1172
        %1178 = vmatprep.subr.bf16.mxu0 0
        %1179 = vmatpush1.bf16.msra.mxu0 %v1173
        %1180 = vmatprep.subr.bf16.mxu0 0
        %1181 = vmatpush1.bf16.msra.mxu0 %v1174
        %1182 = vmatprep.subr.bf16.mxu0 0
        %1183 = vmatpush1.bf16.msra.mxu0 %v1175
        %1184 = vmatprep.subr.bf16.mxu0 0
        %1185 = vmatpush1.bf16.msra.mxu0 0
        %1186 = vmatprep.subr.bf16.mxu0 0
        %1187 = vmatpush1.bf16.msra.mxu0 0
        %1188 = vmatprep.subr.bf16.mxu0 0
        %1189 = vmatpush1.bf16.msra.mxu0 0
        %1190 = vmatprep.subr.bf16.mxu0 0
        %1191 = vmatpush1.bf16.msra.mxu0 0
        %1192 = vmatprep.subr.bf16.mxu0 0
        %1193 = vmatpush1.bf16.msra.mxu0 0
        %1194 = vmatprep.subr.bf16.mxu0 0
        %1195 = vmatpush1.bf16.msra.mxu0 0
        %1196 = vmatprep.subr.bf16.mxu0 0
        %1197 = vmatpush1.bf16.msra.mxu0 0
        %1198 = vmatprep.subr.bf16.mxu0 0
        %1199 = vmatpush1.bf16.msra.mxu0 0
        %1200 = vmatprep.subr.bf16.mxu0 0
        %1201 = vmatpush1.bf16.msra.mxu0 0
        %1202 = vmatprep.subr.bf16.mxu0 0
        %1203 = vmatpush1.bf16.msra.mxu0 0
        %1204 = vmatprep.subr.bf16.mxu0 0
        %1205 = vmatpush1.bf16.msra.mxu0 0
        %1206 = vmatprep.subr.bf16.mxu0 0
        %1207 = vmatpush1.bf16.msra.mxu0 0
        %1208 = vmatprep.mubr.bf16.mxu0 0
        %1209 = vmatmul.mubr.bf16.gmra.mrb[0].mxu0 %v731
        %v1210 = vpop.f32.mrb[0].mxu0
        %v1211 = vadd.f32 0.0, %v1210
        %v1212 = vpop.f32.mrb[0].mxu0
        %v1213 = vpop.f32.mrb[0].mxu0
        %v1214 = vadd.f32 0.0, %v1213
        %v1215 = vpop.f32.mrb[0].mxu0
        %1216 = vmatprep.mubr.bf16.mxu0 0
        %1217 = vmatmul.mubr.bf16.gmra.mrb[0].mxu0 %v734
        %v1218 = vpop.f32.mrb[0].mxu0
        %v1219 = vadd.f32 0.0, %v1218
        %v1220 = vpop.f32.mrb[0].mxu0
        %v1221 = vpop.f32.mrb[0].mxu0
        %v1222 = vadd.f32 0.0, %v1221
        %v1223 = vpop.f32.mrb[0].mxu0
        %1224 = vmatprep.mubr.bf16.mxu0 0
        %1225 = vmatmul.mubr.bf16.gmra.mrb[0].mxu0 %v737
        %v1226 = vpop.f32.mrb[0].mxu0
        %v1227 = vadd.f32 0.0, %v1226
        %v1228 = vpop.f32.mrb[0].mxu0
        %v1229 = vpop.f32.mrb[0].mxu0
        %v1230 = vadd.f32 0.0, %v1229
        %v1231 = vpop.f32.mrb[0].mxu0
        %1232 = vmatprep.mubr.bf16.mxu0 0
        %1233 = vmatmul.mubr.bf16.gmra.mrb[0].mxu0 %v740
        %v1234 = vpop.f32.mrb[0].mxu0
        %v1235 = vadd.f32 0.0, %v1234
        %v1236 = vpop.f32.mrb[0].mxu0
        %v1237 = vpop.f32.mrb[0].mxu0
        %v1238 = vadd.f32 0.0, %v1237
        %v1239 = vpop.f32.mrb[0].mxu0
        %1240 = vdwg.mxu0
        %v1241 = vpack.c.bf16 %v1214, %v1211
        %v1242 = vpack.c.bf16 %v1222, %v1219
        %v1243 = vpack.c.bf16 %v1230, %v1227
        %v1244 = vpack.c.bf16 %v1238, %v1235
        %s1245 = scalar_lea.vmem [#allocation8], 128
        %v1246 = vld [vmem:[%s1245] sm:$0xf]
        %v1247 = vld [vmem:[%s1245 + $0x4] sm:$0xf]
        %v1248 = vld [vmem:[%s1245 + $0x8] sm:$0xf]
        %v1249 = vld [vmem:[%s1245 + $0xc] sm:$0xf]
        %v1250 = vld [vmem:[%s1245 + $0x10] sm:$0xf]
        %v1251 = vld [vmem:[%s1245 + $0x14] sm:$0xf]
        %v1252 = vld [vmem:[%s1245 + $0x18] sm:$0xf]
        %v1253 = vld [vmem:[%s1245 + $0x1c] sm:$0xf]
        %v1254 = vld [vmem:[%s1245 + $0x20] sm:$0xf]
        %v1255 = vld [vmem:[%s1245 + $0x24] sm:$0xf]
        %v1256 = vld [vmem:[%s1245 + $0x28] sm:$0xf]
        %v1257 = vld [vmem:[%s1245 + $0x2c] sm:$0xf]
        %v1258 = vld [vmem:[%s1245 + $0x30] sm:$0xf]
        %v1259 = vld [vmem:[%s1245 + $0x34] sm:$0xf]
        %v1260 = vld [vmem:[%s1245 + $0x38] sm:$0xf]
        %v1261 = vld [vmem:[%s1245 + $0x3c] sm:$0xf]
        %v1262 = vld [vmem:[%s1245 + $0x40] sm:$0xf]
        %v1263 = vld [vmem:[%s1245 + $0x44] sm:$0xf]
        %v1264 = vld [vmem:[%s1245 + $0x48] sm:$0xf]
        %v1265 = vld [vmem:[%s1245 + $0x4c] sm:$0xf]
        %v1266 = vld [vmem:[%s1245 + $0x50] sm:$0xf]
        %v1267 = vld [vmem:[%s1245 + $0x54] sm:$0xf]
        %v1268 = vld [vmem:[%s1245 + $0x58] sm:$0xf]
        %v1269 = vld [vmem:[%s1245 + $0x5c] sm:$0xf]
        %v1270 = vld [vmem:[%s1245 + $0x60] sm:$0xf]
        %v1271 = vld [vmem:[%s1245 + $0x64] sm:$0xf]
        %v1272 = vld [vmem:[%s1245 + $0x68] sm:$0xf]
        %v1273 = vld [vmem:[%s1245 + $0x6c] sm:$0xf]
        %v1274 = vld [vmem:[%s1245 + $0x70] sm:$0xf]
        %v1275 = vld [vmem:[%s1245 + $0x74] sm:$0xf]
        %v1276 = vld [vmem:[%s1245 + $0x78] sm:$0xf]
        %v1277 = vld [vmem:[%s1245 + $0x7c] sm:$0xf]
        %v1294 = vunpack.c.l.b16 %v1262
        %v1295 = vunpack.c.l.b16 %v1263
        %v1296 = vunpack.c.l.b16 %v1264
        %v1297 = vunpack.c.l.b16 %v1265
        %v1298 = vunpack.c.l.b16 %v1266
        %v1299 = vunpack.c.l.b16 %v1267
        %v1300 = vunpack.c.l.b16 %v1268
        %v1301 = vunpack.c.l.b16 %v1269
        %v1302 = vunpack.c.l.b16 %v1270
        %v1303 = vunpack.c.l.b16 %v1271
        %v1304 = vunpack.c.l.b16 %v1272
        %v1305 = vunpack.c.l.b16 %v1273
        %v1306 = vunpack.c.l.b16 %v1274
        %v1307 = vunpack.c.l.b16 %v1275
        %v1308 = vunpack.c.l.b16 %v1276
        %v1309 = vunpack.c.l.b16 %v1277
        %v1310 = vpack.c.b16 %v1295, %v1294
        %v1311 = vpack.c.b16 %v1297, %v1296
        %v1312 = vpack.c.b16 %v1299, %v1298
        %v1313 = vpack.c.b16 %v1301, %v1300
        %v1314 = vpack.c.b16 %v1303, %v1302
        %v1315 = vpack.c.b16 %v1305, %v1304
        %v1316 = vpack.c.b16 %v1307, %v1306
        %v1317 = vpack.c.b16 %v1309, %v1308
        %1326 = vmatprep.subr.bf16.mxu0 0
        %1327 = vmatpush1.bf16.msra.mxu0 %v1310
        %1328 = vmatprep.subr.bf16.mxu0 0
        %1329 = vmatpush1.bf16.msra.mxu0 %v1311
        %1330 = vmatprep.subr.bf16.mxu0 0
        %1331 = vmatpush1.bf16.msra.mxu0 %v1312
        %1332 = vmatprep.subr.bf16.mxu0 0
        %1333 = vmatpush1.bf16.msra.mxu0 %v1313
        %1334 = vmatprep.subr.bf16.mxu0 0
        %1335 = vmatpush1.bf16.msra.mxu0 %v1314
        %1336 = vmatprep.subr.bf16.mxu0 0
        %1337 = vmatpush1.bf16.msra.mxu0 %v1315
        %1338 = vmatprep.subr.bf16.mxu0 0
        %1339 = vmatpush1.bf16.msra.mxu0 %v1316
        %1340 = vmatprep.subr.bf16.mxu0 0
        %1341 = vmatpush1.bf16.msra.mxu0 %v1317
        %1342 = vmatprep.subr.bf16.mxu0 0
        %1343 = vmatpush1.bf16.msra.mxu0 0
        %1344 = vmatprep.subr.bf16.mxu0 0
        %1345 = vmatpush1.bf16.msra.mxu0 0
        %1346 = vmatprep.subr.bf16.mxu0 0
        %1347 = vmatpush1.bf16.msra.mxu0 0
        %1348 = vmatprep.subr.bf16.mxu0 0
        %1349 = vmatpush1.bf16.msra.mxu0 0
        %1350 = vmatprep.subr.bf16.mxu0 0
        %1351 = vmatpush1.bf16.msra.mxu0 0
        %1352 = vmatprep.subr.bf16.mxu0 0
        %1353 = vmatpush1.bf16.msra.mxu0 0
        %1354 = vmatprep.subr.bf16.mxu0 0
        %1355 = vmatpush1.bf16.msra.mxu0 0
        %1356 = vmatprep.subr.bf16.mxu0 0
        %1357 = vmatpush1.bf16.msra.mxu0 0
        %1358 = vmatprep.mubr.bf16.mxu0 0
        %1359 = vmatmul.mubr.bf16.gmra.mrb[0].mxu0 %v1241
        %v1360 = vpop.f32.mrb[0].mxu0
        %v1361 = vadd.f32 0.0, %v1360
        %v1362 = vpop.f32.mrb[0].mxu0
        %v1363 = vpop.f32.mrb[0].mxu0
        %v1364 = vadd.f32 0.0, %v1363
        %v1365 = vpop.f32.mrb[0].mxu0
        %1366 = vmatprep.mubr.bf16.mxu0 0
        %1367 = vmatmul.mubr.bf16.gmra.mrb[0].mxu0 %v1242
        %v1368 = vpop.f32.mrb[0].mxu0
        %v1369 = vadd.f32 0.0, %v1368
        %v1370 = vpop.f32.mrb[0].mxu0
        %v1371 = vpop.f32.mrb[0].mxu0
        %v1372 = vadd.f32 0.0, %v1371
        %v1373 = vpop.f32.mrb[0].mxu0
        %1374 = vmatprep.mubr.bf16.mxu0 0
        %1375 = vmatmul.mubr.bf16.gmra.mrb[0].mxu0 %v1243
        %v1376 = vpop.f32.mrb[0].mxu0
        %v1377 = vadd.f32 0.0, %v1376
        %v1378 = vpop.f32.mrb[0].mxu0
        %v1379 = vpop.f32.mrb[0].mxu0
        %v1380 = vadd.f32 0.0, %v1379
        %v1381 = vpop.f32.mrb[0].mxu0
        %1382 = vmatprep.mubr.bf16.mxu0 0
        %1383 = vmatmul.mubr.bf16.gmra.mrb[0].mxu0 %v1244
        %v1384 = vpop.f32.mrb[0].mxu0
        %v1385 = vadd.f32 0.0, %v1384
        %v1386 = vpop.f32.mrb[0].mxu0
        %v1387 = vpop.f32.mrb[0].mxu0
        %v1388 = vadd.f32 0.0, %v1387
        %v1389 = vpop.f32.mrb[0].mxu0
        %1390 = vdwg.mxu0
        %v1407 = vunpack.c.l.b16 %v1246
        %v1408 = vunpack.c.l.b16 %v1247
        %v1409 = vunpack.c.l.b16 %v1248
        %v1410 = vunpack.c.l.b16 %v1249
        %v1411 = vunpack.c.l.b16 %v1250
        %v1412 = vunpack.c.l.b16 %v1251
        %v1413 = vunpack.c.l.b16 %v1252
        %v1414 = vunpack.c.l.b16 %v1253
        %v1415 = vunpack.c.l.b16 %v1254
        %v1416 = vunpack.c.l.b16 %v1255
        %v1417 = vunpack.c.l.b16 %v1256
        %v1418 = vunpack.c.l.b16 %v1257
        %v1419 = vunpack.c.l.b16 %v1258
        %v1420 = vunpack.c.l.b16 %v1259
        %v1421 = vunpack.c.l.b16 %v1260
        %v1422 = vunpack.c.l.b16 %v1261
        %v1423 = vpack.c.b16 %v1408, %v1407
        %v1424 = vpack.c.b16 %v1410, %v1409
        %v1425 = vpack.c.b16 %v1412, %v1411
        %v1426 = vpack.c.b16 %v1414, %v1413
        %v1427 = vpack.c.b16 %v1416, %v1415
        %v1428 = vpack.c.b16 %v1418, %v1417
        %v1429 = vpack.c.b16 %v1420, %v1419
        %v1430 = vpack.c.b16 %v1422, %v1421
        %1439 = vmatprep.subr.bf16.mxu0 0
        %1440 = vmatpush1.bf16.msra.mxu0 %v1423
        %1441 = vmatprep.subr.bf16.mxu0 0
        %1442 = vmatpush1.bf16.msra.mxu0 %v1424
        %1443 = vmatprep.subr.bf16.mxu0 0
        %1444 = vmatpush1.bf16.msra.mxu0 %v1425
        %1445 = vmatprep.subr.bf16.mxu0 0
        %1446 = vmatpush1.bf16.msra.mxu0 %v1426
        %1447 = vmatprep.subr.bf16.mxu0 0
        %1448 = vmatpush1.bf16.msra.mxu0 %v1427
        %1449 = vmatprep.subr.bf16.mxu0 0
        %1450 = vmatpush1.bf16.msra.mxu0 %v1428
        %1451 = vmatprep.subr.bf16.mxu0 0
        %1452 = vmatpush1.bf16.msra.mxu0 %v1429
        %1453 = vmatprep.subr.bf16.mxu0 0
        %1454 = vmatpush1.bf16.msra.mxu0 %v1430
        %1455 = vmatprep.subr.bf16.mxu0 0
        %1456 = vmatpush1.bf16.msra.mxu0 0
        %1457 = vmatprep.subr.bf16.mxu0 0
        %1458 = vmatpush1.bf16.msra.mxu0 0
        %1459 = vmatprep.subr.bf16.mxu0 0
        %1460 = vmatpush1.bf16.msra.mxu0 0
        %1461 = vmatprep.subr.bf16.mxu0 0
        %1462 = vmatpush1.bf16.msra.mxu0 0
        %1463 = vmatprep.subr.bf16.mxu0 0
        %1464 = vmatpush1.bf16.msra.mxu0 0
        %1465 = vmatprep.subr.bf16.mxu0 0
        %1466 = vmatpush1.bf16.msra.mxu0 0
        %1467 = vmatprep.subr.bf16.mxu0 0
        %1468 = vmatpush1.bf16.msra.mxu0 0
        %1469 = vmatprep.subr.bf16.mxu0 0
        %1470 = vmatpush1.bf16.msra.mxu0 0
        %1471 = vmatprep.mubr.bf16.mxu0 0
        %1472 = vmatmul.mubr.bf16.gmra.mrb[0].mxu0 %v1172
        %v1473 = vpop.f32.mrb[0].mxu0
        %v1474 = vadd.f32 %v1361, %v1473
        %v1475 = vpop.f32.mrb[0].mxu0
        %v1476 = vpop.f32.mrb[0].mxu0
        %v1477 = vadd.f32 %v1364, %v1476
        %v1478 = vpop.f32.mrb[0].mxu0
        %1479 = vmatprep.mubr.bf16.mxu0 0
        %1480 = vmatmul.mubr.bf16.gmra.mrb[0].mxu0 %v1173
        %v1481 = vpop.f32.mrb[0].mxu0
        %v1482 = vadd.f32 %v1369, %v1481
        %v1483 = vpop.f32.mrb[0].mxu0
        %v1484 = vpop.f32.mrb[0].mxu0
        %v1485 = vadd.f32 %v1372, %v1484
        %v1486 = vpop.f32.mrb[0].mxu0
        %1487 = vmatprep.mubr.bf16.mxu0 0
        %1488 = vmatmul.mubr.bf16.gmra.mrb[0].mxu0 %v1174
        %v1489 = vpop.f32.mrb[0].mxu0
        %v1490 = vadd.f32 %v1377, %v1489
        %v1491 = vpop.f32.mrb[0].mxu0
        %v1492 = vpop.f32.mrb[0].mxu0
        %v1493 = vadd.f32 %v1380, %v1492
        %v1494 = vpop.f32.mrb[0].mxu0
        %1495 = vmatprep.mubr.bf16.mxu0 0
        %1496 = vmatmul.mubr.bf16.gmra.mrb[0].mxu0 %v1175
        %v1497 = vpop.f32.mrb[0].mxu0
        %v1498 = vadd.f32 %v1385, %v1497
        %v1499 = vpop.f32.mrb[0].mxu0
        %v1500 = vpop.f32.mrb[0].mxu0
        %v1501 = vadd.f32 %v1388, %v1500
        %v1502 = vpop.f32.mrb[0].mxu0
        %1503 = vdwg.mxu0
        %v1504 = vld [vmem:[#allocation10 + $0x2] sm:$0x1]
        %v1505 = vlaneseq
        %v1506 = vshrl.u32 %v1505, 7
        %v1507 = vsub.s32 0, %v1506
        %v1508 = vrot.slane %v1504, %v1507
        %v1509 = vadd.f32 %v1474, %v1508
        %v1510 = vadd.f32 %v1477, %v1508
        %v1511 = vadd.f32 %v1482, %v1508
        %v1512 = vadd.f32 %v1485, %v1508
        %v1513 = vadd.f32 %v1490, %v1508
        %v1514 = vadd.f32 %v1493, %v1508
        %v1515 = vadd.f32 %v1498, %v1508
        %v1516 = vadd.f32 %v1501, %v1508
        %v1517 = vmul.f32 %v1509, %v1509
        %v1518 = vmul.f32 %v1510, %v1510
        %v1519 = vmul.f32 %v1511, %v1511
        %v1520 = vmul.f32 %v1512, %v1512
        %v1521 = vmul.f32 %v1513, %v1513
        %v1522 = vmul.f32 %v1514, %v1514
        %v1523 = vmul.f32 %v1515, %v1515
        %v1524 = vmul.f32 %v1516, %v1516
        %1525 = vadd.xlane.f32.xlu0 %v1517
        %v1526 = vpop.xlane.xlu0 %1525
        %1527 = vadd.xlane.f32.xlu0 %v1518
        %v1528 = vpop.xlane.xlu0 %1527
        %1529 = vadd.xlane.f32.xlu0 %v1519
        %v1530 = vpop.xlane.xlu0 %1529
        %1531 = vadd.xlane.f32.xlu0 %v1520
        %v1532 = vpop.xlane.xlu0 %1531
        %1533 = vadd.xlane.f32.xlu0 %v1521
        %v1534 = vpop.xlane.xlu0 %1533
        %1535 = vadd.xlane.f32.xlu0 %v1522
        %v1536 = vpop.xlane.xlu0 %1535
        %1537 = vadd.xlane.f32.xlu0 %v1523
        %v1538 = vpop.xlane.xlu0 %1537
        %1539 = vadd.xlane.f32.xlu0 %v1524
        %v1540 = vpop.xlane.xlu0 %1539
        %v1541 = vmax.f32 %v1526, 1e-24
        %v1542 = vmax.f32 %v1528, 1e-24
        %v1543 = vmax.f32 %v1530, 1e-24
        %v1544 = vmax.f32 %v1532, 1e-24
        %v1545 = vmax.f32 %v1534, 1e-24
        %v1546 = vmax.f32 %v1536, 1e-24
        %v1547 = vmax.f32 %v1538, 1e-24
        %v1548 = vmax.f32 %v1540, 1e-24
        %v1549 = vrsqrt.pop %v1541
        %v1550 = vrsqrt.pop %v1542
        %v1551 = vrsqrt.pop %v1543
        %v1552 = vrsqrt.pop %v1544
        %v1553 = vrsqrt.pop %v1545
        %v1554 = vrsqrt.pop %v1546
        %v1555 = vrsqrt.pop %v1547
        %v1556 = vrsqrt.pop %v1548
        %v1557 = vmul.f32 %v1509, %v1549
        %v1558 = vmul.f32 %v1510, %v1550
        %v1559 = vmul.f32 %v1511, %v1551
        %v1560 = vmul.f32 %v1512, %v1552
        %v1561 = vmul.f32 %v1513, %v1553
        %v1562 = vmul.f32 %v1514, %v1554
        %v1563 = vmul.f32 %v1515, %v1555
        %v1564 = vmul.f32 %v1516, %v1556
        %v1565 = vmax.f32 %v1557, 0.0
        %v1566 = vmax.f32 %v1558, 0.0
        %v1567 = vmax.f32 %v1559, 0.0
        %v1568 = vmax.f32 %v1560, 0.0
        %v1569 = vmax.f32 %v1561, 0.0
        %v1570 = vmax.f32 %v1562, 0.0
        %v1571 = vmax.f32 %v1563, 0.0
        %v1572 = vmax.f32 %v1564, 0.0
        %v1573 = vld [vmem:[#allocation10 + $0x6] sm:$0x1]
        %v1574 = vlaneseq
        %v1575 = vshrl.u32 %v1574, 7
        %v1576 = vsub.s32 0, %v1575
        %v1577 = vrot.slane %v1573, %v1576
        %v1578 = vmul.f32 %v1565, %v1577
        %v1579 = vmul.f32 %v1566, %v1577
        %v1580 = vmul.f32 %v1567, %v1577
        %v1581 = vmul.f32 %v1568, %v1577
        %v1582 = vmul.f32 %v1569, %v1577
        %v1583 = vmul.f32 %v1570, %v1577
        %v1584 = vmul.f32 %v1571, %v1577
        %v1585 = vmul.f32 %v1572, %v1577
        %v1586 = vld [vmem:[#allocation10 + $0xa] sm:$0x1]
        %v1587 = vlaneseq
        %v1588 = vshrl.u32 %v1587, 7
        %v1589 = vsub.s32 0, %v1588
        %v1590 = vrot.slane %v1586, %v1589
        %v1591 = vadd.f32 %v1578, %v1590
        %v1592 = vadd.f32 %v1579, %v1590
        %v1593 = vadd.f32 %v1580, %v1590
        %v1594 = vadd.f32 %v1581, %v1590
        %v1595 = vadd.f32 %v1582, %v1590
        %v1596 = vadd.f32 %v1583, %v1590
        %v1597 = vadd.f32 %v1584, %v1590
        %v1598 = vadd.f32 %v1585, %v1590
        %v1599 = vadd.f32 %v1591, %v1164
        %v1600 = vadd.f32 %v1592, %v1165
        %v1601 = vadd.f32 %v1593, %v1166
        %v1602 = vadd.f32 %v1594, %v1167
        %v1603 = vadd.f32 %v1595, %v1168
        %v1604 = vadd.f32 %v1596, %v1169
        %v1605 = vadd.f32 %v1597, %v1170
        %v1606 = vadd.f32 %v1598, %v1171
        %v1607 = vld [vmem:[#allocation11] sm:$0xf]
        %v1608 = vld [vmem:[#allocation11 + $0x4] sm:$0xf]
        %v1609 = vld [vmem:[#allocation11 + $0x8] sm:$0xf]
        %v1610 = vld [vmem:[#allocation11 + $0xc] sm:$0xf]
        %v1611 = vld [vmem:[#allocation11 + $0x10] sm:$0xf]
        %v1612 = vld [vmem:[#allocation11 + $0x14] sm:$0xf]
        %v1613 = vld [vmem:[#allocation11 + $0x18] sm:$0xf]
        %v1614 = vld [vmem:[#allocation11 + $0x1c] sm:$0xf]
        %v1615 = vld [vmem:[#allocation11 + $0x20] sm:$0xf]
        %v1616 = vld [vmem:[#allocation11 + $0x24] sm:$0xf]
        %v1617 = vld [vmem:[#allocation11 + $0x28] sm:$0xf]
        %v1618 = vld [vmem:[#allocation11 + $0x2c] sm:$0xf]
        %v1619 = vld [vmem:[#allocation11 + $0x30] sm:$0xf]
        %v1620 = vld [vmem:[#allocation11 + $0x34] sm:$0xf]
        %v1621 = vld [vmem:[#allocation11 + $0x38] sm:$0xf]
        %v1622 = vld [vmem:[#allocation11 + $0x3c] sm:$0xf]
        %v1623 = vld [vmem:[#allocation11 + $0x40] sm:$0xf]
        %v1624 = vld [vmem:[#allocation11 + $0x44] sm:$0xf]
        %v1625 = vld [vmem:[#allocation11 + $0x48] sm:$0xf]
        %v1626 = vld [vmem:[#allocation11 + $0x4c] sm:$0xf]
        %v1627 = vld [vmem:[#allocation11 + $0x50] sm:$0xf]
        %v1628 = vld [vmem:[#allocation11 + $0x54] sm:$0xf]
        %v1629 = vld [vmem:[#allocation11 + $0x58] sm:$0xf]
        %v1630 = vld [vmem:[#allocation11 + $0x5c] sm:$0xf]
        %v1631 = vld [vmem:[#allocation11 + $0x60] sm:$0xf]
        %v1632 = vld [vmem:[#allocation11 + $0x64] sm:$0xf]
        %v1633 = vld [vmem:[#allocation11 + $0x68] sm:$0xf]
        %v1634 = vld [vmem:[#allocation11 + $0x6c] sm:$0xf]
        %v1635 = vld [vmem:[#allocation11 + $0x70] sm:$0xf]
        %v1636 = vld [vmem:[#allocation11 + $0x74] sm:$0xf]
        %v1637 = vld [vmem:[#allocation11 + $0x78] sm:$0xf]
        %v1638 = vld [vmem:[#allocation11 + $0x7c] sm:$0xf]
        %v1655 = vunpack.c.l.b16 %v1623
        %v1656 = vunpack.c.l.b16 %v1624
        %v1657 = vunpack.c.l.b16 %v1625
        %v1658 = vunpack.c.l.b16 %v1626
        %v1659 = vunpack.c.l.b16 %v1627
        %v1660 = vunpack.c.l.b16 %v1628
        %v1661 = vunpack.c.l.b16 %v1629
        %v1662 = vunpack.c.l.b16 %v1630
        %v1663 = vunpack.c.l.b16 %v1631
        %v1664 = vunpack.c.l.b16 %v1632
        %v1665 = vunpack.c.l.b16 %v1633
        %v1666 = vunpack.c.l.b16 %v1634
        %v1667 = vunpack.c.l.b16 %v1635
        %v1668 = vunpack.c.l.b16 %v1636
        %v1669 = vunpack.c.l.b16 %v1637
        %v1670 = vunpack.c.l.b16 %v1638
        %v1671 = vpack.c.b16 %v1656, %v1655
        %v1672 = vpack.c.b16 %v1658, %v1657
        %v1673 = vpack.c.b16 %v1660, %v1659
        %v1674 = vpack.c.b16 %v1662, %v1661
        %v1675 = vpack.c.b16 %v1664, %v1663
        %v1676 = vpack.c.b16 %v1666, %v1665
        %v1677 = vpack.c.b16 %v1668, %v1667
        %v1678 = vpack.c.b16 %v1670, %v1669
        %1687 = vmatprep.subr.bf16.mxu0 0
        %1688 = vmatpush1.bf16.msra.mxu0 %v1671
        %1689 = vmatprep.subr.bf16.mxu0 0
        %1690 = vmatpush1.bf16.msra.mxu0 %v1672
        %1691 = vmatprep.subr.bf16.mxu0 0
        %1692 = vmatpush1.bf16.msra.mxu0 %v1673
        %1693 = vmatprep.subr.bf16.mxu0 0
        %1694 = vmatpush1.bf16.msra.mxu0 %v1674
        %1695 = vmatprep.subr.bf16.mxu0 0
        %1696 = vmatpush1.bf16.msra.mxu0 %v1675
        %1697 = vmatprep.subr.bf16.mxu0 0
        %1698 = vmatpush1.bf16.msra.mxu0 %v1676
        %1699 = vmatprep.subr.bf16.mxu0 0
        %1700 = vmatpush1.bf16.msra.mxu0 %v1677
        %1701 = vmatprep.subr.bf16.mxu0 0
        %1702 = vmatpush1.bf16.msra.mxu0 %v1678
        %1703 = vmatprep.subr.bf16.mxu0 0
        %1704 = vmatpush1.bf16.msra.mxu0 0
        %1705 = vmatprep.subr.bf16.mxu0 0
        %1706 = vmatpush1.bf16.msra.mxu0 0
        %1707 = vmatprep.subr.bf16.mxu0 0
        %1708 = vmatpush1.bf16.msra.mxu0 0
        %1709 = vmatprep.subr.bf16.mxu0 0
        %1710 = vmatpush1.bf16.msra.mxu0 0
        %1711 = vmatprep.subr.bf16.mxu0 0
        %1712 = vmatpush1.bf16.msra.mxu0 0
        %1713 = vmatprep.subr.bf16.mxu0 0
        %1714 = vmatpush1.bf16.msra.mxu0 0
        %1715 = vmatprep.subr.bf16.mxu0 0
        %1716 = vmatpush1.bf16.msra.mxu0 0
        %1717 = vmatprep.subr.bf16.mxu0 0
        %1718 = vmatpush1.bf16.msra.mxu0 0
        %1719 = vmatprep.mubr.bf16.mxu0 0
        %1720 = vmatmul.mubr.bf16.gmra.mrb[0].mxu0 %v1241
        %v1721 = vpop.f32.mrb[0].mxu0
        %v1722 = vadd.f32 0.0, %v1721
        %v1723 = vpop.f32.mrb[0].mxu0
        %v1724 = vpop.f32.mrb[0].mxu0
        %v1725 = vadd.f32 0.0, %v1724
        %v1726 = vpop.f32.mrb[0].mxu0
        %1727 = vmatprep.mubr.bf16.mxu0 0
        %1728 = vmatmul.mubr.bf16.gmra.mrb[0].mxu0 %v1242
        %v1729 = vpop.f32.mrb[0].mxu0
        %v1730 = vadd.f32 0.0, %v1729
        %v1731 = vpop.f32.mrb[0].mxu0
        %v1732 = vpop.f32.mrb[0].mxu0
        %v1733 = vadd.f32 0.0, %v1732
        %v1734 = vpop.f32.mrb[0].mxu0
        %1735 = vmatprep.mubr.bf16.mxu0 0
        %1736 = vmatmul.mubr.bf16.gmra.mrb[0].mxu0 %v1243
        %v1737 = vpop.f32.mrb[0].mxu0
        %v1738 = vadd.f32 0.0, %v1737
        %v1739 = vpop.f32.mrb[0].mxu0
        %v1740 = vpop.f32.mrb[0].mxu0
        %v1741 = vadd.f32 0.0, %v1740
        %v1742 = vpop.f32.mrb[0].mxu0
        %1743 = vmatprep.mubr.bf16.mxu0 0
        %1744 = vmatmul.mubr.bf16.gmra.mrb[0].mxu0 %v1244
        %v1745 = vpop.f32.mrb[0].mxu0
        %v1746 = vadd.f32 0.0, %v1745
        %v1747 = vpop.f32.mrb[0].mxu0
        %v1748 = vpop.f32.mrb[0].mxu0
        %v1749 = vadd.f32 0.0, %v1748
        %v1750 = vpop.f32.mrb[0].mxu0
        %1751 = vdwg.mxu0
        %v1768 = vunpack.c.l.b16 %v1607
        %v1769 = vunpack.c.l.b16 %v1608
        %v1770 = vunpack.c.l.b16 %v1609
        %v1771 = vunpack.c.l.b16 %v1610
        %v1772 = vunpack.c.l.b16 %v1611
        %v1773 = vunpack.c.l.b16 %v1612
        %v1774 = vunpack.c.l.b16 %v1613
        %v1775 = vunpack.c.l.b16 %v1614
        %v1776 = vunpack.c.l.b16 %v1615
        %v1777 = vunpack.c.l.b16 %v1616
        %v1778 = vunpack.c.l.b16 %v1617
        %v1779 = vunpack.c.l.b16 %v1618
        %v1780 = vunpack.c.l.b16 %v1619
        %v1781 = vunpack.c.l.b16 %v1620
        %v1782 = vunpack.c.l.b16 %v1621
        %v1783 = vunpack.c.l.b16 %v1622
        %v1784 = vpack.c.b16 %v1769, %v1768
        %v1785 = vpack.c.b16 %v1771, %v1770
        %v1786 = vpack.c.b16 %v1773, %v1772
        %v1787 = vpack.c.b16 %v1775, %v1774
        %v1788 = vpack.c.b16 %v1777, %v1776
        %v1789 = vpack.c.b16 %v1779, %v1778
        %v1790 = vpack.c.b16 %v1781, %v1780
        %v1791 = vpack.c.b16 %v1783, %v1782
        %1800 = vmatprep.subr.bf16.mxu0 0
        %1801 = vmatpush1.bf16.msra.mxu0 %v1784
        %1802 = vmatprep.subr.bf16.mxu0 0
        %1803 = vmatpush1.bf16.msra.mxu0 %v1785
        %1804 = vmatprep.subr.bf16.mxu0 0
        %1805 = vmatpush1.bf16.msra.mxu0 %v1786
        %1806 = vmatprep.subr.bf16.mxu0 0
        %1807 = vmatpush1.bf16.msra.mxu0 %v1787
        %1808 = vmatprep.subr.bf16.mxu0 0
        %1809 = vmatpush1.bf16.msra.mxu0 %v1788
        %1810 = vmatprep.subr.bf16.mxu0 0
        %1811 = vmatpush1.bf16.msra.mxu0 %v1789
        %1812 = vmatprep.subr.bf16.mxu0 0
        %1813 = vmatpush1.bf16.msra.mxu0 %v1790
        %1814 = vmatprep.subr.bf16.mxu0 0
        %1815 = vmatpush1.bf16.msra.mxu0 %v1791
        %1816 = vmatprep.subr.bf16.mxu0 0
        %1817 = vmatpush1.bf16.msra.mxu0 0
        %1818 = vmatprep.subr.bf16.mxu0 0
        %1819 = vmatpush1.bf16.msra.mxu0 0
        %1820 = vmatprep.subr.bf16.mxu0 0
        %1821 = vmatpush1.bf16.msra.mxu0 0
        %1822 = vmatprep.subr.bf16.mxu0 0
        %1823 = vmatpush1.bf16.msra.mxu0 0
        %1824 = vmatprep.subr.bf16.mxu0 0
        %1825 = vmatpush1.bf16.msra.mxu0 0
        %1826 = vmatprep.subr.bf16.mxu0 0
        %1827 = vmatpush1.bf16.msra.mxu0 0
        %1828 = vmatprep.subr.bf16.mxu0 0
        %1829 = vmatpush1.bf16.msra.mxu0 0
        %1830 = vmatprep.subr.bf16.mxu0 0
        %1831 = vmatpush1.bf16.msra.mxu0 0
        %1832 = vmatprep.mubr.bf16.mxu0 0
        %1833 = vmatmul.mubr.bf16.gmra.mrb[0].mxu0 %v1172
        %v1834 = vpop.f32.mrb[0].mxu0
        %v1835 = vadd.f32 %v1722, %v1834
        %v1836 = vpop.f32.mrb[0].mxu0
        %v1837 = vpop.f32.mrb[0].mxu0
        %v1838 = vadd.f32 %v1725, %v1837
        %v1839 = vpop.f32.mrb[0].mxu0
        %1840 = vmatprep.mubr.bf16.mxu0 0
        %1841 = vmatmul.mubr.bf16.gmra.mrb[0].mxu0 %v1173
        %v1842 = vpop.f32.mrb[0].mxu0
        %v1843 = vadd.f32 %v1730, %v1842
        %v1844 = vpop.f32.mrb[0].mxu0
        %v1845 = vpop.f32.mrb[0].mxu0
        %v1846 = vadd.f32 %v1733, %v1845
        %v1847 = vpop.f32.mrb[0].mxu0
        %1848 = vmatprep.mubr.bf16.mxu0 0
        %1849 = vmatmul.mubr.bf16.gmra.mrb[0].mxu0 %v1174
        %v1850 = vpop.f32.mrb[0].mxu0
        %v1851 = vadd.f32 %v1738, %v1850
        %v1852 = vpop.f32.mrb[0].mxu0
        %v1853 = vpop.f32.mrb[0].mxu0
        %v1854 = vadd.f32 %v1741, %v1853
        %v1855 = vpop.f32.mrb[0].mxu0
        %1856 = vmatprep.mubr.bf16.mxu0 0
        %1857 = vmatmul.mubr.bf16.gmra.mrb[0].mxu0 %v1175
        %v1858 = vpop.f32.mrb[0].mxu0
        %v1859 = vadd.f32 %v1746, %v1858
        %v1860 = vpop.f32.mrb[0].mxu0
        %v1861 = vpop.f32.mrb[0].mxu0
        %v1862 = vadd.f32 %v1749, %v1861
        %v1863 = vpop.f32.mrb[0].mxu0
        %1864 = vdwg.mxu0
        %v1865 = vld [vmem:[#allocation10 + $0xd] sm:$0x1]
        %v1866 = vlaneseq
        %v1867 = vshrl.u32 %v1866, 7
        %v1868 = vsub.s32 0, %v1867
        %v1869 = vrot.slane %v1865, %v1868
        %v1870 = vadd.f32 %v1835, %v1869
        %v1871 = vadd.f32 %v1838, %v1869
        %v1872 = vadd.f32 %v1843, %v1869
        %v1873 = vadd.f32 %v1846, %v1869
        %v1874 = vadd.f32 %v1851, %v1869
        %v1875 = vadd.f32 %v1854, %v1869
        %v1876 = vadd.f32 %v1859, %v1869
        %v1877 = vadd.f32 %v1862, %v1869
        %1878 = vmax.xlane.f32.xlu0 %v1870
        %v1879 = vpop.xlane.xlu0 %1878
        %1880 = vmax.xlane.f32.xlu0 %v1871
        %v1881 = vpop.xlane.xlu0 %1880
        %1882 = vmax.xlane.f32.xlu0 %v1872
        %v1883 = vpop.xlane.xlu0 %1882
        %1884 = vmax.xlane.f32.xlu0 %v1873
        %v1885 = vpop.xlane.xlu0 %1884
        %1886 = vmax.xlane.f32.xlu0 %v1874
        %v1887 = vpop.xlane.xlu0 %1886
        %1888 = vmax.xlane.f32.xlu0 %v1875
        %v1889 = vpop.xlane.xlu0 %1888
        %1890 = vmax.xlane.f32.xlu0 %v1876
        %v1891 = vpop.xlane.xlu0 %1890
        %1892 = vmax.xlane.f32.xlu0 %v1877
        %v1893 = vpop.xlane.xlu0 %1892
        %v1894 = vsub.f32 %v1870, %v1879
        %v1895 = vsub.f32 %v1871, %v1881
        %v1896 = vsub.f32 %v1872, %v1883
        %v1897 = vsub.f32 %v1873, %v1885
        %v1898 = vsub.f32 %v1874, %v1887
        %v1899 = vsub.f32 %v1875, %v1889
        %v1900 = vsub.f32 %v1876, %v1891
        %v1901 = vsub.f32 %v1877, %v1893
        %v1902 = vmul.f32 %v1894, 1.442695
        %v1903 = vpow.pop %v1902
        %v1904 = vmul.f32 %v1895, 1.442695
        %v1905 = vpow.pop %v1904
        %v1906 = vmul.f32 %v1896, 1.442695
        %v1907 = vpow.pop %v1906
        %v1908 = vmul.f32 %v1897, 1.442695
        %v1909 = vpow.pop %v1908
        %v1910 = vmul.f32 %v1898, 1.442695
        %v1911 = vpow.pop %v1910
        %v1912 = vmul.f32 %v1899, 1.442695
        %v1913 = vpow.pop %v1912
        %v1914 = vmul.f32 %v1900, 1.442695
        %v1915 = vpow.pop %v1914
        %v1916 = vmul.f32 %v1901, 1.442695
        %v1917 = vpow.pop %v1916
        %1918 = vadd.xlane.f32.xlu0 %v1903
        %v1919 = vpop.xlane.xlu0 %1918
        %1920 = vadd.xlane.f32.xlu0 %v1905
        %v1921 = vpop.xlane.xlu0 %1920
        %1922 = vadd.xlane.f32.xlu0 %v1907
        %v1923 = vpop.xlane.xlu0 %1922
        %1924 = vadd.xlane.f32.xlu0 %v1909
        %v1925 = vpop.xlane.xlu0 %1924
        %1926 = vadd.xlane.f32.xlu0 %v1911
        %v1927 = vpop.xlane.xlu0 %1926
        %1928 = vadd.xlane.f32.xlu0 %v1913
        %v1929 = vpop.xlane.xlu0 %1928
        %1930 = vadd.xlane.f32.xlu0 %v1915
        %v1931 = vpop.xlane.xlu0 %1930
        %1932 = vadd.xlane.f32.xlu0 %v1917
        %v1933 = vpop.xlane.xlu0 %1932
        %v1934 = vrcp.pop %v1919
        %v1935 = vmul.f32 %v1903, %v1934
        %v1936 = vrcp.pop %v1921
        %v1937 = vmul.f32 %v1905, %v1936
        %v1938 = vrcp.pop %v1923
        %v1939 = vmul.f32 %v1907, %v1938
        %v1940 = vrcp.pop %v1925
        %v1941 = vmul.f32 %v1909, %v1940
        %v1942 = vrcp.pop %v1927
        %v1943 = vmul.f32 %v1911, %v1942
        %v1944 = vrcp.pop %v1929
        %v1945 = vmul.f32 %v1913, %v1944
        %v1946 = vrcp.pop %v1931
        %v1947 = vmul.f32 %v1915, %v1946
        %v1948 = vrcp.pop %v1933
        %v1949 = vmul.f32 %v1917, %v1948
        %1950 = vst [vmem:[%s529] sm:$0xff] %v1935
        %1951 = vst [vmem:[%s529 + $0x8] sm:$0xff] %v1937
        %1952 = vst [vmem:[%s529 + $0x10] sm:$0xff] %v1939
        %1953 = vst [vmem:[%s529 + $0x18] sm:$0xff] %v1941
        %1954 = vst [vmem:[%s529 + $0x20] sm:$0xff] %v1943
        %1955 = vst [vmem:[%s529 + $0x28] sm:$0xff] %v1945
        %1956 = vst [vmem:[%s529 + $0x30] sm:$0xff] %v1947
        %1957 = vst [vmem:[%s529 + $0x38] sm:$0xff] %v1949
        %v1958 = vpack.c.bf16 %v1600, %v1599
        %v1959 = vpack.c.bf16 %v1602, %v1601
        %v1960 = vpack.c.bf16 %v1604, %v1603
        %v1961 = vpack.c.bf16 %v1606, %v1605
        %1962 = vmatprep.subr.bf16.mxu0 0
        %1963 = vmatpush1.bf16.msra.mxu0 %v1958
        %1964 = vmatprep.subr.bf16.mxu0 0
        %1965 = vmatpush1.bf16.msra.mxu0 %v1959
        %1966 = vmatprep.subr.bf16.mxu0 0
        %1967 = vmatpush1.bf16.msra.mxu0 %v1960
        %1968 = vmatprep.subr.bf16.mxu0 0
        %1969 = vmatpush1.bf16.msra.mxu0 %v1961
        %1970 = vmatprep.subr.bf16.mxu0 0
        %1971 = vmatpush1.bf16.msra.mxu0 0
        %1972 = vmatprep.subr.bf16.mxu0 0
        %1973 = vmatpush1.bf16.msra.mxu0 0
        %1974 = vmatprep.subr.bf16.mxu0 0
        %1975 = vmatpush1.bf16.msra.mxu0 0
        %1976 = vmatprep.subr.bf16.mxu0 0
        %1977 = vmatpush1.bf16.msra.mxu0 0
        %1978 = vmatprep.subr.bf16.mxu0 0
        %1979 = vmatpush1.bf16.msra.mxu0 0
        %1980 = vmatprep.subr.bf16.mxu0 0
        %1981 = vmatpush1.bf16.msra.mxu0 0
        %1982 = vmatprep.subr.bf16.mxu0 0
        %1983 = vmatpush1.bf16.msra.mxu0 0
        %1984 = vmatprep.subr.bf16.mxu0 0
        %1985 = vmatpush1.bf16.msra.mxu0 0
        %1986 = vmatprep.subr.bf16.mxu0 0
        %1987 = vmatpush1.bf16.msra.mxu0 0
        %1988 = vmatprep.subr.bf16.mxu0 0
        %1989 = vmatpush1.bf16.msra.mxu0 0
        %1990 = vmatprep.subr.bf16.mxu0 0
        %1991 = vmatpush1.bf16.msra.mxu0 0
        %1992 = vmatprep.subr.bf16.mxu0 0
        %1993 = vmatpush1.bf16.msra.mxu0 0
        %1994 = vmatprep.mubr.bf16.mxu0 0
        %1995 = vmatmul.mubr.bf16.gmra.mrb[0].mxu0 %v731
        %v1996 = vpop.f32.mrb[0].mxu0
        %v1997 = vadd.f32 0.0, %v1996
        %v1998 = vpop.f32.mrb[0].mxu0
        %v1999 = vpop.f32.mrb[0].mxu0
        %v2000 = vadd.f32 0.0, %v1999
        %v2001 = vpop.f32.mrb[0].mxu0
        %2002 = vmatprep.mubr.bf16.mxu0 0
        %2003 = vmatmul.mubr.bf16.gmra.mrb[0].mxu0 %v734
        %v2004 = vpop.f32.mrb[0].mxu0
        %v2005 = vadd.f32 0.0, %v2004
        %v2006 = vpop.f32.mrb[0].mxu0
        %v2007 = vpop.f32.mrb[0].mxu0
        %v2008 = vadd.f32 0.0, %v2007
        %v2009 = vpop.f32.mrb[0].mxu0
        %2010 = vmatprep.mubr.bf16.mxu0 0
        %2011 = vmatmul.mubr.bf16.gmra.mrb[0].mxu0 %v737
        %v2012 = vpop.f32.mrb[0].mxu0
        %v2013 = vadd.f32 0.0, %v2012
        %v2014 = vpop.f32.mrb[0].mxu0
        %v2015 = vpop.f32.mrb[0].mxu0
        %v2016 = vadd.f32 0.0, %v2015
        %v2017 = vpop.f32.mrb[0].mxu0
        %2018 = vmatprep.mubr.bf16.mxu0 0
        %2019 = vmatmul.mubr.bf16.gmra.mrb[0].mxu0 %v740
        %v2020 = vpop.f32.mrb[0].mxu0
        %v2021 = vadd.f32 0.0, %v2020
        %v2022 = vpop.f32.mrb[0].mxu0
        %v2023 = vpop.f32.mrb[0].mxu0
        %v2024 = vadd.f32 0.0, %v2023
        %v2025 = vpop.f32.mrb[0].mxu0
        %2026 = vdwg.mxu0
        %v2027 = vpack.c.bf16 %v2000, %v1997
        %v2028 = vpack.c.bf16 %v2008, %v2005
        %v2029 = vpack.c.bf16 %v2016, %v2013
        %v2030 = vpack.c.bf16 %v2024, %v2021
        %s2031 = scalar_lea.vmem [#allocation8], 256
        %v2032 = vld [vmem:[%s2031] sm:$0xf]
        %v2033 = vld [vmem:[%s2031 + $0x4] sm:$0xf]
        %v2034 = vld [vmem:[%s2031 + $0x8] sm:$0xf]
        %v2035 = vld [vmem:[%s2031 + $0xc] sm:$0xf]
        %v2036 = vld [vmem:[%s2031 + $0x10] sm:$0xf]
        %v2037 = vld [vmem:[%s2031 + $0x14] sm:$0xf]
        %v2038 = vld [vmem:[%s2031 + $0x18] sm:$0xf]
        %v2039 = vld [vmem:[%s2031 + $0x1c] sm:$0xf]
        %v2040 = vld [vmem:[%s2031 + $0x20] sm:$0xf]
        %v2041 = vld [vmem:[%s2031 + $0x24] sm:$0xf]
        %v2042 = vld [vmem:[%s2031 + $0x28] sm:$0xf]
        %v2043 = vld [vmem:[%s2031 + $0x2c] sm:$0xf]
        %v2044 = vld [vmem:[%s2031 + $0x30] sm:$0xf]
        %v2045 = vld [vmem:[%s2031 + $0x34] sm:$0xf]
        %v2046 = vld [vmem:[%s2031 + $0x38] sm:$0xf]
        %v2047 = vld [vmem:[%s2031 + $0x3c] sm:$0xf]
        %v2048 = vld [vmem:[%s2031 + $0x40] sm:$0xf]
        %v2049 = vld [vmem:[%s2031 + $0x44] sm:$0xf]
        %v2050 = vld [vmem:[%s2031 + $0x48] sm:$0xf]
        %v2051 = vld [vmem:[%s2031 + $0x4c] sm:$0xf]
        %v2052 = vld [vmem:[%s2031 + $0x50] sm:$0xf]
        %v2053 = vld [vmem:[%s2031 + $0x54] sm:$0xf]
        %v2054 = vld [vmem:[%s2031 + $0x58] sm:$0xf]
        %v2055 = vld [vmem:[%s2031 + $0x5c] sm:$0xf]
        %v2056 = vld [vmem:[%s2031 + $0x60] sm:$0xf]
        %v2057 = vld [vmem:[%s2031 + $0x64] sm:$0xf]
        %v2058 = vld [vmem:[%s2031 + $0x68] sm:$0xf]
        %v2059 = vld [vmem:[%s2031 + $0x6c] sm:$0xf]
        %v2060 = vld [vmem:[%s2031 + $0x70] sm:$0xf]
        %v2061 = vld [vmem:[%s2031 + $0x74] sm:$0xf]
        %v2062 = vld [vmem:[%s2031 + $0x78] sm:$0xf]
        %v2063 = vld [vmem:[%s2031 + $0x7c] sm:$0xf]
        %v2080 = vunpack.c.l.b16 %v2048
        %v2081 = vunpack.c.l.b16 %v2049
        %v2082 = vunpack.c.l.b16 %v2050
        %v2083 = vunpack.c.l.b16 %v2051
        %v2084 = vunpack.c.l.b16 %v2052
        %v2085 = vunpack.c.l.b16 %v2053
        %v2086 = vunpack.c.l.b16 %v2054
        %v2087 = vunpack.c.l.b16 %v2055
        %v2088 = vunpack.c.l.b16 %v2056
        %v2089 = vunpack.c.l.b16 %v2057
        %v2090 = vunpack.c.l.b16 %v2058
        %v2091 = vunpack.c.l.b16 %v2059
        %v2092 = vunpack.c.l.b16 %v2060
        %v2093 = vunpack.c.l.b16 %v2061
        %v2094 = vunpack.c.l.b16 %v2062
        %v2095 = vunpack.c.l.b16 %v2063
        %v2096 = vpack.c.b16 %v2081, %v2080
        %v2097 = vpack.c.b16 %v2083, %v2082
        %v2098 = vpack.c.b16 %v2085, %v2084
        %v2099 = vpack.c.b16 %v2087, %v2086
        %v2100 = vpack.c.b16 %v2089, %v2088
        %v2101 = vpack.c.b16 %v2091, %v2090
        %v2102 = vpack.c.b16 %v2093, %v2092
        %v2103 = vpack.c.b16 %v2095, %v2094
        %2112 = vmatprep.subr.bf16.mxu0 0
        %2113 = vmatpush1.bf16.msra.mxu0 %v2096
        %2114 = vmatprep.subr.bf16.mxu0 0
        %2115 = vmatpush1.bf16.msra.mxu0 %v2097
        %2116 = vmatprep.subr.bf16.mxu0 0
        %2117 = vmatpush1.bf16.msra.mxu0 %v2098
        %2118 = vmatprep.subr.bf16.mxu0 0
        %2119 = vmatpush1.bf16.msra.mxu0 %v2099
        %2120 = vmatprep.subr.bf16.mxu0 0
        %2121 = vmatpush1.bf16.msra.mxu0 %v2100
        %2122 = vmatprep.subr.bf16.mxu0 0
        %2123 = vmatpush1.bf16.msra.mxu0 %v2101
        %2124 = vmatprep.subr.bf16.mxu0 0
        %2125 = vmatpush1.bf16.msra.mxu0 %v2102
        %2126 = vmatprep.subr.bf16.mxu0 0
        %2127 = vmatpush1.bf16.msra.mxu0 %v2103
        %2128 = vmatprep.subr.bf16.mxu0 0
        %2129 = vmatpush1.bf16.msra.mxu0 0
        %2130 = vmatprep.subr.bf16.mxu0 0
        %2131 = vmatpush1.bf16.msra.mxu0 0
        %2132 = vmatprep.subr.bf16.mxu0 0
        %2133 = vmatpush1.bf16.msra.mxu0 0
        %2134 = vmatprep.subr.bf16.mxu0 0
        %2135 = vmatpush1.bf16.msra.mxu0 0
        %2136 = vmatprep.subr.bf16.mxu0 0
        %2137 = vmatpush1.bf16.msra.mxu0 0
        %2138 = vmatprep.subr.bf16.mxu0 0
        %2139 = vmatpush1.bf16.msra.mxu0 0
        %2140 = vmatprep.subr.bf16.mxu0 0
        %2141 = vmatpush1.bf16.msra.mxu0 0
        %2142 = vmatprep.subr.bf16.mxu0 0
        %2143 = vmatpush1.bf16.msra.mxu0 0
        %2144 = vmatprep.mubr.bf16.mxu0 0
        %2145 = vmatmul.mubr.bf16.gmra.mrb[0].mxu0 %v2027
        %v2146 = vpop.f32.mrb[0].mxu0
        %v2147 = vadd.f32 0.0, %v2146
        %v2148 = vpop.f32.mrb[0].mxu0
        %v2149 = vpop.f32.mrb[0].mxu0
        %v2150 = vadd.f32 0.0, %v2149
        %v2151 = vpop.f32.mrb[0].mxu0
        %2152 = vmatprep.mubr.bf16.mxu0 0
        %2153 = vmatmul.mubr.bf16.gmra.mrb[0].mxu0 %v2028
        %v2154 = vpop.f32.mrb[0].mxu0
        %v2155 = vadd.f32 0.0, %v2154
        %v2156 = vpop.f32.mrb[0].mxu0
        %v2157 = vpop.f32.mrb[0].mxu0
        %v2158 = vadd.f32 0.0, %v2157
        %v2159 = vpop.f32.mrb[0].mxu0
        %2160 = vmatprep.mubr.bf16.mxu0 0
        %2161 = vmatmul.mubr.bf16.gmra.mrb[0].mxu0 %v2029
        %v2162 = vpop.f32.mrb[0].mxu0
        %v2163 = vadd.f32 0.0, %v2162
        %v2164 = vpop.f32.mrb[0].mxu0
        %v2165 = vpop.f32.mrb[0].mxu0
        %v2166 = vadd.f32 0.0, %v2165
        %v2167 = vpop.f32.mrb[0].mxu0
        %2168 = vmatprep.mubr.bf16.mxu0 0
        %2169 = vmatmul.mubr.bf16.gmra.mrb[0].mxu0 %v2030
        %v2170 = vpop.f32.mrb[0].mxu0
        %v2171 = vadd.f32 0.0, %v2170
        %v2172 = vpop.f32.mrb[0].mxu0
        %v2173 = vpop.f32.mrb[0].mxu0
        %v2174 = vadd.f32 0.0, %v2173
        %v2175 = vpop.f32.mrb[0].mxu0
        %2176 = vdwg.mxu0
        %v2193 = vunpack.c.l.b16 %v2032
        %v2194 = vunpack.c.l.b16 %v2033
        %v2195 = vunpack.c.l.b16 %v2034
        %v2196 = vunpack.c.l.b16 %v2035
        %v2197 = vunpack.c.l.b16 %v2036
        %v2198 = vunpack.c.l.b16 %v2037
        %v2199 = vunpack.c.l.b16 %v2038
        %v2200 = vunpack.c.l.b16 %v2039
        %v2201 = vunpack.c.l.b16 %v2040
        %v2202 = vunpack.c.l.b16 %v2041
        %v2203 = vunpack.c.l.b16 %v2042
        %v2204 = vunpack.c.l.b16 %v2043
        %v2205 = vunpack.c.l.b16 %v2044
        %v2206 = vunpack.c.l.b16 %v2045
        %v2207 = vunpack.c.l.b16 %v2046
        %v2208 = vunpack.c.l.b16 %v2047
        %v2209 = vpack.c.b16 %v2194, %v2193
        %v2210 = vpack.c.b16 %v2196, %v2195
        %v2211 = vpack.c.b16 %v2198, %v2197
        %v2212 = vpack.c.b16 %v2200, %v2199
        %v2213 = vpack.c.b16 %v2202, %v2201
        %v2214 = vpack.c.b16 %v2204, %v2203
        %v2215 = vpack.c.b16 %v2206, %v2205
        %v2216 = vpack.c.b16 %v2208, %v2207
        %2225 = vmatprep.subr.bf16.mxu0 0
        %2226 = vmatpush1.bf16.msra.mxu0 %v2209
        %2227 = vmatprep.subr.bf16.mxu0 0
        %2228 = vmatpush1.bf16.msra.mxu0 %v2210
        %2229 = vmatprep.subr.bf16.mxu0 0
        %2230 = vmatpush1.bf16.msra.mxu0 %v2211
        %2231 = vmatprep.subr.bf16.mxu0 0
        %2232 = vmatpush1.bf16.msra.mxu0 %v2212
        %2233 = vmatprep.subr.bf16.mxu0 0
        %2234 = vmatpush1.bf16.msra.mxu0 %v2213
        %2235 = vmatprep.subr.bf16.mxu0 0
        %2236 = vmatpush1.bf16.msra.mxu0 %v2214
        %2237 = vmatprep.subr.bf16.mxu0 0
        %2238 = vmatpush1.bf16.msra.mxu0 %v2215
        %2239 = vmatprep.subr.bf16.mxu0 0
        %2240 = vmatpush1.bf16.msra.mxu0 %v2216
        %2241 = vmatprep.subr.bf16.mxu0 0
        %2242 = vmatpush1.bf16.msra.mxu0 0
        %2243 = vmatprep.subr.bf16.mxu0 0
        %2244 = vmatpush1.bf16.msra.mxu0 0
        %2245 = vmatprep.subr.bf16.mxu0 0
        %2246 = vmatpush1.bf16.msra.mxu0 0
        %2247 = vmatprep.subr.bf16.mxu0 0
        %2248 = vmatpush1.bf16.msra.mxu0 0
        %2249 = vmatprep.subr.bf16.mxu0 0
        %2250 = vmatpush1.bf16.msra.mxu0 0
        %2251 = vmatprep.subr.bf16.mxu0 0
        %2252 = vmatpush1.bf16.msra.mxu0 0
        %2253 = vmatprep.subr.bf16.mxu0 0
        %2254 = vmatpush1.bf16.msra.mxu0 0
        %2255 = vmatprep.subr.bf16.mxu0 0
        %2256 = vmatpush1.bf16.msra.mxu0 0
        %2257 = vmatprep.mubr.bf16.mxu0 0
        %2258 = vmatmul.mubr.bf16.gmra.mrb[0].mxu0 %v1958
        %v2259 = vpop.f32.mrb[0].mxu0
        %v2260 = vadd.f32 %v2147, %v2259
        %v2261 = vpop.f32.mrb[0].mxu0
        %v2262 = vpop.f32.mrb[0].mxu0
        %v2263 = vadd.f32 %v2150, %v2262
        %v2264 = vpop.f32.mrb[0].mxu0
        %2265 = vmatprep.mubr.bf16.mxu0 0
        %2266 = vmatmul.mubr.bf16.gmra.mrb[0].mxu0 %v1959
        %v2267 = vpop.f32.mrb[0].mxu0
        %v2268 = vadd.f32 %v2155, %v2267
        %v2269 = vpop.f32.mrb[0].mxu0
        %v2270 = vpop.f32.mrb[0].mxu0
        %v2271 = vadd.f32 %v2158, %v2270
        %v2272 = vpop.f32.mrb[0].mxu0
        %2273 = vmatprep.mubr.bf16.mxu0 0
        %2274 = vmatmul.mubr.bf16.gmra.mrb[0].mxu0 %v1960
        %v2275 = vpop.f32.mrb[0].mxu0
        %v2276 = vadd.f32 %v2163, %v2275
        %v2277 = vpop.f32.mrb[0].mxu0
        %v2278 = vpop.f32.mrb[0].mxu0
        %v2279 = vadd.f32 %v2166, %v2278
        %v2280 = vpop.f32.mrb[0].mxu0
        %2281 = vmatprep.mubr.bf16.mxu0 0
        %2282 = vmatmul.mubr.bf16.gmra.mrb[0].mxu0 %v1961
        %v2283 = vpop.f32.mrb[0].mxu0
        %v2284 = vadd.f32 %v2171, %v2283
        %v2285 = vpop.f32.mrb[0].mxu0
        %v2286 = vpop.f32.mrb[0].mxu0
        %v2287 = vadd.f32 %v2174, %v2286
        %v2288 = vpop.f32.mrb[0].mxu0
        %2289 = vdwg.mxu0
        %v2290 = vld [vmem:[#allocation10 + $0x3] sm:$0x1]
        %v2291 = vlaneseq
        %v2292 = vshrl.u32 %v2291, 7
        %v2293 = vsub.s32 0, %v2292
        %v2294 = vrot.slane %v2290, %v2293
        %v2295 = vadd.f32 %v2260, %v2294
        %v2296 = vadd.f32 %v2263, %v2294
        %v2297 = vadd.f32 %v2268, %v2294
        %v2298 = vadd.f32 %v2271, %v2294
        %v2299 = vadd.f32 %v2276, %v2294
        %v2300 = vadd.f32 %v2279, %v2294
        %v2301 = vadd.f32 %v2284, %v2294
        %v2302 = vadd.f32 %v2287, %v2294
        %v2303 = vmul.f32 %v2295, %v2295
        %v2304 = vmul.f32 %v2296, %v2296
        %v2305 = vmul.f32 %v2297, %v2297
        %v2306 = vmul.f32 %v2298, %v2298
        %v2307 = vmul.f32 %v2299, %v2299
        %v2308 = vmul.f32 %v2300, %v2300
        %v2309 = vmul.f32 %v2301, %v2301
        %v2310 = vmul.f32 %v2302, %v2302
        %2311 = vadd.xlane.f32.xlu0 %v2303
        %v2312 = vpop.xlane.xlu0 %2311
        %2313 = vadd.xlane.f32.xlu0 %v2304
        %v2314 = vpop.xlane.xlu0 %2313
        %2315 = vadd.xlane.f32.xlu0 %v2305
        %v2316 = vpop.xlane.xlu0 %2315
        %2317 = vadd.xlane.f32.xlu0 %v2306
        %v2318 = vpop.xlane.xlu0 %2317
        %2319 = vadd.xlane.f32.xlu0 %v2307
        %v2320 = vpop.xlane.xlu0 %2319
        %2321 = vadd.xlane.f32.xlu0 %v2308
        %v2322 = vpop.xlane.xlu0 %2321
        %2323 = vadd.xlane.f32.xlu0 %v2309
        %v2324 = vpop.xlane.xlu0 %2323
        %2325 = vadd.xlane.f32.xlu0 %v2310
        %v2326 = vpop.xlane.xlu0 %2325
        %v2327 = vmax.f32 %v2312, 1e-24
        %v2328 = vmax.f32 %v2314, 1e-24
        %v2329 = vmax.f32 %v2316, 1e-24
        %v2330 = vmax.f32 %v2318, 1e-24
        %v2331 = vmax.f32 %v2320, 1e-24
        %v2332 = vmax.f32 %v2322, 1e-24
        %v2333 = vmax.f32 %v2324, 1e-24
        %v2334 = vmax.f32 %v2326, 1e-24
        %v2335 = vrsqrt.pop %v2327
        %v2336 = vrsqrt.pop %v2328
        %v2337 = vrsqrt.pop %v2329
        %v2338 = vrsqrt.pop %v2330
        %v2339 = vrsqrt.pop %v2331
        %v2340 = vrsqrt.pop %v2332
        %v2341 = vrsqrt.pop %v2333
        %v2342 = vrsqrt.pop %v2334
        %v2343 = vmul.f32 %v2295, %v2335
        %v2344 = vmul.f32 %v2296, %v2336
        %v2345 = vmul.f32 %v2297, %v2337
        %v2346 = vmul.f32 %v2298, %v2338
        %v2347 = vmul.f32 %v2299, %v2339
        %v2348 = vmul.f32 %v2300, %v2340
        %v2349 = vmul.f32 %v2301, %v2341
        %v2350 = vmul.f32 %v2302, %v2342
        %v2351 = vmax.f32 %v2343, 0.0
        %v2352 = vmax.f32 %v2344, 0.0
        %v2353 = vmax.f32 %v2345, 0.0
        %v2354 = vmax.f32 %v2346, 0.0
        %v2355 = vmax.f32 %v2347, 0.0
        %v2356 = vmax.f32 %v2348, 0.0
        %v2357 = vmax.f32 %v2349, 0.0
        %v2358 = vmax.f32 %v2350, 0.0
        %v2359 = vld [vmem:[#allocation10 + $0x7] sm:$0x1]
        %v2360 = vlaneseq
        %v2361 = vshrl.u32 %v2360, 7
        %v2362 = vsub.s32 0, %v2361
        %v2363 = vrot.slane %v2359, %v2362
        %v2364 = vmul.f32 %v2351, %v2363
        %v2365 = vmul.f32 %v2352, %v2363
        %v2366 = vmul.f32 %v2353, %v2363
        %v2367 = vmul.f32 %v2354, %v2363
        %v2368 = vmul.f32 %v2355, %v2363
        %v2369 = vmul.f32 %v2356, %v2363
        %v2370 = vmul.f32 %v2357, %v2363
        %v2371 = vmul.f32 %v2358, %v2363
        %v2372 = vld [vmem:[#allocation10 + $0xb] sm:$0x1]
        %v2373 = vlaneseq
        %v2374 = vshrl.u32 %v2373, 7
        %v2375 = vsub.s32 0, %v2374
        %v2376 = vrot.slane %v2372, %v2375
        %v2377 = vadd.f32 %v2364, %v2376
        %v2378 = vadd.f32 %v2365, %v2376
        %v2379 = vadd.f32 %v2366, %v2376
        %v2380 = vadd.f32 %v2367, %v2376
        %v2381 = vadd.f32 %v2368, %v2376
        %v2382 = vadd.f32 %v2369, %v2376
        %v2383 = vadd.f32 %v2370, %v2376
        %v2384 = vadd.f32 %v2371, %v2376
        %v2385 = vadd.f32 %v2377, %v1599
        %v2386 = vadd.f32 %v2378, %v1600
        %v2387 = vadd.f32 %v2379, %v1601
        %v2388 = vadd.f32 %v2380, %v1602
        %v2389 = vadd.f32 %v2381, %v1603
        %v2390 = vadd.f32 %v2382, %v1604
        %v2391 = vadd.f32 %v2383, %v1605
        %v2392 = vadd.f32 %v2384, %v1606
        %v2393 = vpack.c.bf16 %v2386, %v2385
        %v2394 = vpack.c.bf16 %v2388, %v2387
        %v2395 = vpack.c.bf16 %v2390, %v2389
        %v2396 = vpack.c.bf16 %v2392, %v2391
        %2397 = vmatprep.subr.bf16.mxu0 0
        %2398 = vmatpush1.bf16.msra.mxu0 %v2393
        %2399 = vmatprep.subr.bf16.mxu0 0
        %2400 = vmatpush1.bf16.msra.mxu0 %v2394
        %2401 = vmatprep.subr.bf16.mxu0 0
        %2402 = vmatpush1.bf16.msra.mxu0 %v2395
        %2403 = vmatprep.subr.bf16.mxu0 0
        %2404 = vmatpush1.bf16.msra.mxu0 %v2396
        %2405 = vmatprep.subr.bf16.mxu0 0
        %2406 = vmatpush1.bf16.msra.mxu0 0
        %2407 = vmatprep.subr.bf16.mxu0 0
        %2408 = vmatpush1.bf16.msra.mxu0 0
        %2409 = vmatprep.subr.bf16.mxu0 0
        %2410 = vmatpush1.bf16.msra.mxu0 0
        %2411 = vmatprep.subr.bf16.mxu0 0
        %2412 = vmatpush1.bf16.msra.mxu0 0
        %2413 = vmatprep.subr.bf16.mxu0 0
        %2414 = vmatpush1.bf16.msra.mxu0 0
        %2415 = vmatprep.subr.bf16.mxu0 0
        %2416 = vmatpush1.bf16.msra.mxu0 0
        %2417 = vmatprep.subr.bf16.mxu0 0
        %2418 = vmatpush1.bf16.msra.mxu0 0
        %2419 = vmatprep.subr.bf16.mxu0 0
        %2420 = vmatpush1.bf16.msra.mxu0 0
        %2421 = vmatprep.subr.bf16.mxu0 0
        %2422 = vmatpush1.bf16.msra.mxu0 0
        %2423 = vmatprep.subr.bf16.mxu0 0
        %2424 = vmatpush1.bf16.msra.mxu0 0
        %2425 = vmatprep.subr.bf16.mxu0 0
        %2426 = vmatpush1.bf16.msra.mxu0 0
        %2427 = vmatprep.subr.bf16.mxu0 0
        %2428 = vmatpush1.bf16.msra.mxu0 0
        %2429 = vmatprep.mubr.bf16.mxu0 0
        %2430 = vmatmul.mubr.bf16.gmra.mrb[0].mxu0 %v731
        %v2431 = vpop.f32.mrb[0].mxu0
        %v2432 = vadd.f32 0.0, %v2431
        %v2433 = vpop.f32.mrb[0].mxu0
        %v2434 = vpop.f32.mrb[0].mxu0
        %v2435 = vadd.f32 0.0, %v2434
        %v2436 = vpop.f32.mrb[0].mxu0
        %2437 = vmatprep.mubr.bf16.mxu0 0
        %2438 = vmatmul.mubr.bf16.gmra.mrb[0].mxu0 %v734
        %v2439 = vpop.f32.mrb[0].mxu0
        %v2440 = vadd.f32 0.0, %v2439
        %v2441 = vpop.f32.mrb[0].mxu0
        %v2442 = vpop.f32.mrb[0].mxu0
        %v2443 = vadd.f32 0.0, %v2442
        %v2444 = vpop.f32.mrb[0].mxu0
        %2445 = vmatprep.mubr.bf16.mxu0 0
        %2446 = vmatmul.mubr.bf16.gmra.mrb[0].mxu0 %v737
        %v2447 = vpop.f32.mrb[0].mxu0
        %v2448 = vadd.f32 0.0, %v2447
        %v2449 = vpop.f32.mrb[0].mxu0
        %v2450 = vpop.f32.mrb[0].mxu0
        %v2451 = vadd.f32 0.0, %v2450
        %v2452 = vpop.f32.mrb[0].mxu0
        %2453 = vmatprep.mubr.bf16.mxu0 0
        %2454 = vmatmul.mubr.bf16.gmra.mrb[0].mxu0 %v740
        %v2455 = vpop.f32.mrb[0].mxu0
        %v2456 = vadd.f32 0.0, %v2455
        %v2457 = vpop.f32.mrb[0].mxu0
        %v2458 = vpop.f32.mrb[0].mxu0
        %v2459 = vadd.f32 0.0, %v2458
        %v2460 = vpop.f32.mrb[0].mxu0
        %2461 = vdwg.mxu0
        %v2462 = vpack.c.bf16 %v2435, %v2432
        %v2463 = vpack.c.bf16 %v2443, %v2440
        %v2464 = vpack.c.bf16 %v2451, %v2448
        %v2465 = vpack.c.bf16 %v2459, %v2456
        %s2466 = scalar_lea.vmem [#allocation8], 384
        %v2467 = vld [vmem:[%s2466] sm:$0xf]
        %v2468 = vld [vmem:[%s2466 + $0x4] sm:$0xf]
        %v2469 = vld [vmem:[%s2466 + $0x8] sm:$0xf]
        %v2470 = vld [vmem:[%s2466 + $0xc] sm:$0xf]
        %v2471 = vld [vmem:[%s2466 + $0x10] sm:$0xf]
        %v2472 = vld [vmem:[%s2466 + $0x14] sm:$0xf]
        %v2473 = vld [vmem:[%s2466 + $0x18] sm:$0xf]
        %v2474 = vld [vmem:[%s2466 + $0x1c] sm:$0xf]
        %v2475 = vld [vmem:[%s2466 + $0x20] sm:$0xf]
        %v2476 = vld [vmem:[%s2466 + $0x24] sm:$0xf]
        %v2477 = vld [vmem:[%s2466 + $0x28] sm:$0xf]
        %v2478 = vld [vmem:[%s2466 + $0x2c] sm:$0xf]
        %v2479 = vld [vmem:[%s2466 + $0x30] sm:$0xf]
        %v2480 = vld [vmem:[%s2466 + $0x34] sm:$0xf]
        %v2481 = vld [vmem:[%s2466 + $0x38] sm:$0xf]
        %v2482 = vld [vmem:[%s2466 + $0x3c] sm:$0xf]
        %v2483 = vld [vmem:[%s2466 + $0x40] sm:$0xf]
        %v2484 = vld [vmem:[%s2466 + $0x44] sm:$0xf]
        %v2485 = vld [vmem:[%s2466 + $0x48] sm:$0xf]
        %v2486 = vld [vmem:[%s2466 + $0x4c] sm:$0xf]
        %v2487 = vld [vmem:[%s2466 + $0x50] sm:$0xf]
        %v2488 = vld [vmem:[%s2466 + $0x54] sm:$0xf]
        %v2489 = vld [vmem:[%s2466 + $0x58] sm:$0xf]
        %v2490 = vld [vmem:[%s2466 + $0x5c] sm:$0xf]
        %v2491 = vld [vmem:[%s2466 + $0x60] sm:$0xf]
        %v2492 = vld [vmem:[%s2466 + $0x64] sm:$0xf]
        %v2493 = vld [vmem:[%s2466 + $0x68] sm:$0xf]
        %v2494 = vld [vmem:[%s2466 + $0x6c] sm:$0xf]
        %v2495 = vld [vmem:[%s2466 + $0x70] sm:$0xf]
        %v2496 = vld [vmem:[%s2466 + $0x74] sm:$0xf]
        %v2497 = vld [vmem:[%s2466 + $0x78] sm:$0xf]
        %v2498 = vld [vmem:[%s2466 + $0x7c] sm:$0xf]
        %v2515 = vunpack.c.l.b16 %v2483
        %v2516 = vunpack.c.l.b16 %v2484
        %v2517 = vunpack.c.l.b16 %v2485
        %v2518 = vunpack.c.l.b16 %v2486
        %v2519 = vunpack.c.l.b16 %v2487
        %v2520 = vunpack.c.l.b16 %v2488
        %v2521 = vunpack.c.l.b16 %v2489
        %v2522 = vunpack.c.l.b16 %v2490
        %v2523 = vunpack.c.l.b16 %v2491
        %v2524 = vunpack.c.l.b16 %v2492
        %v2525 = vunpack.c.l.b16 %v2493
        %v2526 = vunpack.c.l.b16 %v2494
        %v2527 = vunpack.c.l.b16 %v2495
        %v2528 = vunpack.c.l.b16 %v2496
        %v2529 = vunpack.c.l.b16 %v2497
        %v2530 = vunpack.c.l.b16 %v2498
        %v2531 = vpack.c.b16 %v2516, %v2515
        %v2532 = vpack.c.b16 %v2518, %v2517
        %v2533 = vpack.c.b16 %v2520, %v2519
        %v2534 = vpack.c.b16 %v2522, %v2521
        %v2535 = vpack.c.b16 %v2524, %v2523
        %v2536 = vpack.c.b16 %v2526, %v2525
        %v2537 = vpack.c.b16 %v2528, %v2527
        %v2538 = vpack.c.b16 %v2530, %v2529
        %2547 = vmatprep.subr.bf16.mxu0 0
        %2548 = vmatpush1.bf16.msra.mxu0 %v2531
        %2549 = vmatprep.subr.bf16.mxu0 0
        %2550 = vmatpush1.bf16.msra.mxu0 %v2532
        %2551 = vmatprep.subr.bf16.mxu0 0
        %2552 = vmatpush1.bf16.msra.mxu0 %v2533
        %2553 = vmatprep.subr.bf16.mxu0 0
        %2554 = vmatpush1.bf16.msra.mxu0 %v2534
        %2555 = vmatprep.subr.bf16.mxu0 0
        %2556 = vmatpush1.bf16.msra.mxu0 %v2535
        %2557 = vmatprep.subr.bf16.mxu0 0
        %2558 = vmatpush1.bf16.msra.mxu0 %v2536
        %2559 = vmatprep.subr.bf16.mxu0 0
        %2560 = vmatpush1.bf16.msra.mxu0 %v2537
        %2561 = vmatprep.subr.bf16.mxu0 0
        %2562 = vmatpush1.bf16.msra.mxu0 %v2538
        %2563 = vmatprep.subr.bf16.mxu0 0
        %2564 = vmatpush1.bf16.msra.mxu0 0
        %2565 = vmatprep.subr.bf16.mxu0 0
        %2566 = vmatpush1.bf16.msra.mxu0 0
        %2567 = vmatprep.subr.bf16.mxu0 0
        %2568 = vmatpush1.bf16.msra.mxu0 0
        %2569 = vmatprep.subr.bf16.mxu0 0
        %2570 = vmatpush1.bf16.msra.mxu0 0
        %2571 = vmatprep.subr.bf16.mxu0 0
        %2572 = vmatpush1.bf16.msra.mxu0 0
        %2573 = vmatprep.subr.bf16.mxu0 0
        %2574 = vmatpush1.bf16.msra.mxu0 0
        %2575 = vmatprep.subr.bf16.mxu0 0
        %2576 = vmatpush1.bf16.msra.mxu0 0
        %2577 = vmatprep.subr.bf16.mxu0 0
        %2578 = vmatpush1.bf16.msra.mxu0 0
        %2579 = vmatprep.mubr.bf16.mxu0 0
        %2580 = vmatmul.mubr.bf16.gmra.mrb[0].mxu0 %v2462
        %v2581 = vpop.f32.mrb[0].mxu0
        %v2582 = vadd.f32 0.0, %v2581
        %v2583 = vpop.f32.mrb[0].mxu0
        %v2584 = vpop.f32.mrb[0].mxu0
        %v2585 = vadd.f32 0.0, %v2584
        %v2586 = vpop.f32.mrb[0].mxu0
        %2587 = vmatprep.mubr.bf16.mxu0 0
        %2588 = vmatmul.mubr.bf16.gmra.mrb[0].mxu0 %v2463
        %v2589 = vpop.f32.mrb[0].mxu0
        %v2590 = vadd.f32 0.0, %v2589
        %v2591 = vpop.f32.mrb[0].mxu0
        %v2592 = vpop.f32.mrb[0].mxu0
        %v2593 = vadd.f32 0.0, %v2592
        %v2594 = vpop.f32.mrb[0].mxu0
        %2595 = vmatprep.mubr.bf16.mxu0 0
        %2596 = vmatmul.mubr.bf16.gmra.mrb[0].mxu0 %v2464
        %v2597 = vpop.f32.mrb[0].mxu0
        %v2598 = vadd.f32 0.0, %v2597
        %v2599 = vpop.f32.mrb[0].mxu0
        %v2600 = vpop.f32.mrb[0].mxu0
        %v2601 = vadd.f32 0.0, %v2600
        %v2602 = vpop.f32.mrb[0].mxu0
        %2603 = vmatprep.mubr.bf16.mxu0 0
        %2604 = vmatmul.mubr.bf16.gmra.mrb[0].mxu0 %v2465
        %v2605 = vpop.f32.mrb[0].mxu0
        %v2606 = vadd.f32 0.0, %v2605
        %v2607 = vpop.f32.mrb[0].mxu0
        %v2608 = vpop.f32.mrb[0].mxu0
        %v2609 = vadd.f32 0.0, %v2608
        %v2610 = vpop.f32.mrb[0].mxu0
        %2611 = vdwg.mxu0
        %v2628 = vunpack.c.l.b16 %v2467
        %v2629 = vunpack.c.l.b16 %v2468
        %v2630 = vunpack.c.l.b16 %v2469
        %v2631 = vunpack.c.l.b16 %v2470
        %v2632 = vunpack.c.l.b16 %v2471
        %v2633 = vunpack.c.l.b16 %v2472
        %v2634 = vunpack.c.l.b16 %v2473
        %v2635 = vunpack.c.l.b16 %v2474
        %v2636 = vunpack.c.l.b16 %v2475
        %v2637 = vunpack.c.l.b16 %v2476
        %v2638 = vunpack.c.l.b16 %v2477
        %v2639 = vunpack.c.l.b16 %v2478
        %v2640 = vunpack.c.l.b16 %v2479
        %v2641 = vunpack.c.l.b16 %v2480
        %v2642 = vunpack.c.l.b16 %v2481
        %v2643 = vunpack.c.l.b16 %v2482
        %v2644 = vpack.c.b16 %v2629, %v2628
        %v2645 = vpack.c.b16 %v2631, %v2630
        %v2646 = vpack.c.b16 %v2633, %v2632
        %v2647 = vpack.c.b16 %v2635, %v2634
        %v2648 = vpack.c.b16 %v2637, %v2636
        %v2649 = vpack.c.b16 %v2639, %v2638
        %v2650 = vpack.c.b16 %v2641, %v2640
        %v2651 = vpack.c.b16 %v2643, %v2642
        %2660 = vmatprep.subr.bf16.mxu0 0
        %2661 = vmatpush1.bf16.msra.mxu0 %v2644
        %2662 = vmatprep.subr.bf16.mxu0 0
        %2663 = vmatpush1.bf16.msra.mxu0 %v2645
        %2664 = vmatprep.subr.bf16.mxu0 0
        %2665 = vmatpush1.bf16.msra.mxu0 %v2646
        %2666 = vmatprep.subr.bf16.mxu0 0
        %2667 = vmatpush1.bf16.msra.mxu0 %v2647
        %2668 = vmatprep.subr.bf16.mxu0 0
        %2669 = vmatpush1.bf16.msra.mxu0 %v2648
        %2670 = vmatprep.subr.bf16.mxu0 0
        %2671 = vmatpush1.bf16.msra.mxu0 %v2649
        %2672 = vmatprep.subr.bf16.mxu0 0
        %2673 = vmatpush1.bf16.msra.mxu0 %v2650
        %2674 = vmatprep.subr.bf16.mxu0 0
        %2675 = vmatpush1.bf16.msra.mxu0 %v2651
        %2676 = vmatprep.subr.bf16.mxu0 0
        %2677 = vmatpush1.bf16.msra.mxu0 0
        %2678 = vmatprep.subr.bf16.mxu0 0
        %2679 = vmatpush1.bf16.msra.mxu0 0
        %2680 = vmatprep.subr.bf16.mxu0 0
        %2681 = vmatpush1.bf16.msra.mxu0 0
        %2682 = vmatprep.subr.bf16.mxu0 0
        %2683 = vmatpush1.bf16.msra.mxu0 0
        %2684 = vmatprep.subr.bf16.mxu0 0
        %2685 = vmatpush1.bf16.msra.mxu0 0
        %2686 = vmatprep.subr.bf16.mxu0 0
        %2687 = vmatpush1.bf16.msra.mxu0 0
        %2688 = vmatprep.subr.bf16.mxu0 0
        %2689 = vmatpush1.bf16.msra.mxu0 0
        %2690 = vmatprep.subr.bf16.mxu0 0
        %2691 = vmatpush1.bf16.msra.mxu0 0
        %2692 = vmatprep.mubr.bf16.mxu0 0
        %2693 = vmatmul.mubr.bf16.gmra.mrb[0].mxu0 %v2393
        %v2694 = vpop.f32.mrb[0].mxu0
        %v2695 = vadd.f32 %v2582, %v2694
        %v2696 = vpop.f32.mrb[0].mxu0
        %v2697 = vpop.f32.mrb[0].mxu0
        %v2698 = vadd.f32 %v2585, %v2697
        %v2699 = vpop.f32.mrb[0].mxu0
        %2700 = vmatprep.mubr.bf16.mxu0 0
        %2701 = vmatmul.mubr.bf16.gmra.mrb[0].mxu0 %v2394
        %v2702 = vpop.f32.mrb[0].mxu0
        %v2703 = vadd.f32 %v2590, %v2702
        %v2704 = vpop.f32.mrb[0].mxu0
        %v2705 = vpop.f32.mrb[0].mxu0
        %v2706 = vadd.f32 %v2593, %v2705
        %v2707 = vpop.f32.mrb[0].mxu0
        %2708 = vmatprep.mubr.bf16.mxu0 0
        %2709 = vmatmul.mubr.bf16.gmra.mrb[0].mxu0 %v2395
        %v2710 = vpop.f32.mrb[0].mxu0
        %v2711 = vadd.f32 %v2598, %v2710
        %v2712 = vpop.f32.mrb[0].mxu0
        %v2713 = vpop.f32.mrb[0].mxu0
        %v2714 = vadd.f32 %v2601, %v2713
        %v2715 = vpop.f32.mrb[0].mxu0
        %2716 = vmatprep.mubr.bf16.mxu0 0
        %2717 = vmatmul.mubr.bf16.gmra.mrb[0].mxu0 %v2396
        %v2718 = vpop.f32.mrb[0].mxu0
        %v2719 = vadd.f32 %v2606, %v2718
        %v2720 = vpop.f32.mrb[0].mxu0
        %v2721 = vpop.f32.mrb[0].mxu0
        %v2722 = vadd.f32 %v2609, %v2721
        %v2723 = vpop.f32.mrb[0].mxu0
        %2724 = vdwg.mxu0
        %v2725 = vld [vmem:[#allocation10 + $0x4] sm:$0x1]
        %v2726 = vlaneseq
        %v2727 = vshrl.u32 %v2726, 7
        %v2728 = vsub.s32 0, %v2727
        %v2729 = vrot.slane %v2725, %v2728
        %v2730 = vadd.f32 %v2695, %v2729
        %v2731 = vadd.f32 %v2698, %v2729
        %v2732 = vadd.f32 %v2703, %v2729
        %v2733 = vadd.f32 %v2706, %v2729
        %v2734 = vadd.f32 %v2711, %v2729
        %v2735 = vadd.f32 %v2714, %v2729
        %v2736 = vadd.f32 %v2719, %v2729
        %v2737 = vadd.f32 %v2722, %v2729
        %v2738 = vmul.f32 %v2730, %v2730
        %v2739 = vmul.f32 %v2731, %v2731
        %v2740 = vmul.f32 %v2732, %v2732
        %v2741 = vmul.f32 %v2733, %v2733
        %v2742 = vmul.f32 %v2734, %v2734
        %v2743 = vmul.f32 %v2735, %v2735
        %v2744 = vmul.f32 %v2736, %v2736
        %v2745 = vmul.f32 %v2737, %v2737
        %2746 = vadd.xlane.f32.xlu0 %v2738
        %v2747 = vpop.xlane.xlu0 %2746
        %2748 = vadd.xlane.f32.xlu0 %v2739
        %v2749 = vpop.xlane.xlu0 %2748
        %2750 = vadd.xlane.f32.xlu0 %v2740
        %v2751 = vpop.xlane.xlu0 %2750
        %2752 = vadd.xlane.f32.xlu0 %v2741
        %v2753 = vpop.xlane.xlu0 %2752
        %2754 = vadd.xlane.f32.xlu0 %v2742
        %v2755 = vpop.xlane.xlu0 %2754
        %2756 = vadd.xlane.f32.xlu0 %v2743
        %v2757 = vpop.xlane.xlu0 %2756
        %2758 = vadd.xlane.f32.xlu0 %v2744
        %v2759 = vpop.xlane.xlu0 %2758
        %2760 = vadd.xlane.f32.xlu0 %v2745
        %v2761 = vpop.xlane.xlu0 %2760
        %v2762 = vmax.f32 %v2747, 1e-24
        %v2763 = vmax.f32 %v2749, 1e-24
        %v2764 = vmax.f32 %v2751, 1e-24
        %v2765 = vmax.f32 %v2753, 1e-24
        %v2766 = vmax.f32 %v2755, 1e-24
        %v2767 = vmax.f32 %v2757, 1e-24
        %v2768 = vmax.f32 %v2759, 1e-24
        %v2769 = vmax.f32 %v2761, 1e-24
        %v2770 = vrsqrt.pop %v2762
        %v2771 = vrsqrt.pop %v2763
        %v2772 = vrsqrt.pop %v2764
        %v2773 = vrsqrt.pop %v2765
        %v2774 = vrsqrt.pop %v2766
        %v2775 = vrsqrt.pop %v2767
        %v2776 = vrsqrt.pop %v2768
        %v2777 = vrsqrt.pop %v2769
        %v2778 = vmul.f32 %v2730, %v2770
        %v2779 = vmul.f32 %v2731, %v2771
        %v2780 = vmul.f32 %v2732, %v2772
        %v2781 = vmul.f32 %v2733, %v2773
        %v2782 = vmul.f32 %v2734, %v2774
        %v2783 = vmul.f32 %v2735, %v2775
        %v2784 = vmul.f32 %v2736, %v2776
        %v2785 = vmul.f32 %v2737, %v2777
        %v2786 = vmax.f32 %v2778, 0.0
        %v2787 = vmax.f32 %v2779, 0.0
        %v2788 = vmax.f32 %v2780, 0.0
        %v2789 = vmax.f32 %v2781, 0.0
        %v2790 = vmax.f32 %v2782, 0.0
        %v2791 = vmax.f32 %v2783, 0.0
        %v2792 = vmax.f32 %v2784, 0.0
        %v2793 = vmax.f32 %v2785, 0.0
        %v2794 = vld [vmem:[#allocation10 + $0x8] sm:$0x1]
        %v2795 = vlaneseq
        %v2796 = vshrl.u32 %v2795, 7
        %v2797 = vsub.s32 0, %v2796
        %v2798 = vrot.slane %v2794, %v2797
        %v2799 = vmul.f32 %v2786, %v2798
        %v2800 = vmul.f32 %v2787, %v2798
        %v2801 = vmul.f32 %v2788, %v2798
        %v2802 = vmul.f32 %v2789, %v2798
        %v2803 = vmul.f32 %v2790, %v2798
        %v2804 = vmul.f32 %v2791, %v2798
        %v2805 = vmul.f32 %v2792, %v2798
        %v2806 = vmul.f32 %v2793, %v2798
        %v2807 = vld [vmem:[#allocation10 + $0xc] sm:$0x1]
        %v2808 = vlaneseq
        %v2809 = vshrl.u32 %v2808, 7
        %v2810 = vsub.s32 0, %v2809
        %v2811 = vrot.slane %v2807, %v2810
        %v2812 = vadd.f32 %v2799, %v2811
        %v2813 = vadd.f32 %v2800, %v2811
        %v2814 = vadd.f32 %v2801, %v2811
        %v2815 = vadd.f32 %v2802, %v2811
        %v2816 = vadd.f32 %v2803, %v2811
        %v2817 = vadd.f32 %v2804, %v2811
        %v2818 = vadd.f32 %v2805, %v2811
        %v2819 = vadd.f32 %v2806, %v2811
        %v2820 = vadd.f32 %v2812, %v2385
        %v2821 = vadd.f32 %v2813, %v2386
        %v2822 = vadd.f32 %v2814, %v2387
        %v2823 = vadd.f32 %v2815, %v2388
        %v2824 = vadd.f32 %v2816, %v2389
        %v2825 = vadd.f32 %v2817, %v2390
        %v2826 = vadd.f32 %v2818, %v2391
        %v2827 = vadd.f32 %v2819, %v2392
        %v2828 = vadd.f32 %v2820, %v2821
        %v2829 = vadd.f32 %v2828, %v2822
        %v2830 = vadd.f32 %v2829, %v2823
        %v2831 = vadd.f32 %v2830, %v2824
        %v2832 = vadd.f32 %v2831, %v2825
        %v2833 = vadd.f32 %v2832, %v2826
        %v2834 = vadd.f32 %v2833, %v2827
        %v2835 = vrot.slane %v2834, 4
        %v2836 = vadd.f32 %v2834, %v2835
        %v2837 = vrot.slane %v2836, 2
        %v2838 = vadd.f32 %v2836, %v2837
        %v2839 = vrot.slane %v2838, 1
        %v2840 = vadd.f32 %v2838, %v2839
        %v2841 = vrcp.pop 64.0
        %v2842 = vmul.f32 %v2840, %v2841
        %v2843 = vpack.c.bf16 %v2842, %v2842
        %v2844 = vld [vmem:[#allocation13] sm:$0xf]
        %v2845 = vld [vmem:[#allocation13 + $0x4] sm:$0xf]
        %v2846 = vld [vmem:[#allocation13 + $0x8] sm:$0xf]
        %v2847 = vld [vmem:[#allocation13 + $0xc] sm:$0xf]
        %v2848 = vld [vmem:[#allocation13 + $0x10] sm:$0xf]
        %v2849 = vld [vmem:[#allocation13 + $0x14] sm:$0xf]
        %v2850 = vld [vmem:[#allocation13 + $0x18] sm:$0xf]
        %v2851 = vld [vmem:[#allocation13 + $0x1c] sm:$0xf]
        %v2852 = vld [vmem:[#allocation13 + $0x20] sm:$0xf]
        %v2853 = vld [vmem:[#allocation13 + $0x24] sm:$0xf]
        %v2854 = vld [vmem:[#allocation13 + $0x28] sm:$0xf]
        %v2855 = vld [vmem:[#allocation13 + $0x2c] sm:$0xf]
        %v2856 = vld [vmem:[#allocation13 + $0x30] sm:$0xf]
        %v2857 = vld [vmem:[#allocation13 + $0x34] sm:$0xf]
        %v2858 = vld [vmem:[#allocation13 + $0x38] sm:$0xf]
        %v2859 = vld [vmem:[#allocation13 + $0x3c] sm:$0xf]
        %v2860 = vld [vmem:[#allocation10 + $0xe] sm:$0x1]
        %v2877 = vunpack.c.l.b16 %v2844
        %v2878 = vunpack.c.l.b16 %v2845
        %v2879 = vunpack.c.l.b16 %v2846
        %v2880 = vunpack.c.l.b16 %v2847
        %v2881 = vunpack.c.l.b16 %v2848
        %v2882 = vunpack.c.l.b16 %v2849
        %v2883 = vunpack.c.l.b16 %v2850
        %v2884 = vunpack.c.l.b16 %v2851
        %v2885 = vunpack.c.l.b16 %v2852
        %v2886 = vunpack.c.l.b16 %v2853
        %v2887 = vunpack.c.l.b16 %v2854
        %v2888 = vunpack.c.l.b16 %v2855
        %v2889 = vunpack.c.l.b16 %v2856
        %v2890 = vunpack.c.l.b16 %v2857
        %v2891 = vunpack.c.l.b16 %v2858
        %v2892 = vunpack.c.l.b16 %v2859
        %v2893 = vpack.c.b16 %v2878, %v2877
        %v2894 = vpack.c.b16 %v2880, %v2879
        %v2895 = vpack.c.b16 %v2882, %v2881
        %v2896 = vpack.c.b16 %v2884, %v2883
        %v2897 = vpack.c.b16 %v2886, %v2885
        %v2898 = vpack.c.b16 %v2888, %v2887
        %v2899 = vpack.c.b16 %v2890, %v2889
        %v2900 = vpack.c.b16 %v2892, %v2891
        %2909 = vmatprep.subr.bf16.mxu0 0
        %2910 = vmatpush1.bf16.msra.mxu0 %v2893
        %2911 = vmatprep.subr.bf16.mxu0 0
        %2912 = vmatpush1.bf16.msra.mxu0 %v2894
        %2913 = vmatprep.subr.bf16.mxu0 0
        %2914 = vmatpush1.bf16.msra.mxu0 %v2895
        %2915 = vmatprep.subr.bf16.mxu0 0
        %2916 = vmatpush1.bf16.msra.mxu0 %v2896
        %2917 = vmatprep.subr.bf16.mxu0 0
        %2918 = vmatpush1.bf16.msra.mxu0 %v2897
        %2919 = vmatprep.subr.bf16.mxu0 0
        %2920 = vmatpush1.bf16.msra.mxu0 %v2898
        %2921 = vmatprep.subr.bf16.mxu0 0
        %2922 = vmatpush1.bf16.msra.mxu0 %v2899
        %2923 = vmatprep.subr.bf16.mxu0 0
        %2924 = vmatpush1.bf16.msra.mxu0 %v2900
        %2925 = vmatprep.subr.bf16.mxu0 0
        %2926 = vmatpush1.bf16.msra.mxu0 0
        %2927 = vmatprep.subr.bf16.mxu0 0
        %2928 = vmatpush1.bf16.msra.mxu0 0
        %2929 = vmatprep.subr.bf16.mxu0 0
        %2930 = vmatpush1.bf16.msra.mxu0 0
        %2931 = vmatprep.subr.bf16.mxu0 0
        %2932 = vmatpush1.bf16.msra.mxu0 0
        %2933 = vmatprep.subr.bf16.mxu0 0
        %2934 = vmatpush1.bf16.msra.mxu0 0
        %2935 = vmatprep.subr.bf16.mxu0 0
        %2936 = vmatpush1.bf16.msra.mxu0 0
        %2937 = vmatprep.subr.bf16.mxu0 0
        %2938 = vmatpush1.bf16.msra.mxu0 0
        %2939 = vmatprep.subr.bf16.mxu0 0
        %2940 = vmatpush1.bf16.msra.mxu0 0
        %2941 = vmatprep.mubr.bf16.mxu0 0
        %2942 = vmatmul.mubr.bf16.gmra.mrb[0].mxu0 %v2843
        %v2943 = vpop.f32.mrb[0].mxu0
        %v2944 = vadd.f32 %v2860, %v2943
        %v2945 = vpop.f32.mrb[0].mxu0
        %v2946 = vpop.f32.mrb[0].mxu0
        %v2947 = vpop.f32.mrb[0].mxu0
        %2948 = vdwg.mxu0
        %v2949 = vmax.f32 %v2944, 0.0
        %v2950 = vpack.c.bf16 %v2949, %v2949
        %v2951 = vld [vmem:[#allocation14] sm:$0xf]
        %v2952 = vld [vmem:[#allocation14 + $0x4] sm:$0xf]
        %v2953 = vld [vmem:[#allocation14 + $0x8] sm:$0xf]
        %v2954 = vld [vmem:[#allocation14 + $0xc] sm:$0xf]
        %v2955 = vld [vmem:[#allocation14 + $0x10] sm:$0xf]
        %v2956 = vld [vmem:[#allocation14 + $0x14] sm:$0xf]
        %v2957 = vld [vmem:[#allocation14 + $0x18] sm:$0xf]
        %v2958 = vld [vmem:[#allocation14 + $0x1c] sm:$0xf]
        %v2959 = vld [vmem:[#allocation14 + $0x20] sm:$0xf]
        %v2960 = vld [vmem:[#allocation14 + $0x24] sm:$0xf]
        %v2961 = vld [vmem:[#allocation14 + $0x28] sm:$0xf]
        %v2962 = vld [vmem:[#allocation14 + $0x2c] sm:$0xf]
        %v2963 = vld [vmem:[#allocation14 + $0x30] sm:$0xf]
        %v2964 = vld [vmem:[#allocation14 + $0x34] sm:$0xf]
        %v2965 = vld [vmem:[#allocation14 + $0x38] sm:$0xf]
        %v2966 = vld [vmem:[#allocation14 + $0x3c] sm:$0xf]
        %v2967 = vld [vmem:[#allocation10 + $0xf] sm:$0x1]
        %v2984 = vunpack.c.l.b16 %v2951
        %v2985 = vunpack.c.l.b16 %v2952
        %v2986 = vunpack.c.l.b16 %v2953
        %v2987 = vunpack.c.l.b16 %v2954
        %v2988 = vunpack.c.l.b16 %v2955
        %v2989 = vunpack.c.l.b16 %v2956
        %v2990 = vunpack.c.l.b16 %v2957
        %v2991 = vunpack.c.l.b16 %v2958
        %v2992 = vunpack.c.l.b16 %v2959
        %v2993 = vunpack.c.l.b16 %v2960
        %v2994 = vunpack.c.l.b16 %v2961
        %v2995 = vunpack.c.l.b16 %v2962
        %v2996 = vunpack.c.l.b16 %v2963
        %v2997 = vunpack.c.l.b16 %v2964
        %v2998 = vunpack.c.l.b16 %v2965
        %v2999 = vunpack.c.l.b16 %v2966
        %v3000 = vpack.c.b16 %v2985, %v2984
        %v3001 = vpack.c.b16 %v2987, %v2986
        %v3002 = vpack.c.b16 %v2989, %v2988
        %v3003 = vpack.c.b16 %v2991, %v2990
        %v3004 = vpack.c.b16 %v2993, %v2992
        %v3005 = vpack.c.b16 %v2995, %v2994
        %v3006 = vpack.c.b16 %v2997, %v2996
        %v3007 = vpack.c.b16 %v2999, %v2998
        %3016 = vmatprep.subr.bf16.mxu0 0
        %3017 = vmatpush1.bf16.msra.mxu0 %v3000
        %3018 = vmatprep.subr.bf16.mxu0 0
        %3019 = vmatpush1.bf16.msra.mxu0 %v3001
        %3020 = vmatprep.subr.bf16.mxu0 0
        %3021 = vmatpush1.bf16.msra.mxu0 %v3002
        %3022 = vmatprep.subr.bf16.mxu0 0
        %3023 = vmatpush1.bf16.msra.mxu0 %v3003
        %3024 = vmatprep.subr.bf16.mxu0 0
        %3025 = vmatpush1.bf16.msra.mxu0 %v3004
        %3026 = vmatprep.subr.bf16.mxu0 0
        %3027 = vmatpush1.bf16.msra.mxu0 %v3005
        %3028 = vmatprep.subr.bf16.mxu0 0
        %3029 = vmatpush1.bf16.msra.mxu0 %v3006
        %3030 = vmatprep.subr.bf16.mxu0 0
        %3031 = vmatpush1.bf16.msra.mxu0 %v3007
        %3032 = vmatprep.subr.bf16.mxu0 0
        %3033 = vmatpush1.bf16.msra.mxu0 0
        %3034 = vmatprep.subr.bf16.mxu0 0
        %3035 = vmatpush1.bf16.msra.mxu0 0
        %3036 = vmatprep.subr.bf16.mxu0 0
        %3037 = vmatpush1.bf16.msra.mxu0 0
        %3038 = vmatprep.subr.bf16.mxu0 0
        %3039 = vmatpush1.bf16.msra.mxu0 0
        %3040 = vmatprep.subr.bf16.mxu0 0
        %3041 = vmatpush1.bf16.msra.mxu0 0
        %3042 = vmatprep.subr.bf16.mxu0 0
        %3043 = vmatpush1.bf16.msra.mxu0 0
        %3044 = vmatprep.subr.bf16.mxu0 0
        %3045 = vmatpush1.bf16.msra.mxu0 0
        %3046 = vmatprep.subr.bf16.mxu0 0
        %3047 = vmatpush1.bf16.msra.mxu0 0
        %3048 = vmatprep.mubr.bf16.mxu0 0
        %3049 = vmatmul.mubr.bf16.gmra.mrb[0].mxu0 %v2950
        %v3050 = vpop.f32.mrb[0].mxu0
        %v3051 = vadd.f32 %v2967, %v3050
        %v3052 = vpop.f32.mrb[0].mxu0
        %v3053 = vpop.f32.mrb[0].mxu0
        %v3054 = vpop.f32.mrb[0].mxu0
        %3055 = vdwg.mxu0
        %v3056 = vmax.f32 %v3051, 0.0
        %v3057 = vpack.c.bf16 %v3056, %v3056
        %v3058 = vld [vmem:[#allocation16] sm:$0xf]
        %v3059 = vld [vmem:[#allocation16 + $0x4] sm:$0xf]
        %v3060 = vld [vmem:[#allocation16 + $0x8] sm:$0xf]
        %v3061 = vld [vmem:[#allocation16 + $0xc] sm:$0xf]
        %v3062 = vld [vmem:[#allocation16 + $0x10] sm:$0xf]
        %v3063 = vld [vmem:[#allocation16 + $0x14] sm:$0xf]
        %v3064 = vld [vmem:[#allocation16 + $0x18] sm:$0xf]
        %v3065 = vld [vmem:[#allocation16 + $0x1c] sm:$0xf]
        %v3066 = vld [vmem:[#allocation16 + $0x20] sm:$0xf]
        %v3067 = vld [vmem:[#allocation16 + $0x24] sm:$0xf]
        %v3068 = vld [vmem:[#allocation16 + $0x28] sm:$0xf]
        %v3069 = vld [vmem:[#allocation16 + $0x2c] sm:$0xf]
        %v3070 = vld [vmem:[#allocation16 + $0x30] sm:$0xf]
        %v3071 = vld [vmem:[#allocation16 + $0x34] sm:$0xf]
        %v3072 = vld [vmem:[#allocation16 + $0x38] sm:$0xf]
        %v3073 = vld [vmem:[#allocation16 + $0x3c] sm:$0xf]
        %v3074 = vld [vmem:[#allocation10 + $0x10] sm:$0x1]
        %v3091 = vunpack.c.l.b16 %v3058
        %v3092 = vunpack.c.l.b16 %v3059
        %v3093 = vunpack.c.l.b16 %v3060
        %v3094 = vunpack.c.l.b16 %v3061
        %v3095 = vunpack.c.l.b16 %v3062
        %v3096 = vunpack.c.l.b16 %v3063
        %v3097 = vunpack.c.l.b16 %v3064
        %v3098 = vunpack.c.l.b16 %v3065
        %v3099 = vunpack.c.l.b16 %v3066
        %v3100 = vunpack.c.l.b16 %v3067
        %v3101 = vunpack.c.l.b16 %v3068
        %v3102 = vunpack.c.l.b16 %v3069
        %v3103 = vunpack.c.l.b16 %v3070
        %v3104 = vunpack.c.l.b16 %v3071
        %v3105 = vunpack.c.l.b16 %v3072
        %v3106 = vunpack.c.l.b16 %v3073
        %v3107 = vpack.c.b16 %v3092, %v3091
        %v3108 = vpack.c.b16 %v3094, %v3093
        %v3109 = vpack.c.b16 %v3096, %v3095
        %v3110 = vpack.c.b16 %v3098, %v3097
        %v3111 = vpack.c.b16 %v3100, %v3099
        %v3112 = vpack.c.b16 %v3102, %v3101
        %v3113 = vpack.c.b16 %v3104, %v3103
        %v3114 = vpack.c.b16 %v3106, %v3105
        %3123 = vmatprep.subr.bf16.mxu0 0
        %3124 = vmatpush1.bf16.msra.mxu0 %v3107
        %3125 = vmatprep.subr.bf16.mxu0 0
        %3126 = vmatpush1.bf16.msra.mxu0 %v3108
        %3127 = vmatprep.subr.bf16.mxu0 0
        %3128 = vmatpush1.bf16.msra.mxu0 %v3109
        %3129 = vmatprep.subr.bf16.mxu0 0
        %3130 = vmatpush1.bf16.msra.mxu0 %v3110
        %3131 = vmatprep.subr.bf16.mxu0 0
        %3132 = vmatpush1.bf16.msra.mxu0 %v3111
        %3133 = vmatprep.subr.bf16.mxu0 0
        %3134 = vmatpush1.bf16.msra.mxu0 %v3112
        %3135 = vmatprep.subr.bf16.mxu0 0
        %3136 = vmatpush1.bf16.msra.mxu0 %v3113
        %3137 = vmatprep.subr.bf16.mxu0 0
        %3138 = vmatpush1.bf16.msra.mxu0 %v3114
        %3139 = vmatprep.subr.bf16.mxu0 0
        %3140 = vmatpush1.bf16.msra.mxu0 0
        %3141 = vmatprep.subr.bf16.mxu0 0
        %3142 = vmatpush1.bf16.msra.mxu0 0
        %3143 = vmatprep.subr.bf16.mxu0 0
        %3144 = vmatpush1.bf16.msra.mxu0 0
        %3145 = vmatprep.subr.bf16.mxu0 0
        %3146 = vmatpush1.bf16.msra.mxu0 0
        %3147 = vmatprep.subr.bf16.mxu0 0
        %3148 = vmatpush1.bf16.msra.mxu0 0
        %3149 = vmatprep.subr.bf16.mxu0 0
        %3150 = vmatpush1.bf16.msra.mxu0 0
        %3151 = vmatprep.subr.bf16.mxu0 0
        %3152 = vmatpush1.bf16.msra.mxu0 0
        %3153 = vmatprep.subr.bf16.mxu0 0
        %3154 = vmatpush1.bf16.msra.mxu0 0
        %3155 = vmatprep.mubr.bf16.mxu0 0
        %3156 = vmatmul.mubr.bf16.gmra.mrb[0].mxu0 %v3057
        %v3157 = vpop.f32.mrb[0].mxu0
        %v3158 = vadd.f32 %v3074, %v3157
        %v3159 = vpop.f32.mrb[0].mxu0
        %v3160 = vpop.f32.mrb[0].mxu0
        %v3161 = vpop.f32.mrb[0].mxu0
        %3162 = vdwg.mxu0
        %v3163 = vlaneseq
        %v3164 = vshrl.u32 %v3163, 7
        %v3165 = vsub.s32 0, %v3164
        %v3166 = vrot.slane %v3158, %v3165
        %3167 = vst [vmem:[%s522] sm:$0xff] %v3166
        %s3168 = sand.u32 %s244, 1
        %s3169 = scalar_lea.sflag [#allocation4], %s3168
        %s3170 = sand.u32 %s244, 1
        %s3171 = smul.addr %s3170, 8
        %s3172 = scalar_lea.vmem [#allocation17], %s3171
        %s3173 = sand.u32 %s270, 1
        %s3174 = scalar_lea.sflag [#allocation19], %s3173
        %s3175 = sand.u32 %s270, 1
        %s3176 = smul.addr %s3175, 64
        %s3177 = scalar_lea.vmem [#allocation18], %s3176
        // Predicated region
        $region93: #{tpu_custom_call.1} parent=55 // pred_check
          %p3178 = pneg %p254
        $region94: #{tpu_custom_call.1} parent=55 // pred_check_branch
          %3180 = sbr.rel (%p3178) target = $region96
        $region95: #{tpu_custom_call.1} parent=55 // pred_region
          %s3182 = ssub.s32 128, 128
          %3183 = vsyncadd %s3169, %s3182
          %s3184 = smul.addr %s37, 128
          %s3185 = scalar_lea.hbm %s9, %s3184
          %s3187 = sshll.u32 %s3172, 4
          %s3188 = int_to_ptr.vmem [resolvable:$true] %s3187
          %3190 = dma.vmem_to_hbm [thread:$0]  %s3188, 128, %s3185, %s3169
        $region96: #{tpu_custom_call.1} parent=55 // pred_fallthru
          _
        // Predicated region
        $region97: #{tpu_custom_call.1} parent=55 // pred_check
          %p3191 = pneg %p280
        $region98: #{tpu_custom_call.1} parent=55 // pred_check_branch
          %3193 = sbr.rel (%p3191) target = $region100
        $region99: #{tpu_custom_call.1} parent=55 // pred_region
          %s3195 = ssub.s32 1024, 1024
          %3196 = vsyncadd %s3174, %s3195
          %s3197 = smul.addr %s37, 8
          %s3198 = smul.addr %s3197, 128
          %s3199 = scalar_lea.hbm %s10, %s3198
          %s3200 = sshll.u32 %s3177, 4
          %s3201 = int_to_ptr.vmem [resolvable:$true] %s3200
          %3206 = dma.vmem_to_hbm [thread:$0]  %s3201, 1024, %s3199, %s3174, 128, 128, 8
        $region100: #{tpu_custom_call.1} parent=55 // pred_fallthru
          _
      $region56: #{tpu_custom_call.1} parent=5 // pred_fallthru
        _
      %p3207 = scmp.le.s32.totalorder 2, %s32
      // Predicated region
      $region101: #{tpu_custom_call.1} parent=5 // pred_check
        %p3208 = pneg %p3207
      $region102: #{tpu_custom_call.1} parent=5 // pred_check_branch
        %3210 = sbr.rel (%p3208) target = $region104
      $region103: #{tpu_custom_call.1} parent=5 // pred_region
        %s3211 = ssub.s32 %s32, 2
        // Predicated region
        $region105: #{tpu_custom_call.1} parent=103 // pred_check
          %p3212 = pneg %p260
        $region106: #{tpu_custom_call.1} parent=103 // pred_check_branch
          %3214 = sbr.rel (%p3212) target = $region108
        $region107: #{tpu_custom_call.1} parent=103 // pred_region
          %s3215 = sand.u32 %s245, 1
          %s3216 = scalar_lea.sflag [#allocation4], %s3215
          %s3217 = sand.u32 %s245, 1
          %s3218 = smul.addr %s3217, 8
          %s3219 = scalar_lea.vmem [#allocation17], %s3218
          %3220 = dma.done %s3216, 128
        $region108: #{tpu_custom_call.1} parent=103 // pred_fallthru
          _
        // Predicated region
        $region109: #{tpu_custom_call.1} parent=103 // pred_check
          %p3221 = pneg %p286
        $region110: #{tpu_custom_call.1} parent=103 // pred_check_branch
          %3223 = sbr.rel (%p3221) target = $region112
        $region111: #{tpu_custom_call.1} parent=103 // pred_region
          %s3224 = sand.u32 %s271, 1
          %s3225 = scalar_lea.sflag [#allocation19], %s3224
          %s3226 = sand.u32 %s271, 1
          %s3227 = smul.addr %s3226, 64
          %s3228 = scalar_lea.vmem [#allocation18], %s3227
          %3229 = dma.done %s3225, 1024
        $region112: #{tpu_custom_call.1} parent=103 // pred_fallthru
          _
      $region104: #{tpu_custom_call.1} parent=5 // pred_fallthru
        _
    $region6: #{tpu_custom_call.1} parent=1 // loop_footer
      %s36 = sadd.s32 1, %s32
    $region7: #{tpu_custom_call.1} parent=1 // loop_footer_branch
      %31 = sbr.rel target = $region3
    $region8: #{tpu_custom_call.1} parent=1 // loop_exit
      _
    %3230 = vsyncpa [#allocation3], 1
    %s3231 = scalar_lea.sflag [#allocation3], 1
    %3232 = vsyncpa %s3231, 1
    %3233 = vsyncpa [#allocation6], 1
    %s3234 = scalar_lea.sflag [#allocation6], 1
    %3235 = vsyncpa %s3234, 1
    %3236 = vsyncpa [#allocation9], 1
    %3237 = vsyncpa [#allocation12], 1
    %3238 = vsyncpa [#allocation15], 1
    %3239 = vsyncpa [#allocation4], 1
    %s3240 = scalar_lea.sflag [#allocation4], 1
    %3241 = vsyncpa %s3240, 1
    %3242 = vsyncpa [#allocation19], 1
    %s3243 = scalar_lea.sflag [#allocation19], 1
    %3244 = vsyncpa %s3243, 1

</llo_original>
